<compile_context>
chip_gen: v7x
topology: tpu7x:2x2x1
jax: 0.10.0
libtpu: 0.0.40
codegen_flags: <defaults>
</compile_context>

<pallas_src>
import jax
import jax.numpy as jnp
from jax.experimental import pallas as pl
from jax.experimental.pallas import tpu as pltpu


_LANES = 128   # conv1 output packs (4 pool positions x 32 channels) on the lane dim
_KPAD = 40     # conv1 im2col K (36 = 4 pos x 9 taps) zero-padded to a multiple of 8
_NCLS = 3      # real classes; kernel emits a lane-dense 128-wide softmax row


# ----------------------------------------------------------------------------
# Fused Pallas kernel: one batch tile per grid step, everything stays in VMEM.
# ----------------------------------------------------------------------------
def _netqc_kernel(p1_ref, w1_ref, b1_ref, w2_ref, b2_ref,
                  fc1w_ref, fc1b_ref, fc2w_ref, fc2b_ref, o_ref):
    f32 = jnp.float32
    rows = p1_ref.shape[0]           # TB * 36
    tb = rows // 36

    # ---- conv1 ("Quanv" substitute, 1->32, 3x3): ONE MXU matmul --------------
    # p1 rows = (batch, pool window w = p*6+q); K = (pool position, tap) padded.
    # w1 is block-diagonal so the output lane dim is pos*32 + cout -> every vreg
    # is 128-lane dense.
    y1 = jnp.dot(p1_ref[...], w1_ref[...], preferred_element_type=f32)
    y1 = jnp.maximum(y1 + b1_ref[...], 0.0)             # (TB*36, 128)

    # ---- 2x2 max-pool #1 on the XLU: two lane rolls + max --------------------
    m = jnp.maximum(y1, pltpu.roll(y1, shift=64, axis=1))
    m = jnp.maximum(m, pltpu.roll(m, shift=32, axis=1))  # lanes 0..31 = pooled max
    pooled = m.reshape(tb, 6, 6, _LANES)                 # (b, p, q, lane)

    # ---- conv2 (32->64, 3x3): 9 accumulated MXU dots (no lane concat) --------
    # w2 rows 32..127 are zero, so the extra lanes of `pooled` are ignored.
    acc2 = jnp.zeros((tb * 16, 64), f32)
    for kh in range(3):
        for kw in range(3):
            win = pooled[:, kh:kh + 4, kw:kw + 4, :].reshape(tb * 16, _LANES)
            acc2 = acc2 + jnp.dot(win, w2_ref[kh * 3 + kw],
                                  preferred_element_type=f32)
    c2 = jnp.maximum(acc2 + b2_ref[...], 0.0).reshape(tb, 4, 4, 64)

    # Dropout2d: identity at inference time.

    # ---- 2x2 max-pool #2 fused with fc1 (NCHW flatten folded into fc1w) ------
    h1 = jnp.zeros((tb, 64), f32)
    for hh in range(2):
        for ww in range(2):
            p00 = c2[:, 2 * hh, 2 * ww, :]
            p01 = c2[:, 2 * hh, 2 * ww + 1, :]
            p10 = c2[:, 2 * hh + 1, 2 * ww, :]
            p11 = c2[:, 2 * hh + 1, 2 * ww + 1, :]
            pooled2 = jnp.maximum(jnp.maximum(p00, p01), jnp.maximum(p10, p11))
            h1 = h1 + jnp.dot(pooled2, fc1w_ref[2 * hh + ww],
                              preferred_element_type=f32)
    h1 = jnp.maximum(h1 + fc1b_ref[...], 0.0)            # (TB, 64)

    # ---- fc2 + softmax (dim=1), lane-dense 128-wide output -------------------
    # Padded class lanes carry a -1e30 bias -> their exp underflows to 0.
    z3 = jnp.dot(h1, fc2w_ref[...], preferred_element_type=f32) + fc2b_ref[...]
    z3 = z3 - jnp.max(z3, axis=-1, keepdims=True)
    e = jnp.exp(z3)
    o_ref[...] = e / jnp.sum(e, axis=-1, keepdims=True)


# ----------------------------------------------------------------------------
# Wrapper: lane-dense conv1 patches + a single pallas_call over batch tiles.
# ----------------------------------------------------------------------------
def _conv1_patches(x):
    """x: (N,1,14,14) f32 -> (N*36, 40).

    Row = (batch, 2x2-pool window w = p*6+q).  Column = pos*9 + tap with
    pos = di*2+dj (position inside the pool window) and tap = kh*3+kw; padded
    from 36 to 40 columns.  Full rows => contiguous HBM->VMEM DMA per tile.
    """
    N = x.shape[0]
    xs = x[:, 0]                                        # (N, 14, 14)
    cols = []
    for di in range(2):
        for dj in range(2):
            for kh in range(3):
                for kw in range(3):
                    r0, c0 = di + kh, dj + kw
                    cols.append(xs[:, r0:r0 + 11:2, c0:c0 + 11:2])   # (N, 6, 6)
    t = jnp.stack(cols, axis=-1)                        # (N, 6, 6, 36)
    t = jnp.pad(t, ((0, 0), (0, 0), (0, 0), (0, _KPAD - 36)))
    return t.reshape(N * 36, _KPAD)


def _round_up(n, m):
    return ((n + m - 1) // m) * m


def netqc_forward(x, wp, *, batch_tile=64):
    """x: (N, 1, 14, 14) float32 -> (N, 3) softmax probabilities."""
    N = x.shape[0]
    assert batch_tile % 8 == 0, "batch_tile must be a multiple of 8"
    tb = batch_tile
    if N < 2 * tb:
        # Shrink the tile for small batches; when there is enough work keep
        # G >= 2 so both v7x TensorCores get a share of the batch.
        tb = _round_up(pl.cdiv(N, 2), 8) if N > 8 else _round_up(max(N, 1), 8)
    G = pl.cdiv(N, tb)
    Npad = G * tb

    p1 = _conv1_patches(x.astype(jnp.float32))
    if Npad != N:
        p1 = jnp.pad(p1, ((0, (Npad - N) * 36), (0, 0)))

    out = pl.pallas_call(
        _netqc_kernel,
        out_shape=jax.ShapeDtypeStruct((Npad, _LANES), jnp.float32),
        grid=(G,),
        in_specs=[
            pl.BlockSpec((tb * 36, _KPAD), lambda i: (i, 0)),    # conv1 patches
            pl.BlockSpec((_KPAD, _LANES), lambda i: (0, 0)),     # w1 block-diag
            pl.BlockSpec((1, _LANES), lambda i: (0, 0)),         # b1 tiled x4
            pl.BlockSpec((9, _LANES, 64), lambda i: (0, 0, 0)),  # w2 per tap
            pl.BlockSpec((1, 64), lambda i: (0, 0)),             # b2
            pl.BlockSpec((4, 64, 64), lambda i: (0, 0, 0)),      # fc1 per pos
            pl.BlockSpec((1, 64), lambda i: (0, 0)),             # fc1 bias
            pl.BlockSpec((64, _LANES), lambda i: (0, 0)),        # fc2 (padded)
            pl.BlockSpec((1, _LANES), lambda i: (0, 0)),         # fc2 bias (padded)
        ],
        out_specs=pl.BlockSpec((tb, _LANES), lambda i: (i, 0)),
        compiler_params=pltpu.CompilerParams(
            dimension_semantics=("parallel",),           # split batch over TCs
            vmem_limit_bytes=64 * 1024 * 1024),          # fits v7x's 64 MiB VMEM
    )(p1, wp["w1"], wp["b1"], wp["w2"], wp["b2"],
      wp["fc1w"], wp["fc1b"], wp["fc2w"], wp["fc2b"])
    return out[:N, :_NCLS]


def prepare_params(p):
    """One-time weight re-layout into the kernel's matmul-friendly form."""
    f32 = jnp.float32
    # conv1 ("Quanv" substitute): (32,1,3,3) -> (9,32), row = tap = kh*3+kw.
    w1 = p["quanv_w"].reshape(32, 9).T.astype(f32)
    # Block-diagonal (40,128): row = pos*9+tap (rows 36..39 zero), lane = pos*32+c.
    w1_big = jnp.zeros((_KPAD, _LANES), f32)
    for pos in range(4):
        w1_big = w1_big.at[pos * 9:(pos + 1) * 9, pos * 32:(pos + 1) * 32].set(w1)
    b1_big = jnp.tile(p["quanv_b"].reshape(1, 32).astype(f32), (1, 4))
    # conv2: (64,32,3,3) -> (9,128,64): per-tap (cin,cout) blocks, rows 32..127 zero.
    w2 = jnp.transpose(p["conv_w"], (2, 3, 1, 0)).reshape(9, 32, 64).astype(f32)
    w2_big = jnp.zeros((9, _LANES, 64), f32).at[:, :32, :].set(w2)
    # fc1: (64,256) NCHW flatten -> 4 per-spatial-position (64cin, 64out) blocks.
    fc1w = jnp.transpose(p["fc1_w"].reshape(64, 64, 2, 2),
                         (2, 3, 1, 0)).reshape(4, 64, 64).astype(f32)
    # fc2 padded to a lane-dense 128-wide output; padded lanes get -1e30 bias so
    # they vanish in the fused softmax.
    fc2w = jnp.zeros((64, _LANES), f32).at[:, :_NCLS].set(p["fc2_w"].T.astype(f32))
    fc2b = jnp.full((1, _LANES), -1e30, f32).at[0, :_NCLS].set(p["fc2_b"].astype(f32))
    return {
        "w1": w1_big, "b1": b1_big,
        "w2": w2_big, "b2": p["conv_b"].reshape(1, 64).astype(f32),
        "fc1w": fc1w, "fc1b": p["fc1_b"].reshape(1, 64).astype(f32),
        "fc2w": fc2w, "fc2b": fc2b,
    }


def init_params(key):
    """Deterministic synthetic parameters matching the PyTorch module shapes."""
    ks = jax.random.split(key, 8)
    s = 0.1
    return {
        "quanv_w": s * jax.random.normal(ks[0], (32, 1, 3, 3), jnp.float32),
        "quanv_b": s * jax.random.normal(ks[1], (32,), jnp.float32),
        "conv_w": s * jax.random.normal(ks[2], (64, 32, 3, 3), jnp.float32),
        "conv_b": s * jax.random.normal(ks[3], (64,), jnp.float32),
        "fc1_w": s * jax.random.normal(ks[4], (64, 256), jnp.float32),
        "fc1_b": s * jax.random.normal(ks[5], (64,), jnp.float32),
        "fc2_w": s * jax.random.normal(ks[6], (3, 64), jnp.float32),
        "fc2_b": s * jax.random.normal(ks[7], (3,), jnp.float32),
    }


# ----------------------------------------------------------------------------
# Independent pure-JAX reference (XLA convs, NCHW) for a correctness check.
# ----------------------------------------------------------------------------
def netqc_reference(x, params):
    dn = ("NCHW", "OIHW", "NCHW")
    prec = jax.lax.Precision.HIGHEST
    y = jax.lax.conv_general_dilated(x, params["quanv_w"], (1, 1), "VALID",
                                     dimension_numbers=dn, precision=prec)
    y = jnp.maximum(y + params["quanv_b"][None, :, None, None], 0.0)   # (N,32,12,12)
    y = y.reshape(y.shape[0], 32, 6, 2, 6, 2).max(axis=(3, 5))         # (N,32,6,6)
    y = jax.lax.conv_general_dilated(y, params["conv_w"], (1, 1), "VALID",
                                     dimension_numbers=dn, precision=prec)
    y = jnp.maximum(y + params["conv_b"][None, :, None, None], 0.0)    # (N,64,4,4)
    y = y.reshape(y.shape[0], 64, 2, 2, 2, 2).max(axis=(3, 5))         # (N,64,2,2)
    feat = y.reshape(y.shape[0], 256)                                  # NCHW flatten
    h = jnp.maximum(jnp.dot(feat, params["fc1_w"].T, precision=prec)
                    + params["fc1_b"], 0.0)
    z = jnp.dot(h, params["fc2_w"].T, precision=prec) + params["fc2_b"]
    return jax.nn.softmax(z, axis=1)


if __name__ == "__main__":
    key = jax.random.PRNGKey(0)
    k_param, k_x = jax.random.split(key)
    params = init_params(k_param)
    wp = prepare_params(params)          # one-time weight re-layout

    fwd = jax.jit(netqc_forward)

    # Input spatial 14x14 so the flattened feature size is 64*2*2 = 256 (fc1).
    x = jax.random.normal(k_x, (2, 1, 14, 14), jnp.float32)
    out = jax.block_until_ready(fwd(x, wp))
    assert out.shape == (2, 3)
    ref = jax.block_until_ready(netqc_reference(x, params))
    assert bool(jnp.all(jnp.abs(out - ref) < 1e-2))
    assert bool(jnp.all(jnp.abs(jnp.sum(out, axis=1) - 1.0) < 1e-2))

    # Second case exercises batch padding and a multi-step (G=2) grid.
    x2 = jax.random.normal(jax.random.PRNGKey(1), (24, 1, 14, 14), jnp.float32)
    out2 = jax.block_until_ready(fwd(x2, wp))
    assert out2.shape == (24, 3)
    ref2 = jax.block_until_ready(netqc_reference(x2, params))
    assert bool(jnp.all(jnp.abs(out2 - ref2) < 1e-2))
    assert bool(jnp.all(jnp.abs(jnp.sum(out2, axis=1) - 1.0) < 1e-2))

    print("KERNEL_OK")
</pallas_src>

<mosaic_0001>
module attributes {stable_mosaic.version = 11 : i64} {
  func.func @_netqc_kernel(%arg0: i32, %arg1: memref<288x40xf32, #tpu.memory_space<vmem>>, %arg2: memref<40x128xf32, #tpu.memory_space<vmem>>, %arg3: memref<1x128xf32, #tpu.memory_space<vmem>>, %arg4: memref<9x128x64xf32, #tpu.memory_space<vmem>>, %arg5: memref<1x64xf32, #tpu.memory_space<vmem>>, %arg6: memref<4x64x64xf32, #tpu.memory_space<vmem>>, %arg7: memref<1x64xf32, #tpu.memory_space<vmem>>, %arg8: memref<64x128xf32, #tpu.memory_space<vmem>>, %arg9: memref<1x128xf32, #tpu.memory_space<vmem>>, %arg10: memref<8x128xf32, #tpu.memory_space<vmem>>) attributes {dimension_semantics = [#tpu.dimension_semantics<parallel>], iteration_bounds = array<i64: 1>, scalar_prefetch = 0 : i64, scratch_operands = 0 : i64, tpu.core_type = #tpu.core_type<tc>, window_params = [{transform_indices = @transform_0, window_bounds = array<i64: 288, 40>}, {pipeline_mode = #tpu.pipeline_mode<synchronous>, transform_indices = @transform_1, window_bounds = array<i64: 40, 128>}, {pipeline_mode = #tpu.pipeline_mode<synchronous>, transform_indices = @transform_2, window_bounds = array<i64: 1, 128>}, {pipeline_mode = #tpu.pipeline_mode<synchronous>, transform_indices = @transform_3, window_bounds = array<i64: 9, 128, 64>}, {pipeline_mode = #tpu.pipeline_mode<synchronous>, transform_indices = @transform_4, window_bounds = array<i64: 1, 64>}, {pipeline_mode = #tpu.pipeline_mode<synchronous>, transform_indices = @transform_5, window_bounds = array<i64: 4, 64, 64>}, {pipeline_mode = #tpu.pipeline_mode<synchronous>, transform_indices = @transform_6, window_bounds = array<i64: 1, 64>}, {pipeline_mode = #tpu.pipeline_mode<synchronous>, transform_indices = @transform_7, window_bounds = array<i64: 64, 128>}, {pipeline_mode = #tpu.pipeline_mode<synchronous>, transform_indices = @transform_8, window_bounds = array<i64: 1, 128>}, {transform_indices = @transform_9, window_bounds = array<i64: 8, 128>}]} {
    %c0 = arith.constant 0 : index
    %c0_0 = arith.constant 0 : index
    %0 = vector.load %arg1[%c0, %c0_0] : memref<288x40xf32, #tpu.memory_space<vmem>>, vector<288x40xf32>
    %c0_1 = arith.constant 0 : index
    %c0_2 = arith.constant 0 : index
    %1 = vector.load %arg2[%c0_1, %c0_2] : memref<40x128xf32, #tpu.memory_space<vmem>>, vector<40x128xf32>
    %cst = arith.constant dense<0.000000e+00> : vector<288x128xf32>
    %2 = tpu.matmul %0, %1, %cst {dimension_numbers = #tpu.dot_dimension_numbers<[1], [0], [0], [1], [0, 0, 1, 1], [], []>} : vector<288x40xf32>, vector<40x128xf32>, vector<288x128xf32> -> vector<288x128xf32>
    %c0_3 = arith.constant 0 : index
    %c0_4 = arith.constant 0 : index
    %3 = vector.load %arg3[%c0_3, %c0_4] : memref<1x128xf32, #tpu.memory_space<vmem>>, vector<1x128xf32>
    %4 = vector.broadcast %3 : vector<1x128xf32> to vector<288x128xf32>
    %5 = arith.addf %2, %4 : vector<288x128xf32>
    %cst_5 = arith.constant 0.000000e+00 : f32
    %6 = vector.broadcast %cst_5 : f32 to vector<288x128xf32>
    %7 = arith.maximumf %5, %6 : vector<288x128xf32>
    %c64_i32 = arith.constant 64 : i32
    %8 = tpu.dynamic_rotate %7 by %c64_i32 dim 1 : vector<288x128xf32>, i32 -> vector<288x128xf32>
    %9 = arith.maximumf %7, %8 : vector<288x128xf32>
    %c32_i32 = arith.constant 32 : i32
    %10 = tpu.dynamic_rotate %9 by %c32_i32 dim 1 : vector<288x128xf32>, i32 -> vector<288x128xf32>
    %11 = arith.maximumf %9, %10 : vector<288x128xf32>
    %12 = vector.shape_cast %11 : vector<288x128xf32> to vector<8x6x6x128xf32>
    %cst_6 = arith.constant 0.000000e+00 : f32
    %13 = vector.broadcast %cst_6 : f32 to vector<128x64xf32>
    %14 = vector.extract_strided_slice %12 {offsets = [0, 0, 0, 0], sizes = [8, 4, 4, 128], strides = [1, 1, 1, 1]} : vector<8x6x6x128xf32> to vector<8x4x4x128xf32>
    %15 = vector.shape_cast %14 : vector<8x4x4x128xf32> to vector<128x128xf32>
    %c0_7 = arith.constant 0 : index
    %c0_8 = arith.constant 0 : index
    %c0_9 = arith.constant 0 : index
    %16 = vector.load %arg4[%c0_7, %c0_8, %c0_9] : memref<9x128x64xf32, #tpu.memory_space<vmem>>, vector<1x128x64xf32>
    %17 = vector.shape_cast %16 : vector<1x128x64xf32> to vector<128x64xf32>
    %cst_10 = arith.constant dense<0.000000e+00> : vector<128x64xf32>
    %18 = tpu.matmul %15, %17, %cst_10 {dimension_numbers = #tpu.dot_dimension_numbers<[1], [0], [0], [1], [0, 0, 1, 1], [], []>} : vector<128x128xf32>, vector<128x64xf32>, vector<128x64xf32> -> vector<128x64xf32>
    %19 = arith.addf %13, %18 : vector<128x64xf32>
    %20 = vector.extract_strided_slice %12 {offsets = [0, 0, 1, 0], sizes = [8, 4, 4, 128], strides = [1, 1, 1, 1]} : vector<8x6x6x128xf32> to vector<8x4x4x128xf32>
    %21 = vector.shape_cast %20 : vector<8x4x4x128xf32> to vector<128x128xf32>
    %c1 = arith.constant 1 : index
    %c0_11 = arith.constant 0 : index
    %c0_12 = arith.constant 0 : index
    %22 = vector.load %arg4[%c1, %c0_11, %c0_12] : memref<9x128x64xf32, #tpu.memory_space<vmem>>, vector<1x128x64xf32>
    %23 = vector.shape_cast %22 : vector<1x128x64xf32> to vector<128x64xf32>
    %cst_13 = arith.constant dense<0.000000e+00> : vector<128x64xf32>
    %24 = tpu.matmul %21, %23, %cst_13 {dimension_numbers = #tpu.dot_dimension_numbers<[1], [0], [0], [1], [0, 0, 1, 1], [], []>} : vector<128x128xf32>, vector<128x64xf32>, vector<128x64xf32> -> vector<128x64xf32>
    %25 = arith.addf %19, %24 : vector<128x64xf32>
    %26 = vector.extract_strided_slice %12 {offsets = [0, 0, 2, 0], sizes = [8, 4, 4, 128], strides = [1, 1, 1, 1]} : vector<8x6x6x128xf32> to vector<8x4x4x128xf32>
    %27 = vector.shape_cast %26 : vector<8x4x4x128xf32> to vector<128x128xf32>
    %c2 = arith.constant 2 : index
    %c0_14 = arith.constant 0 : index
    %c0_15 = arith.constant 0 : index
    %28 = vector.load %arg4[%c2, %c0_14, %c0_15] : memref<9x128x64xf32, #tpu.memory_space<vmem>>, vector<1x128x64xf32>
    %29 = vector.shape_cast %28 : vector<1x128x64xf32> to vector<128x64xf32>
    %cst_16 = arith.constant dense<0.000000e+00> : vector<128x64xf32>
    %30 = tpu.matmul %27, %29, %cst_16 {dimension_numbers = #tpu.dot_dimension_numbers<[1], [0], [0], [1], [0, 0, 1, 1], [], []>} : vector<128x128xf32>, vector<128x64xf32>, vector<128x64xf32> -> vector<128x64xf32>
    %31 = arith.addf %25, %30 : vector<128x64xf32>
    %32 = vector.extract_strided_slice %12 {offsets = [0, 1, 0, 0], sizes = [8, 4, 4, 128], strides = [1, 1, 1, 1]} : vector<8x6x6x128xf32> to vector<8x4x4x128xf32>
    %33 = vector.shape_cast %32 : vector<8x4x4x128xf32> to vector<128x128xf32>
    %c3 = arith.constant 3 : index
    %c0_17 = arith.constant 0 : index
    %c0_18 = arith.constant 0 : index
    %34 = vector.load %arg4[%c3, %c0_17, %c0_18] : memref<9x128x64xf32, #tpu.memory_space<vmem>>, vector<1x128x64xf32>
    %35 = vector.shape_cast %34 : vector<1x128x64xf32> to vector<128x64xf32>
    %cst_19 = arith.constant dense<0.000000e+00> : vector<128x64xf32>
    %36 = tpu.matmul %33, %35, %cst_19 {dimension_numbers = #tpu.dot_dimension_numbers<[1], [0], [0], [1], [0, 0, 1, 1], [], []>} : vector<128x128xf32>, vector<128x64xf32>, vector<128x64xf32> -> vector<128x64xf32>
    %37 = arith.addf %31, %36 : vector<128x64xf32>
    %38 = vector.extract_strided_slice %12 {offsets = [0, 1, 1, 0], sizes = [8, 4, 4, 128], strides = [1, 1, 1, 1]} : vector<8x6x6x128xf32> to vector<8x4x4x128xf32>
    %39 = vector.shape_cast %38 : vector<8x4x4x128xf32> to vector<128x128xf32>
    %c4 = arith.constant 4 : index
    %c0_20 = arith.constant 0 : index
    %c0_21 = arith.constant 0 : index
    %40 = vector.load %arg4[%c4, %c0_20, %c0_21] : memref<9x128x64xf32, #tpu.memory_space<vmem>>, vector<1x128x64xf32>
    %41 = vector.shape_cast %40 : vector<1x128x64xf32> to vector<128x64xf32>
    %cst_22 = arith.constant dense<0.000000e+00> : vector<128x64xf32>
    %42 = tpu.matmul %39, %41, %cst_22 {dimension_numbers = #tpu.dot_dimension_numbers<[1], [0], [0], [1], [0, 0, 1, 1], [], []>} : vector<128x128xf32>, vector<128x64xf32>, vector<128x64xf32> -> vector<128x64xf32>
    %43 = arith.addf %37, %42 : vector<128x64xf32>
    %44 = vector.extract_strided_slice %12 {offsets = [0, 1, 2, 0], sizes = [8, 4, 4, 128], strides = [1, 1, 1, 1]} : vector<8x6x6x128xf32> to vector<8x4x4x128xf32>
    %45 = vector.shape_cast %44 : vector<8x4x4x128xf32> to vector<128x128xf32>
    %c5 = arith.constant 5 : index
    %c0_23 = arith.constant 0 : index
    %c0_24 = arith.constant 0 : index
    %46 = vector.load %arg4[%c5, %c0_23, %c0_24] : memref<9x128x64xf32, #tpu.memory_space<vmem>>, vector<1x128x64xf32>
    %47 = vector.shape_cast %46 : vector<1x128x64xf32> to vector<128x64xf32>
    %cst_25 = arith.constant dense<0.000000e+00> : vector<128x64xf32>
    %48 = tpu.matmul %45, %47, %cst_25 {dimension_numbers = #tpu.dot_dimension_numbers<[1], [0], [0], [1], [0, 0, 1, 1], [], []>} : vector<128x128xf32>, vector<128x64xf32>, vector<128x64xf32> -> vector<128x64xf32>
    %49 = arith.addf %43, %48 : vector<128x64xf32>
    %50 = vector.extract_strided_slice %12 {offsets = [0, 2, 0, 0], sizes = [8, 4, 4, 128], strides = [1, 1, 1, 1]} : vector<8x6x6x128xf32> to vector<8x4x4x128xf32>
    %51 = vector.shape_cast %50 : vector<8x4x4x128xf32> to vector<128x128xf32>
    %c6 = arith.constant 6 : index
    %c0_26 = arith.constant 0 : index
    %c0_27 = arith.constant 0 : index
    %52 = vector.load %arg4[%c6, %c0_26, %c0_27] : memref<9x128x64xf32, #tpu.memory_space<vmem>>, vector<1x128x64xf32>
    %53 = vector.shape_cast %52 : vector<1x128x64xf32> to vector<128x64xf32>
    %cst_28 = arith.constant dense<0.000000e+00> : vector<128x64xf32>
    %54 = tpu.matmul %51, %53, %cst_28 {dimension_numbers = #tpu.dot_dimension_numbers<[1], [0], [0], [1], [0, 0, 1, 1], [], []>} : vector<128x128xf32>, vector<128x64xf32>, vector<128x64xf32> -> vector<128x64xf32>
    %55 = arith.addf %49, %54 : vector<128x64xf32>
    %56 = vector.extract_strided_slice %12 {offsets = [0, 2, 1, 0], sizes = [8, 4, 4, 128], strides = [1, 1, 1, 1]} : vector<8x6x6x128xf32> to vector<8x4x4x128xf32>
    %57 = vector.shape_cast %56 : vector<8x4x4x128xf32> to vector<128x128xf32>
    %c7 = arith.constant 7 : index
    %c0_29 = arith.constant 0 : index
    %c0_30 = arith.constant 0 : index
    %58 = vector.load %arg4[%c7, %c0_29, %c0_30] : memref<9x128x64xf32, #tpu.memory_space<vmem>>, vector<1x128x64xf32>
    %59 = vector.shape_cast %58 : vector<1x128x64xf32> to vector<128x64xf32>
    %cst_31 = arith.constant dense<0.000000e+00> : vector<128x64xf32>
    %60 = tpu.matmul %57, %59, %cst_31 {dimension_numbers = #tpu.dot_dimension_numbers<[1], [0], [0], [1], [0, 0, 1, 1], [], []>} : vector<128x128xf32>, vector<128x64xf32>, vector<128x64xf32> -> vector<128x64xf32>
    %61 = arith.addf %55, %60 : vector<128x64xf32>
    %62 = vector.extract_strided_slice %12 {offsets = [0, 2, 2, 0], sizes = [8, 4, 4, 128], strides = [1, 1, 1, 1]} : vector<8x6x6x128xf32> to vector<8x4x4x128xf32>
    %63 = vector.shape_cast %62 : vector<8x4x4x128xf32> to vector<128x128xf32>
    %c8 = arith.constant 8 : index
    %c0_32 = arith.constant 0 : index
    %c0_33 = arith.constant 0 : index
    %64 = vector.load %arg4[%c8, %c0_32, %c0_33] : memref<9x128x64xf32, #tpu.memory_space<vmem>>, vector<1x128x64xf32>
    %65 = vector.shape_cast %64 : vector<1x128x64xf32> to vector<128x64xf32>
    %cst_34 = arith.constant dense<0.000000e+00> : vector<128x64xf32>
    %66 = tpu.matmul %63, %65, %cst_34 {dimension_numbers = #tpu.dot_dimension_numbers<[1], [0], [0], [1], [0, 0, 1, 1], [], []>} : vector<128x128xf32>, vector<128x64xf32>, vector<128x64xf32> -> vector<128x64xf32>
    %67 = arith.addf %61, %66 : vector<128x64xf32>
    %c0_35 = arith.constant 0 : index
    %c0_36 = arith.constant 0 : index
    %68 = vector.load %arg5[%c0_35, %c0_36] : memref<1x64xf32, #tpu.memory_space<vmem>>, vector<1x64xf32>
    %69 = vector.broadcast %68 : vector<1x64xf32> to vector<128x64xf32>
    %70 = arith.addf %67, %69 : vector<128x64xf32>
    %cst_37 = arith.constant 0.000000e+00 : f32
    %71 = vector.broadcast %cst_37 : f32 to vector<128x64xf32>
    %72 = arith.maximumf %70, %71 : vector<128x64xf32>
    %73 = vector.shape_cast %72 : vector<128x64xf32> to vector<8x4x4x64xf32>
    %cst_38 = arith.constant 0.000000e+00 : f32
    %74 = vector.broadcast %cst_38 : f32 to vector<8x64xf32>
    %75 = vector.extract_strided_slice %73 {offsets = [0, 0, 0, 0], sizes = [8, 1, 1, 64], strides = [1, 1, 1, 1]} : vector<8x4x4x64xf32> to vector<8x1x1x64xf32>
    %76 = vector.shape_cast %75 : vector<8x1x1x64xf32> to vector<8x64xf32>
    %77 = vector.extract_strided_slice %73 {offsets = [0, 0, 1, 0], sizes = [8, 1, 1, 64], strides = [1, 1, 1, 1]} : vector<8x4x4x64xf32> to vector<8x1x1x64xf32>
    %78 = vector.shape_cast %77 : vector<8x1x1x64xf32> to vector<8x64xf32>
    %79 = vector.extract_strided_slice %73 {offsets = [0, 1, 0, 0], sizes = [8, 1, 1, 64], strides = [1, 1, 1, 1]} : vector<8x4x4x64xf32> to vector<8x1x1x64xf32>
    %80 = vector.shape_cast %79 : vector<8x1x1x64xf32> to vector<8x64xf32>
    %81 = vector.extract_strided_slice %73 {offsets = [0, 1, 1, 0], sizes = [8, 1, 1, 64], strides = [1, 1, 1, 1]} : vector<8x4x4x64xf32> to vector<8x1x1x64xf32>
    %82 = vector.shape_cast %81 : vector<8x1x1x64xf32> to vector<8x64xf32>
    %83 = arith.maximumf %76, %78 : vector<8x64xf32>
    %84 = arith.maximumf %80, %82 : vector<8x64xf32>
    %85 = arith.maximumf %83, %84 : vector<8x64xf32>
    %c0_39 = arith.constant 0 : index
    %c0_40 = arith.constant 0 : index
    %c0_41 = arith.constant 0 : index
    %86 = vector.load %arg6[%c0_39, %c0_40, %c0_41] : memref<4x64x64xf32, #tpu.memory_space<vmem>>, vector<1x64x64xf32>
    %87 = vector.shape_cast %86 : vector<1x64x64xf32> to vector<64x64xf32>
    %cst_42 = arith.constant dense<0.000000e+00> : vector<8x64xf32>
    %88 = tpu.matmul %85, %87, %cst_42 {dimension_numbers = #tpu.dot_dimension_numbers<[1], [0], [0], [1], [0, 0, 1, 1], [], []>} : vector<8x64xf32>, vector<64x64xf32>, vector<8x64xf32> -> vector<8x64xf32>
    %89 = arith.addf %74, %88 : vector<8x64xf32>
    %90 = vector.extract_strided_slice %73 {offsets = [0, 0, 2, 0], sizes = [8, 1, 1, 64], strides = [1, 1, 1, 1]} : vector<8x4x4x64xf32> to vector<8x1x1x64xf32>
    %91 = vector.shape_cast %90 : vector<8x1x1x64xf32> to vector<8x64xf32>
    %92 = vector.extract_strided_slice %73 {offsets = [0, 0, 3, 0], sizes = [8, 1, 1, 64], strides = [1, 1, 1, 1]} : vector<8x4x4x64xf32> to vector<8x1x1x64xf32>
    %93 = vector.shape_cast %92 : vector<8x1x1x64xf32> to vector<8x64xf32>
    %94 = vector.extract_strided_slice %73 {offsets = [0, 1, 2, 0], sizes = [8, 1, 1, 64], strides = [1, 1, 1, 1]} : vector<8x4x4x64xf32> to vector<8x1x1x64xf32>
    %95 = vector.shape_cast %94 : vector<8x1x1x64xf32> to vector<8x64xf32>
    %96 = vector.extract_strided_slice %73 {offsets = [0, 1, 3, 0], sizes = [8, 1, 1, 64], strides = [1, 1, 1, 1]} : vector<8x4x4x64xf32> to vector<8x1x1x64xf32>
    %97 = vector.shape_cast %96 : vector<8x1x1x64xf32> to vector<8x64xf32>
    %98 = arith.maximumf %91, %93 : vector<8x64xf32>
    %99 = arith.maximumf %95, %97 : vector<8x64xf32>
    %100 = arith.maximumf %98, %99 : vector<8x64xf32>
    %c1_43 = arith.constant 1 : index
    %c0_44 = arith.constant 0 : index
    %c0_45 = arith.constant 0 : index
    %101 = vector.load %arg6[%c1_43, %c0_44, %c0_45] : memref<4x64x64xf32, #tpu.memory_space<vmem>>, vector<1x64x64xf32>
    %102 = vector.shape_cast %101 : vector<1x64x64xf32> to vector<64x64xf32>
    %cst_46 = arith.constant dense<0.000000e+00> : vector<8x64xf32>
    %103 = tpu.matmul %100, %102, %cst_46 {dimension_numbers = #tpu.dot_dimension_numbers<[1], [0], [0], [1], [0, 0, 1, 1], [], []>} : vector<8x64xf32>, vector<64x64xf32>, vector<8x64xf32> -> vector<8x64xf32>
    %104 = arith.addf %89, %103 : vector<8x64xf32>
    %105 = vector.extract_strided_slice %73 {offsets = [0, 2, 0, 0], sizes = [8, 1, 1, 64], strides = [1, 1, 1, 1]} : vector<8x4x4x64xf32> to vector<8x1x1x64xf32>
    %106 = vector.shape_cast %105 : vector<8x1x1x64xf32> to vector<8x64xf32>
    %107 = vector.extract_strided_slice %73 {offsets = [0, 2, 1, 0], sizes = [8, 1, 1, 64], strides = [1, 1, 1, 1]} : vector<8x4x4x64xf32> to vector<8x1x1x64xf32>
    %108 = vector.shape_cast %107 : vector<8x1x1x64xf32> to vector<8x64xf32>
    %109 = vector.extract_strided_slice %73 {offsets = [0, 3, 0, 0], sizes = [8, 1, 1, 64], strides = [1, 1, 1, 1]} : vector<8x4x4x64xf32> to vector<8x1x1x64xf32>
    %110 = vector.shape_cast %109 : vector<8x1x1x64xf32> to vector<8x64xf32>
    %111 = vector.extract_strided_slice %73 {offsets = [0, 3, 1, 0], sizes = [8, 1, 1, 64], strides = [1, 1, 1, 1]} : vector<8x4x4x64xf32> to vector<8x1x1x64xf32>
    %112 = vector.shape_cast %111 : vector<8x1x1x64xf32> to vector<8x64xf32>
    %113 = arith.maximumf %106, %108 : vector<8x64xf32>
    %114 = arith.maximumf %110, %112 : vector<8x64xf32>
    %115 = arith.maximumf %113, %114 : vector<8x64xf32>
    %c2_47 = arith.constant 2 : index
    %c0_48 = arith.constant 0 : index
    %c0_49 = arith.constant 0 : index
    %116 = vector.load %arg6[%c2_47, %c0_48, %c0_49] : memref<4x64x64xf32, #tpu.memory_space<vmem>>, vector<1x64x64xf32>
    %117 = vector.shape_cast %116 : vector<1x64x64xf32> to vector<64x64xf32>
    %cst_50 = arith.constant dense<0.000000e+00> : vector<8x64xf32>
    %118 = tpu.matmul %115, %117, %cst_50 {dimension_numbers = #tpu.dot_dimension_numbers<[1], [0], [0], [1], [0, 0, 1, 1], [], []>} : vector<8x64xf32>, vector<64x64xf32>, vector<8x64xf32> -> vector<8x64xf32>
    %119 = arith.addf %104, %118 : vector<8x64xf32>
    %120 = vector.extract_strided_slice %73 {offsets = [0, 2, 2, 0], sizes = [8, 1, 1, 64], strides = [1, 1, 1, 1]} : vector<8x4x4x64xf32> to vector<8x1x1x64xf32>
    %121 = vector.shape_cast %120 : vector<8x1x1x64xf32> to vector<8x64xf32>
    %122 = vector.extract_strided_slice %73 {offsets = [0, 2, 3, 0], sizes = [8, 1, 1, 64], strides = [1, 1, 1, 1]} : vector<8x4x4x64xf32> to vector<8x1x1x64xf32>
    %123 = vector.shape_cast %122 : vector<8x1x1x64xf32> to vector<8x64xf32>
    %124 = vector.extract_strided_slice %73 {offsets = [0, 3, 2, 0], sizes = [8, 1, 1, 64], strides = [1, 1, 1, 1]} : vector<8x4x4x64xf32> to vector<8x1x1x64xf32>
    %125 = vector.shape_cast %124 : vector<8x1x1x64xf32> to vector<8x64xf32>
    %126 = vector.extract_strided_slice %73 {offsets = [0, 3, 3, 0], sizes = [8, 1, 1, 64], strides = [1, 1, 1, 1]} : vector<8x4x4x64xf32> to vector<8x1x1x64xf32>
    %127 = vector.shape_cast %126 : vector<8x1x1x64xf32> to vector<8x64xf32>
    %128 = arith.maximumf %121, %123 : vector<8x64xf32>
    %129 = arith.maximumf %125, %127 : vector<8x64xf32>
    %130 = arith.maximumf %128, %129 : vector<8x64xf32>
    %c3_51 = arith.constant 3 : index
    %c0_52 = arith.constant 0 : index
    %c0_53 = arith.constant 0 : index
    %131 = vector.load %arg6[%c3_51, %c0_52, %c0_53] : memref<4x64x64xf32, #tpu.memory_space<vmem>>, vector<1x64x64xf32>
    %132 = vector.shape_cast %131 : vector<1x64x64xf32> to vector<64x64xf32>
    %cst_54 = arith.constant dense<0.000000e+00> : vector<8x64xf32>
    %133 = tpu.matmul %130, %132, %cst_54 {dimension_numbers = #tpu.dot_dimension_numbers<[1], [0], [0], [1], [0, 0, 1, 1], [], []>} : vector<8x64xf32>, vector<64x64xf32>, vector<8x64xf32> -> vector<8x64xf32>
    %134 = arith.addf %119, %133 : vector<8x64xf32>
    %c0_55 = arith.constant 0 : index
    %c0_56 = arith.constant 0 : index
    %135 = vector.load %arg7[%c0_55, %c0_56] : memref<1x64xf32, #tpu.memory_space<vmem>>, vector<1x64xf32>
    %136 = vector.broadcast %135 : vector<1x64xf32> to vector<8x64xf32>
    %137 = arith.addf %134, %136 : vector<8x64xf32>
    %cst_57 = arith.constant 0.000000e+00 : f32
    %138 = vector.broadcast %cst_57 : f32 to vector<8x64xf32>
    %139 = arith.maximumf %137, %138 : vector<8x64xf32>
    %c0_58 = arith.constant 0 : index
    %c0_59 = arith.constant 0 : index
    %140 = vector.load %arg8[%c0_58, %c0_59] : memref<64x128xf32, #tpu.memory_space<vmem>>, vector<64x128xf32>
    %cst_60 = arith.constant dense<0.000000e+00> : vector<8x128xf32>
    %141 = tpu.matmul %139, %140, %cst_60 {dimension_numbers = #tpu.dot_dimension_numbers<[1], [0], [0], [1], [0, 0, 1, 1], [], []>} : vector<8x64xf32>, vector<64x128xf32>, vector<8x128xf32> -> vector<8x128xf32>
    %c0_61 = arith.constant 0 : index
    %c0_62 = arith.constant 0 : index
    %142 = vector.load %arg9[%c0_61, %c0_62] : memref<1x128xf32, #tpu.memory_space<vmem>>, vector<1x128xf32>
    %143 = vector.broadcast %142 : vector<1x128xf32> to vector<8x128xf32>
    %144 = arith.addf %141, %143 : vector<8x128xf32>
    %cst_63 = arith.constant dense<0xFF800000> : vector<8xf32>
    %145 = vector.multi_reduction <maximumf>, %144, %cst_63 [1] : vector<8x128xf32> to vector<8xf32>
    %146 = vector.shape_cast %145 : vector<8xf32> to vector<8x1xf32>
    %147 = vector.broadcast %146 : vector<8x1xf32> to vector<8x128xf32>
    %148 = arith.subf %144, %147 : vector<8x128xf32>
    %149 = math.exp %148 : vector<8x128xf32>
    %cst_64 = arith.constant dense<0.000000e+00> : vector<8xf32>
    %150 = vector.multi_reduction <add>, %149, %cst_64 [1] : vector<8x128xf32> to vector<8xf32>
    %151 = vector.shape_cast %150 : vector<8xf32> to vector<8x1xf32>
    %152 = vector.broadcast %151 : vector<8x1xf32> to vector<8x128xf32>
    %153 = arith.divf %149, %152 : vector<8x128xf32>
    %c0_65 = arith.constant 0 : index
    %c0_66 = arith.constant 0 : index
    %154 = vector.load %arg10[%c0_65, %c0_66] : memref<8x128xf32, #tpu.memory_space<vmem>>, vector<8x128xf32>
    tpu.vector_store %arg10[%c0_65, %c0_66], %153 {strides = array<i32>} : memref<8x128xf32, #tpu.memory_space<vmem>>, vector<8x128xf32>,
    return
  }
  func.func @transform_0(%arg0: i32) -> (i32, i32) {
    %c0_i32 = arith.constant 0 : i32
    %c0_i32_0 = arith.constant 0 : i32
    return %arg0, %c0_i32 : i32, i32
  }
  func.func @transform_1(%arg0: i32) -> (i32, i32) {
    %c0_i32 = arith.constant 0 : i32
    %c0_i32_0 = arith.constant 0 : i32
    %c0_i32_1 = arith.constant 0 : i32
    return %c0_i32, %c0_i32_0 : i32, i32
  }
  func.func @transform_2(%arg0: i32) -> (i32, i32) {
    %c0_i32 = arith.constant 0 : i32
    %c0_i32_0 = arith.constant 0 : i32
    %c0_i32_1 = arith.constant 0 : i32
    return %c0_i32, %c0_i32_0 : i32, i32
  }
  func.func @transform_3(%arg0: i32) -> (i32, i32, i32) {
    %c0_i32 = arith.constant 0 : i32
    %c0_i32_0 = arith.constant 0 : i32
    %c0_i32_1 = arith.constant 0 : i32
    %c0_i32_2 = arith.constant 0 : i32
    return %c0_i32, %c0_i32_0, %c0_i32_1 : i32, i32, i32
  }
  func.func @transform_4(%arg0: i32) -> (i32, i32) {
    %c0_i32 = arith.constant 0 : i32
    %c0_i32_0 = arith.constant 0 : i32
    %c0_i32_1 = arith.constant 0 : i32
    return %c0_i32, %c0_i32_0 : i32, i32
  }
  func.func @transform_5(%arg0: i32) -> (i32, i32, i32) {
    %c0_i32 = arith.constant 0 : i32
    %c0_i32_0 = arith.constant 0 : i32
    %c0_i32_1 = arith.constant 0 : i32
    %c0_i32_2 = arith.constant 0 : i32
    return %c0_i32, %c0_i32_0, %c0_i32_1 : i32, i32, i32
  }
  func.func @transform_6(%arg0: i32) -> (i32, i32) {
    %c0_i32 = arith.constant 0 : i32
    %c0_i32_0 = arith.constant 0 : i32
    %c0_i32_1 = arith.constant 0 : i32
    return %c0_i32, %c0_i32_0 : i32, i32
  }
  func.func @transform_7(%arg0: i32) -> (i32, i32) {
    %c0_i32 = arith.constant 0 : i32
    %c0_i32_0 = arith.constant 0 : i32
    %c0_i32_1 = arith.constant 0 : i32
    return %c0_i32, %c0_i32_0 : i32, i32
  }
  func.func @transform_8(%arg0: i32) -> (i32, i32) {
    %c0_i32 = arith.constant 0 : i32
    %c0_i32_0 = arith.constant 0 : i32
    %c0_i32_1 = arith.constant 0 : i32
    return %c0_i32, %c0_i32_0 : i32, i32
  }
  func.func @transform_9(%arg0: i32) -> (i32, i32) {
    %c0_i32 = arith.constant 0 : i32
    %c0_i32_0 = arith.constant 0 : i32
    return %arg0, %c0_i32 : i32, i32
  }
}

</mosaic_0001>

<llo_original>
// kernel: netqc_forward.1
$region0: #{netqc_forward.1}
  #allocation0 [shape = 'u32[]', space=smem, size = 0x4, offset = 0x4, fixed_abs, tag = 'smem constant byte address 0x4 - core index']
  #allocation1 [shape = 'u32[144,128]{1,0:T(1,128)}', space=vmem, size = 0x12000, scoped, tag = 'internal scratch']
  %s0 = inlined_call_operand.hbm [shape: f32[288,40], index: 0, kind: input, shape index: {}]
  %s1 = inlined_call_operand.hbm [shape: f32[40,128], index: 1, kind: input, shape index: {}]
  %s2 = inlined_call_operand.hbm [shape: f32[1,128], index: 2, kind: input, shape index: {}]
  %s3 = inlined_call_operand.hbm [shape: f32[9,128,64], index: 3, kind: input, shape index: {}]
  %s4 = inlined_call_operand.hbm [shape: f32[1,64], index: 4, kind: input, shape index: {}]
  %s5 = inlined_call_operand.hbm [shape: f32[4,64,64], index: 5, kind: input, shape index: {}]
  %s6 = inlined_call_operand.hbm [shape: f32[1,64], index: 6, kind: input, shape index: {}]
  %s7 = inlined_call_operand.hbm [shape: f32[64,128], index: 7, kind: input, shape index: {}]
  %s8 = inlined_call_operand.hbm [shape: f32[1,128], index: 8, kind: input, shape index: {}]
  %s9 = inlined_call_operand.hbm [shape: f32[8,128], index: 9, kind: output, shape index: {}]
  %s10 = sld [smem:[#allocation0]]
  $region82: #{netqc_forward.1} parent=0
    _
  %s12 = ssub.s32 1, %s10
  %s13 = scalar_select 0, %s12, %s10
  $region1: #{netqc_forward.1} parent=0
    #allocation2 [shape = 'u8[147456]{0}', space=vmem, size = 0x24000, scoped, tag = 'input window, operand 0, single buffered']
    #allocation3 [shape = 's32[1]{0}', space=sflag, size = 0x4, scoped, tag = 'scoped memory for netqc_forward.1']
    #allocation4 [shape = 's32[1]{0}', space=sflag, size = 0x4, scoped, tag = 'scoped memory for netqc_forward.1']
    #allocation5 [shape = 'u8[20480]{0}', space=vmem, size = 0x5000, scoped, tag = 'input window, operand 1, single buffered']
    #allocation6 [shape = 's32[1]{0}', space=sflag, size = 0x4, scoped, tag = 'scoped memory for netqc_forward.1']
    #allocation7 [shape = 'u8[512]{0}', space=vmem, size = 0x400, scoped, tag = 'input window, operand 2, single buffered']
    #allocation8 [shape = 'u8[589824]{0}', space=vmem, size = 0x90000, scoped, tag = 'input window, operand 3, single buffered']
    #allocation9 [shape = 's32[1]{0}', space=sflag, size = 0x4, scoped, tag = 'scoped memory for netqc_forward.1']
    #allocation10 [shape = 'u8[512]{0}', space=vmem, size = 0x400, scoped, tag = 'input window, operand 4, single buffered']
    #allocation11 [shape = 'u8[131072]{0}', space=vmem, size = 0x20000, scoped, tag = 'input window, operand 5, single buffered']
    #allocation12 [shape = 's32[1]{0}', space=sflag, size = 0x4, scoped, tag = 'scoped memory for netqc_forward.1']
    #allocation13 [shape = 'u8[512]{0}', space=vmem, size = 0x400, scoped, tag = 'input window, operand 6, single buffered']
    #allocation14 [shape = 'u8[32768]{0}', space=vmem, size = 0x8000, scoped, tag = 'input window, operand 7, single buffered']
    #allocation15 [shape = 's32[1]{0}', space=sflag, size = 0x4, scoped, tag = 'scoped memory for netqc_forward.1']
    #allocation16 [shape = 'u8[512]{0}', space=vmem, size = 0x400, scoped, tag = 'input window, operand 8, single buffered']
    #allocation17 [shape = 'u8[4096]{0}', space=vmem, size = 0x1000, scoped, tag = 'output window, operand 0, single buffered']
    %14 = vsyncpa [#allocation3], 0
    %15 = vsyncpa [#allocation6], 0
    %16 = vsyncpa [#allocation9], 0
    %17 = vsyncpa [#allocation12], 0
    %18 = vsyncpa [#allocation15], 0
    %19 = vsyncpa [#allocation4], 0
    // Predicated region
    $region2: #{netqc_forward.1} parent=1 // pred_check
      _
    $region3: #{netqc_forward.1} parent=1 // pred_check_branch
      %21 = sbr.rel (0) target = $region5
    $region4: #{netqc_forward.1} parent=1 // pred_region
      %s23 = ssub.s32 4608, 4608
      %24 = vsyncadd [#allocation3], %s23
      %s25 = sshll.u32 [#allocation2], 4
      %s26 = int_to_ptr.vmem [resolvable:$true] %s25
      %31 = dma.hbm_to_vmem [thread:$0]  %s0, 4608, %s26, [#allocation3], 128, 128, 8
    $region5: #{netqc_forward.1} parent=1 // pred_fallthru
      _
    // Predicated region
    $region6: #{netqc_forward.1} parent=1 // pred_check
      _
    $region7: #{netqc_forward.1} parent=1 // pred_check_branch
      %33 = sbr.rel (0) target = $region9
    $region8: #{netqc_forward.1} parent=1 // pred_region
      %s35 = ssub.s32 640, 640
      %36 = vsyncadd [#allocation6], %s35
      %s37 = sshll.u32 [#allocation5], 4
      %s38 = int_to_ptr.vmem [resolvable:$true] %s37
      %43 = dma.hbm_to_vmem [thread:$0]  %s1, 640, %s38, [#allocation6], 128, 128, 8
    $region9: #{netqc_forward.1} parent=1 // pred_fallthru
      _
    // Predicated region
    $region10: #{netqc_forward.1} parent=1 // pred_check
      _
    $region11: #{netqc_forward.1} parent=1 // pred_check_branch
      %45 = sbr.rel (0) target = $region13
    $region12: #{netqc_forward.1} parent=1 // pred_region
      %s47 = ssub.s32 16, 16
      %48 = vsyncadd [#allocation6], %s47
      %s50 = sshll.u32 [#allocation7], 4
      %s51 = int_to_ptr.vmem [resolvable:$true] %s50
      %53 = dma.hbm_to_vmem [thread:$0]  %s2, 16, %s51, [#allocation6]
    $region13: #{netqc_forward.1} parent=1 // pred_fallthru
      _
    // Predicated region
    $region14: #{netqc_forward.1} parent=1 // pred_check
      _
    $region15: #{netqc_forward.1} parent=1 // pred_check_branch
      %55 = sbr.rel (0) target = $region17
    $region16: #{netqc_forward.1} parent=1 // pred_region
      %s57 = ssub.s32 18432, 18432
      %58 = vsyncadd [#allocation9], %s57
      %s59 = sshll.u32 [#allocation8], 4
      %s60 = int_to_ptr.vmem [resolvable:$true] %s59
      %65 = dma.hbm_to_vmem [thread:$0]  %s3, 18432, %s60, [#allocation9], 128, 128, 8
    $region17: #{netqc_forward.1} parent=1 // pred_fallthru
      _
    // Predicated region
    $region18: #{netqc_forward.1} parent=1 // pred_check
      _
    $region19: #{netqc_forward.1} parent=1 // pred_check_branch
      %67 = sbr.rel (0) target = $region21
    $region20: #{netqc_forward.1} parent=1 // pred_region
      %s69 = ssub.s32 16, 16
      %70 = vsyncadd [#allocation9], %s69
      %s72 = sshll.u32 [#allocation10], 4
      %s73 = int_to_ptr.vmem [resolvable:$true] %s72
      %75 = dma.hbm_to_vmem [thread:$0]  %s4, 16, %s73, [#allocation9]
    $region21: #{netqc_forward.1} parent=1 // pred_fallthru
      _
    // Predicated region
    $region22: #{netqc_forward.1} parent=1 // pred_check
      _
    $region23: #{netqc_forward.1} parent=1 // pred_check_branch
      %77 = sbr.rel (0) target = $region25
    $region24: #{netqc_forward.1} parent=1 // pred_region
      %s79 = ssub.s32 4096, 4096
      %80 = vsyncadd [#allocation12], %s79
      %s81 = sshll.u32 [#allocation11], 4
      %s82 = int_to_ptr.vmem [resolvable:$true] %s81
      %87 = dma.hbm_to_vmem [thread:$0]  %s5, 4096, %s82, [#allocation12], 128, 128, 8
    $region25: #{netqc_forward.1} parent=1 // pred_fallthru
      _
    // Predicated region
    $region26: #{netqc_forward.1} parent=1 // pred_check
      _
    $region27: #{netqc_forward.1} parent=1 // pred_check_branch
      %89 = sbr.rel (0) target = $region29
    $region28: #{netqc_forward.1} parent=1 // pred_region
      %s91 = ssub.s32 16, 16
      %92 = vsyncadd [#allocation12], %s91
      %s94 = sshll.u32 [#allocation13], 4
      %s95 = int_to_ptr.vmem [resolvable:$true] %s94
      %97 = dma.hbm_to_vmem [thread:$0]  %s6, 16, %s95, [#allocation12]
    $region29: #{netqc_forward.1} parent=1 // pred_fallthru
      _
    // Predicated region
    $region30: #{netqc_forward.1} parent=1 // pred_check
      _
    $region31: #{netqc_forward.1} parent=1 // pred_check_branch
      %99 = sbr.rel (0) target = $region33
    $region32: #{netqc_forward.1} parent=1 // pred_region
      %s101 = ssub.s32 1024, 1024
      %102 = vsyncadd [#allocation15], %s101
      %s103 = sshll.u32 [#allocation14], 4
      %s104 = int_to_ptr.vmem [resolvable:$true] %s103
      %109 = dma.hbm_to_vmem [thread:$0]  %s7, 1024, %s104, [#allocation15], 128, 128, 8
    $region33: #{netqc_forward.1} parent=1 // pred_fallthru
      _
    // Predicated region
    $region34: #{netqc_forward.1} parent=1 // pred_check
      _
    $region35: #{netqc_forward.1} parent=1 // pred_check_branch
      %111 = sbr.rel (0) target = $region37
    $region36: #{netqc_forward.1} parent=1 // pred_region
      %s113 = ssub.s32 16, 16
      %114 = vsyncadd [#allocation15], %s113
      %s116 = sshll.u32 [#allocation16], 4
      %s117 = int_to_ptr.vmem [resolvable:$true] %s116
      %119 = dma.hbm_to_vmem [thread:$0]  %s8, 16, %s117, [#allocation15]
    $region37: #{netqc_forward.1} parent=1 // pred_fallthru
      _
    // Predicated region
    $region38: #{netqc_forward.1} parent=1 // pred_check
      _
    $region39: #{netqc_forward.1} parent=1 // pred_check_branch
      %121 = sbr.rel (0) target = $region41
    $region40: #{netqc_forward.1} parent=1 // pred_region
      %122 = dma.done [#allocation3], 4608
    $region41: #{netqc_forward.1} parent=1 // pred_fallthru
      _
    // Predicated region
    $region42: #{netqc_forward.1} parent=1 // pred_check
      _
    $region43: #{netqc_forward.1} parent=1 // pred_check_branch
      %124 = sbr.rel (0) target = $region45
    $region44: #{netqc_forward.1} parent=1 // pred_region
      %125 = dma.done [#allocation6], 640
    $region45: #{netqc_forward.1} parent=1 // pred_fallthru
      _
    // Predicated region
    $region46: #{netqc_forward.1} parent=1 // pred_check
      _
    $region47: #{netqc_forward.1} parent=1 // pred_check_branch
      %127 = sbr.rel (0) target = $region49
    $region48: #{netqc_forward.1} parent=1 // pred_region
      %128 = dma.done [#allocation6], 16
    $region49: #{netqc_forward.1} parent=1 // pred_fallthru
      _
    // Predicated region
    $region50: #{netqc_forward.1} parent=1 // pred_check
      _
    $region51: #{netqc_forward.1} parent=1 // pred_check_branch
      %130 = sbr.rel (0) target = $region53
    $region52: #{netqc_forward.1} parent=1 // pred_region
      %131 = dma.done [#allocation9], 18432
    $region53: #{netqc_forward.1} parent=1 // pred_fallthru
      _
    // Predicated region
    $region54: #{netqc_forward.1} parent=1 // pred_check
      _
    $region55: #{netqc_forward.1} parent=1 // pred_check_branch
      %133 = sbr.rel (0) target = $region57
    $region56: #{netqc_forward.1} parent=1 // pred_region
      %134 = dma.done [#allocation9], 16
    $region57: #{netqc_forward.1} parent=1 // pred_fallthru
      _
    // Predicated region
    $region58: #{netqc_forward.1} parent=1 // pred_check
      _
    $region59: #{netqc_forward.1} parent=1 // pred_check_branch
      %136 = sbr.rel (0) target = $region61
    $region60: #{netqc_forward.1} parent=1 // pred_region
      %137 = dma.done [#allocation12], 4096
    $region61: #{netqc_forward.1} parent=1 // pred_fallthru
      _
    // Predicated region
    $region62: #{netqc_forward.1} parent=1 // pred_check
      _
    $region63: #{netqc_forward.1} parent=1 // pred_check_branch
      %139 = sbr.rel (0) target = $region65
    $region64: #{netqc_forward.1} parent=1 // pred_region
      %140 = dma.done [#allocation12], 16
    $region65: #{netqc_forward.1} parent=1 // pred_fallthru
      _
    // Predicated region
    $region66: #{netqc_forward.1} parent=1 // pred_check
      _
    $region67: #{netqc_forward.1} parent=1 // pred_check_branch
      %142 = sbr.rel (0) target = $region69
    $region68: #{netqc_forward.1} parent=1 // pred_region
      %143 = dma.done [#allocation15], 1024
    $region69: #{netqc_forward.1} parent=1 // pred_fallthru
      _
    // Predicated region
    $region70: #{netqc_forward.1} parent=1 // pred_check
      _
    $region71: #{netqc_forward.1} parent=1 // pred_check_branch
      %145 = sbr.rel (0) target = $region73
    $region72: #{netqc_forward.1} parent=1 // pred_region
      %146 = dma.done [#allocation15], 16
    $region73: #{netqc_forward.1} parent=1 // pred_fallthru
      _
    %v147 = vld [vmem:[#allocation2] sm:$0xff]
    %v148 = vld [vmem:[#allocation2 + $0x8] sm:$0xff]
    %v149 = vld [vmem:[#allocation2 + $0x10] sm:$0xff]
    %v150 = vld [vmem:[#allocation2 + $0x18] sm:$0xff]
    %v151 = vld [vmem:[#allocation2 + $0x20] sm:$0xff]
    %v152 = vld [vmem:[#allocation2 + $0x28] sm:$0xff]
    %v153 = vld [vmem:[#allocation2 + $0x30] sm:$0xff]
    %v154 = vld [vmem:[#allocation2 + $0x38] sm:$0xff]
    %v155 = vld [vmem:[#allocation2 + $0x40] sm:$0xff]
    %v156 = vld [vmem:[#allocation2 + $0x48] sm:$0xff]
    %v157 = vld [vmem:[#allocation2 + $0x50] sm:$0xff]
    %v158 = vld [vmem:[#allocation2 + $0x58] sm:$0xff]
    %v159 = vld [vmem:[#allocation2 + $0x60] sm:$0xff]
    %v160 = vld [vmem:[#allocation2 + $0x68] sm:$0xff]
    %v161 = vld [vmem:[#allocation2 + $0x70] sm:$0xff]
    %v162 = vld [vmem:[#allocation2 + $0x78] sm:$0xff]
    %v163 = vld [vmem:[#allocation2 + $0x80] sm:$0xff]
    %v164 = vld [vmem:[#allocation2 + $0x88] sm:$0xff]
    %v165 = vld [vmem:[#allocation2 + $0x90] sm:$0xff]
    %v166 = vld [vmem:[#allocation2 + $0x98] sm:$0xff]
    %v167 = vld [vmem:[#allocation2 + $0xa0] sm:$0xff]
    %v168 = vld [vmem:[#allocation2 + $0xa8] sm:$0xff]
    %v169 = vld [vmem:[#allocation2 + $0xb0] sm:$0xff]
    %v170 = vld [vmem:[#allocation2 + $0xb8] sm:$0xff]
    %v171 = vld [vmem:[#allocation2 + $0xc0] sm:$0xff]
    %v172 = vld [vmem:[#allocation2 + $0xc8] sm:$0xff]
    %v173 = vld [vmem:[#allocation2 + $0xd0] sm:$0xff]
    %v174 = vld [vmem:[#allocation2 + $0xd8] sm:$0xff]
    %v175 = vld [vmem:[#allocation2 + $0xe0] sm:$0xff]
    %v176 = vld [vmem:[#allocation2 + $0xe8] sm:$0xff]
    %v177 = vld [vmem:[#allocation2 + $0xf0] sm:$0xff]
    %v178 = vld [vmem:[#allocation2 + $0xf8] sm:$0xff]
    %v179 = vld [vmem:[#allocation2 + $0x100] sm:$0xff]
    %v180 = vld [vmem:[#allocation2 + $0x108] sm:$0xff]
    %v181 = vld [vmem:[#allocation2 + $0x110] sm:$0xff]
    %v182 = vld [vmem:[#allocation2 + $0x118] sm:$0xff]
    %v183 = vld [vmem:[#allocation5] sm:$0xff]
    %v184 = vld [vmem:[#allocation5 + $0x8] sm:$0xff]
    %v185 = vld [vmem:[#allocation5 + $0x10] sm:$0xff]
    %v186 = vld [vmem:[#allocation5 + $0x18] sm:$0xff]
    %v187 = vld [vmem:[#allocation5 + $0x20] sm:$0xff]
    %v188 = vld [vmem:[#allocation7] sm:$0x1]
    %v190 = vlaneseq
    %v191 = vshrl.u32 %v190, 7
    %v192 = vsub.s32 0, %v191
    %v193 = vrot.slane %v188, %v192
    %vm195 = vcmask 326656
    %v197 = vsel %vm195, %v147, 0
    %v200 = vsel %vm195, %v148, 0
    %v203 = vsel %vm195, %v149, 0
    %v206 = vsel %vm195, %v150, 0
    %v209 = vsel %vm195, %v151, 0
    %v212 = vsel %vm195, %v152, 0
    %v215 = vsel %vm195, %v153, 0
    %v218 = vsel %vm195, %v154, 0
    %v221 = vsel %vm195, %v155, 0
    %v224 = vsel %vm195, %v156, 0
    %v227 = vsel %vm195, %v157, 0
    %v230 = vsel %vm195, %v158, 0
    %v233 = vsel %vm195, %v159, 0
    %v236 = vsel %vm195, %v160, 0
    %v239 = vsel %vm195, %v161, 0
    %v242 = vsel %vm195, %v162, 0
    %v245 = vsel %vm195, %v163, 0
    %v248 = vsel %vm195, %v164, 0
    %v251 = vsel %vm195, %v165, 0
    %v254 = vsel %vm195, %v166, 0
    %v257 = vsel %vm195, %v167, 0
    %v260 = vsel %vm195, %v168, 0
    %v263 = vsel %vm195, %v169, 0
    %v266 = vsel %vm195, %v170, 0
    %v269 = vsel %vm195, %v171, 0
    %v272 = vsel %vm195, %v172, 0
    %v275 = vsel %vm195, %v173, 0
    %v278 = vsel %vm195, %v174, 0
    %v281 = vsel %vm195, %v175, 0
    %v284 = vsel %vm195, %v176, 0
    %v287 = vsel %vm195, %v177, 0
    %v290 = vsel %vm195, %v178, 0
    %v293 = vsel %vm195, %v179, 0
    %v296 = vsel %vm195, %v180, 0
    %v299 = vsel %vm195, %v181, 0
    %v302 = vsel %vm195, %v182, 0
    %304 = vmatprep.subr.mxu0 0.0
    %305 = vmatpush1.msra.mxu0 %v183
    %306 = vmatprep.subr.mxu0 0.0
    %307 = vmatpush1.msra.mxu0 %v184
    %308 = vmatprep.subr.mxu0 0.0
    %309 = vmatpush1.msra.mxu0 %v185
    %310 = vmatprep.subr.mxu0 0.0
    %311 = vmatpush1.msra.mxu0 %v186
    %312 = vmatprep.subr.mxu0 0.0
    %313 = vmatpush1.msra.mxu0 %v187
    %314 = vmatprep.subr.mxu0 0.0
    %315 = vmatpush1.msra.mxu0 0.0
    %316 = vmatprep.subr.mxu0 0.0
    %317 = vmatpush1.msra.mxu0 0.0
    %318 = vmatprep.subr.mxu0 0.0
    %319 = vmatpush1.msra.mxu0 0.0
    %320 = vmatprep.subr.mxu0 0.0
    %321 = vmatpush1.msra.mxu0 0.0
    %322 = vmatprep.subr.mxu0 0.0
    %323 = vmatpush1.msra.mxu0 0.0
    %324 = vmatprep.subr.mxu0 0.0
    %325 = vmatpush1.msra.mxu0 0.0
    %326 = vmatprep.subr.mxu0 0.0
    %327 = vmatpush1.msra.mxu0 0.0
    %328 = vmatprep.subr.mxu0 0.0
    %329 = vmatpush1.msra.mxu0 0.0
    %330 = vmatprep.subr.mxu0 0.0
    %331 = vmatpush1.msra.mxu0 0.0
    %332 = vmatprep.subr.mxu0 0.0
    %333 = vmatpush1.msra.mxu0 0.0
    %334 = vmatprep.subr.mxu0 0.0
    %335 = vmatpush1.msra.mxu0 0.0
    %336 = vmatprep.subr.mxu0 0.0
    %337 = vmatpush1.msra.mxu0 0.0
    %338 = vmatprep.subr.mxu0 0.0
    %339 = vmatpush1.msra.mxu0 0.0
    %340 = vmatprep.subr.mxu0 0.0
    %341 = vmatpush1.msra.mxu0 0.0
    %342 = vmatprep.subr.mxu0 0.0
    %343 = vmatpush1.msra.mxu0 0.0
    %344 = vmatprep.subr.mxu0 0.0
    %345 = vmatpush1.msra.mxu0 0.0
    %346 = vmatprep.subr.mxu0 0.0
    %347 = vmatpush1.msra.mxu0 0.0
    %348 = vmatprep.subr.mxu0 0.0
    %349 = vmatpush1.msra.mxu0 0.0
    %350 = vmatprep.subr.mxu0 0.0
    %351 = vmatpush1.msra.mxu0 0.0
    %352 = vmatprep.subr.mxu0 0.0
    %353 = vmatpush1.msra.mxu0 0.0
    %354 = vmatprep.subr.mxu0 0.0
    %355 = vmatpush1.msra.mxu0 0.0
    %356 = vmatprep.subr.mxu0 0.0
    %357 = vmatpush1.msra.mxu0 0.0
    %358 = vmatprep.subr.mxu0 0.0
    %359 = vmatpush1.msra.mxu0 0.0
    %360 = vmatprep.subr.mxu0 0.0
    %361 = vmatpush1.msra.mxu0 0.0
    %362 = vmatprep.subr.mxu0 0.0
    %363 = vmatpush1.msra.mxu0 0.0
    %364 = vmatprep.subr.mxu0 0.0
    %365 = vmatpush1.msra.mxu0 0.0
    %366 = vmatprep.subr.mxu0 0.0
    %367 = vmatpush1.msra.mxu0 0.0
    %368 = vmatprep.mubr.f32.mxu0 0.0
    %369 = vmatmul.mubr.f32.gmra.mrb[0].mxu0 %v197
    %v370 = vpop.f32.mrb[0].mxu0
    %v371 = vadd.f32 %v193, %v370
    %v372 = vpop.f32.mrb[0].mxu0
    %373 = vmatprep.mubr.f32.mxu0 0.0
    %374 = vmatmul.mubr.f32.gmra.mrb[0].mxu0 %v200
    %v375 = vpop.f32.mrb[0].mxu0
    %v376 = vadd.f32 %v193, %v375
    %v377 = vpop.f32.mrb[0].mxu0
    %378 = vmatprep.mubr.f32.mxu0 0.0
    %379 = vmatmul.mubr.f32.gmra.mrb[0].mxu0 %v203
    %v380 = vpop.f32.mrb[0].mxu0
    %v381 = vadd.f32 %v193, %v380
    %v382 = vpop.f32.mrb[0].mxu0
    %383 = vmatprep.mubr.f32.mxu0 0.0
    %384 = vmatmul.mubr.f32.gmra.mrb[0].mxu0 %v206
    %v385 = vpop.f32.mrb[0].mxu0
    %v386 = vadd.f32 %v193, %v385
    %v387 = vpop.f32.mrb[0].mxu0
    %388 = vmatprep.mubr.f32.mxu0 0.0
    %389 = vmatmul.mubr.f32.gmra.mrb[0].mxu0 %v209
    %v390 = vpop.f32.mrb[0].mxu0
    %v391 = vadd.f32 %v193, %v390
    %v392 = vpop.f32.mrb[0].mxu0
    %393 = vmatprep.mubr.f32.mxu0 0.0
    %394 = vmatmul.mubr.f32.gmra.mrb[0].mxu0 %v212
    %v395 = vpop.f32.mrb[0].mxu0
    %v396 = vadd.f32 %v193, %v395
    %v397 = vpop.f32.mrb[0].mxu0
    %398 = vmatprep.mubr.f32.mxu0 0.0
    %399 = vmatmul.mubr.f32.gmra.mrb[0].mxu0 %v215
    %v400 = vpop.f32.mrb[0].mxu0
    %v401 = vadd.f32 %v193, %v400
    %v402 = vpop.f32.mrb[0].mxu0
    %403 = vmatprep.mubr.f32.mxu0 0.0
    %404 = vmatmul.mubr.f32.gmra.mrb[0].mxu0 %v218
    %v405 = vpop.f32.mrb[0].mxu0
    %v406 = vadd.f32 %v193, %v405
    %v407 = vpop.f32.mrb[0].mxu0
    %408 = vmatprep.mubr.f32.mxu0 0.0
    %409 = vmatmul.mubr.f32.gmra.mrb[0].mxu0 %v221
    %v410 = vpop.f32.mrb[0].mxu0
    %v411 = vadd.f32 %v193, %v410
    %v412 = vpop.f32.mrb[0].mxu0
    %413 = vmatprep.mubr.f32.mxu0 0.0
    %414 = vmatmul.mubr.f32.gmra.mrb[0].mxu0 %v224
    %v415 = vpop.f32.mrb[0].mxu0
    %v416 = vadd.f32 %v193, %v415
    %v417 = vpop.f32.mrb[0].mxu0
    %418 = vmatprep.mubr.f32.mxu0 0.0
    %419 = vmatmul.mubr.f32.gmra.mrb[0].mxu0 %v227
    %v420 = vpop.f32.mrb[0].mxu0
    %v421 = vadd.f32 %v193, %v420
    %v422 = vpop.f32.mrb[0].mxu0
    %423 = vmatprep.mubr.f32.mxu0 0.0
    %424 = vmatmul.mubr.f32.gmra.mrb[0].mxu0 %v230
    %v425 = vpop.f32.mrb[0].mxu0
    %v426 = vadd.f32 %v193, %v425
    %v427 = vpop.f32.mrb[0].mxu0
    %428 = vmatprep.mubr.f32.mxu0 0.0
    %429 = vmatmul.mubr.f32.gmra.mrb[0].mxu0 %v233
    %v430 = vpop.f32.mrb[0].mxu0
    %v431 = vadd.f32 %v193, %v430
    %v432 = vpop.f32.mrb[0].mxu0
    %433 = vmatprep.mubr.f32.mxu0 0.0
    %434 = vmatmul.mubr.f32.gmra.mrb[0].mxu0 %v236
    %v435 = vpop.f32.mrb[0].mxu0
    %v436 = vadd.f32 %v193, %v435
    %v437 = vpop.f32.mrb[0].mxu0
    %438 = vmatprep.mubr.f32.mxu0 0.0
    %439 = vmatmul.mubr.f32.gmra.mrb[0].mxu0 %v239
    %v440 = vpop.f32.mrb[0].mxu0
    %v441 = vadd.f32 %v193, %v440
    %v442 = vpop.f32.mrb[0].mxu0
    %443 = vmatprep.mubr.f32.mxu0 0.0
    %444 = vmatmul.mubr.f32.gmra.mrb[0].mxu0 %v242
    %v445 = vpop.f32.mrb[0].mxu0
    %v446 = vadd.f32 %v193, %v445
    %v447 = vpop.f32.mrb[0].mxu0
    %448 = vmatprep.mubr.f32.mxu0 0.0
    %449 = vmatmul.mubr.f32.gmra.mrb[0].mxu0 %v245
    %v450 = vpop.f32.mrb[0].mxu0
    %v451 = vadd.f32 %v193, %v450
    %v452 = vpop.f32.mrb[0].mxu0
    %453 = vmatprep.mubr.f32.mxu0 0.0
    %454 = vmatmul.mubr.f32.gmra.mrb[0].mxu0 %v248
    %v455 = vpop.f32.mrb[0].mxu0
    %v456 = vadd.f32 %v193, %v455
    %v457 = vpop.f32.mrb[0].mxu0
    %458 = vmatprep.mubr.f32.mxu0 0.0
    %459 = vmatmul.mubr.f32.gmra.mrb[0].mxu0 %v251
    %v460 = vpop.f32.mrb[0].mxu0
    %v461 = vadd.f32 %v193, %v460
    %v462 = vpop.f32.mrb[0].mxu0
    %463 = vmatprep.mubr.f32.mxu0 0.0
    %464 = vmatmul.mubr.f32.gmra.mrb[0].mxu0 %v254
    %v465 = vpop.f32.mrb[0].mxu0
    %v466 = vadd.f32 %v193, %v465
    %v467 = vpop.f32.mrb[0].mxu0
    %468 = vmatprep.mubr.f32.mxu0 0.0
    %469 = vmatmul.mubr.f32.gmra.mrb[0].mxu0 %v257
    %v470 = vpop.f32.mrb[0].mxu0
    %v471 = vadd.f32 %v193, %v470
    %v472 = vpop.f32.mrb[0].mxu0
    %473 = vmatprep.mubr.f32.mxu0 0.0
    %474 = vmatmul.mubr.f32.gmra.mrb[0].mxu0 %v260
    %v475 = vpop.f32.mrb[0].mxu0
    %v476 = vadd.f32 %v193, %v475
    %v477 = vpop.f32.mrb[0].mxu0
    %478 = vmatprep.mubr.f32.mxu0 0.0
    %479 = vmatmul.mubr.f32.gmra.mrb[0].mxu0 %v263
    %v480 = vpop.f32.mrb[0].mxu0
    %v481 = vadd.f32 %v193, %v480
    %v482 = vpop.f32.mrb[0].mxu0
    %483 = vmatprep.mubr.f32.mxu0 0.0
    %484 = vmatmul.mubr.f32.gmra.mrb[0].mxu0 %v266
    %v485 = vpop.f32.mrb[0].mxu0
    %v486 = vadd.f32 %v193, %v485
    %v487 = vpop.f32.mrb[0].mxu0
    %488 = vmatprep.mubr.f32.mxu0 0.0
    %489 = vmatmul.mubr.f32.gmra.mrb[0].mxu0 %v269
    %v490 = vpop.f32.mrb[0].mxu0
    %v491 = vadd.f32 %v193, %v490
    %v492 = vpop.f32.mrb[0].mxu0
    %493 = vmatprep.mubr.f32.mxu0 0.0
    %494 = vmatmul.mubr.f32.gmra.mrb[0].mxu0 %v272
    %v495 = vpop.f32.mrb[0].mxu0
    %v496 = vadd.f32 %v193, %v495
    %v497 = vpop.f32.mrb[0].mxu0
    %498 = vmatprep.mubr.f32.mxu0 0.0
    %499 = vmatmul.mubr.f32.gmra.mrb[0].mxu0 %v275
    %v500 = vpop.f32.mrb[0].mxu0
    %v501 = vadd.f32 %v193, %v500
    %v502 = vpop.f32.mrb[0].mxu0
    %503 = vmatprep.mubr.f32.mxu0 0.0
    %504 = vmatmul.mubr.f32.gmra.mrb[0].mxu0 %v278
    %v505 = vpop.f32.mrb[0].mxu0
    %v506 = vadd.f32 %v193, %v505
    %v507 = vpop.f32.mrb[0].mxu0
    %508 = vmatprep.mubr.f32.mxu0 0.0
    %509 = vmatmul.mubr.f32.gmra.mrb[0].mxu0 %v281
    %v510 = vpop.f32.mrb[0].mxu0
    %v511 = vadd.f32 %v193, %v510
    %v512 = vpop.f32.mrb[0].mxu0
    %513 = vmatprep.mubr.f32.mxu0 0.0
    %514 = vmatmul.mubr.f32.gmra.mrb[0].mxu0 %v284
    %v515 = vpop.f32.mrb[0].mxu0
    %v516 = vadd.f32 %v193, %v515
    %v517 = vpop.f32.mrb[0].mxu0
    %518 = vmatprep.mubr.f32.mxu0 0.0
    %519 = vmatmul.mubr.f32.gmra.mrb[0].mxu0 %v287
    %v520 = vpop.f32.mrb[0].mxu0
    %v521 = vadd.f32 %v193, %v520
    %v522 = vpop.f32.mrb[0].mxu0
    %523 = vmatprep.mubr.f32.mxu0 0.0
    %524 = vmatmul.mubr.f32.gmra.mrb[0].mxu0 %v290
    %v525 = vpop.f32.mrb[0].mxu0
    %v526 = vadd.f32 %v193, %v525
    %v527 = vpop.f32.mrb[0].mxu0
    %528 = vmatprep.mubr.f32.mxu0 0.0
    %529 = vmatmul.mubr.f32.gmra.mrb[0].mxu0 %v293
    %v530 = vpop.f32.mrb[0].mxu0
    %v531 = vadd.f32 %v193, %v530
    %v532 = vpop.f32.mrb[0].mxu0
    %533 = vmatprep.mubr.f32.mxu0 0.0
    %534 = vmatmul.mubr.f32.gmra.mrb[0].mxu0 %v296
    %v535 = vpop.f32.mrb[0].mxu0
    %v536 = vadd.f32 %v193, %v535
    %v537 = vpop.f32.mrb[0].mxu0
    %538 = vmatprep.mubr.f32.mxu0 0.0
    %539 = vmatmul.mubr.f32.gmra.mrb[0].mxu0 %v299
    %v540 = vpop.f32.mrb[0].mxu0
    %v541 = vadd.f32 %v193, %v540
    %v542 = vpop.f32.mrb[0].mxu0
    %543 = vmatprep.mubr.f32.mxu0 0.0
    %544 = vmatmul.mubr.f32.gmra.mrb[0].mxu0 %v302
    %v545 = vpop.f32.mrb[0].mxu0
    %v546 = vadd.f32 %v193, %v545
    %v547 = vpop.f32.mrb[0].mxu0
    %548 = vdwg.mxu0
    %v549 = vmax.f32 %v371, 0.0
    %v550 = vmax.f32 %v376, 0.0
    %v551 = vmax.f32 %v381, 0.0
    %v552 = vmax.f32 %v386, 0.0
    %v553 = vmax.f32 %v391, 0.0
    %v554 = vmax.f32 %v396, 0.0
    %v555 = vmax.f32 %v401, 0.0
    %v556 = vmax.f32 %v406, 0.0
    %v557 = vmax.f32 %v411, 0.0
    %v558 = vmax.f32 %v416, 0.0
    %v559 = vmax.f32 %v421, 0.0
    %v560 = vmax.f32 %v426, 0.0
    %v561 = vmax.f32 %v431, 0.0
    %v562 = vmax.f32 %v436, 0.0
    %v563 = vmax.f32 %v441, 0.0
    %v564 = vmax.f32 %v446, 0.0
    %v565 = vmax.f32 %v451, 0.0
    %v566 = vmax.f32 %v456, 0.0
    %v567 = vmax.f32 %v461, 0.0
    %v568 = vmax.f32 %v466, 0.0
    %v569 = vmax.f32 %v471, 0.0
    %v570 = vmax.f32 %v476, 0.0
    %v571 = vmax.f32 %v481, 0.0
    %v572 = vmax.f32 %v486, 0.0
    %v573 = vmax.f32 %v491, 0.0
    %v574 = vmax.f32 %v496, 0.0
    %v575 = vmax.f32 %v501, 0.0
    %v576 = vmax.f32 %v506, 0.0
    %v577 = vmax.f32 %v511, 0.0
    %v578 = vmax.f32 %v516, 0.0
    %v579 = vmax.f32 %v521, 0.0
    %v580 = vmax.f32 %v526, 0.0
    %v581 = vmax.f32 %v531, 0.0
    %v582 = vmax.f32 %v536, 0.0
    %v583 = vmax.f32 %v541, 0.0
    %v584 = vmax.f32 %v546, 0.0
    %585 = vrot.lane.b32.xlu0 %v549, 64
    %v586 = vpop.permute.xlu0 %585
    %587 = vrot.lane.b32.xlu0 %v550, 64
    %v588 = vpop.permute.xlu0 %587
    %589 = vrot.lane.b32.xlu0 %v551, 64
    %v590 = vpop.permute.xlu0 %589
    %591 = vrot.lane.b32.xlu0 %v552, 64
    %v592 = vpop.permute.xlu0 %591
    %593 = vrot.lane.b32.xlu0 %v553, 64
    %v594 = vpop.permute.xlu0 %593
    %595 = vrot.lane.b32.xlu0 %v554, 64
    %v596 = vpop.permute.xlu0 %595
    %597 = vrot.lane.b32.xlu0 %v555, 64
    %v598 = vpop.permute.xlu0 %597
    %599 = vrot.lane.b32.xlu0 %v556, 64
    %v600 = vpop.permute.xlu0 %599
    %601 = vrot.lane.b32.xlu0 %v557, 64
    %v602 = vpop.permute.xlu0 %601
    %603 = vrot.lane.b32.xlu0 %v558, 64
    %v604 = vpop.permute.xlu0 %603
    %605 = vrot.lane.b32.xlu0 %v559, 64
    %v606 = vpop.permute.xlu0 %605
    %607 = vrot.lane.b32.xlu0 %v560, 64
    %v608 = vpop.permute.xlu0 %607
    %609 = vrot.lane.b32.xlu0 %v561, 64
    %v610 = vpop.permute.xlu0 %609
    %611 = vrot.lane.b32.xlu0 %v562, 64
    %v612 = vpop.permute.xlu0 %611
    %613 = vrot.lane.b32.xlu0 %v563, 64
    %v614 = vpop.permute.xlu0 %613
    %615 = vrot.lane.b32.xlu0 %v564, 64
    %v616 = vpop.permute.xlu0 %615
    %617 = vrot.lane.b32.xlu0 %v565, 64
    %v618 = vpop.permute.xlu0 %617
    %619 = vrot.lane.b32.xlu0 %v566, 64
    %v620 = vpop.permute.xlu0 %619
    %621 = vrot.lane.b32.xlu0 %v567, 64
    %v622 = vpop.permute.xlu0 %621
    %623 = vrot.lane.b32.xlu0 %v568, 64
    %v624 = vpop.permute.xlu0 %623
    %625 = vrot.lane.b32.xlu0 %v569, 64
    %v626 = vpop.permute.xlu0 %625
    %627 = vrot.lane.b32.xlu0 %v570, 64
    %v628 = vpop.permute.xlu0 %627
    %629 = vrot.lane.b32.xlu0 %v571, 64
    %v630 = vpop.permute.xlu0 %629
    %631 = vrot.lane.b32.xlu0 %v572, 64
    %v632 = vpop.permute.xlu0 %631
    %633 = vrot.lane.b32.xlu0 %v573, 64
    %v634 = vpop.permute.xlu0 %633
    %635 = vrot.lane.b32.xlu0 %v574, 64
    %v636 = vpop.permute.xlu0 %635
    %637 = vrot.lane.b32.xlu0 %v575, 64
    %v638 = vpop.permute.xlu0 %637
    %639 = vrot.lane.b32.xlu0 %v576, 64
    %v640 = vpop.permute.xlu0 %639
    %641 = vrot.lane.b32.xlu0 %v577, 64
    %v642 = vpop.permute.xlu0 %641
    %643 = vrot.lane.b32.xlu0 %v578, 64
    %v644 = vpop.permute.xlu0 %643
    %645 = vrot.lane.b32.xlu0 %v579, 64
    %v646 = vpop.permute.xlu0 %645
    %647 = vrot.lane.b32.xlu0 %v580, 64
    %v648 = vpop.permute.xlu0 %647
    %649 = vrot.lane.b32.xlu0 %v581, 64
    %v650 = vpop.permute.xlu0 %649
    %651 = vrot.lane.b32.xlu0 %v582, 64
    %v652 = vpop.permute.xlu0 %651
    %653 = vrot.lane.b32.xlu0 %v583, 64
    %v654 = vpop.permute.xlu0 %653
    %655 = vrot.lane.b32.xlu0 %v584, 64
    %v656 = vpop.permute.xlu0 %655
    %v657 = vmax.f32 %v549, %v586
    %v658 = vmax.f32 %v550, %v588
    %v659 = vmax.f32 %v551, %v590
    %v660 = vmax.f32 %v552, %v592
    %v661 = vmax.f32 %v553, %v594
    %v662 = vmax.f32 %v554, %v596
    %v663 = vmax.f32 %v555, %v598
    %v664 = vmax.f32 %v556, %v600
    %v665 = vmax.f32 %v557, %v602
    %v666 = vmax.f32 %v558, %v604
    %v667 = vmax.f32 %v559, %v606
    %v668 = vmax.f32 %v560, %v608
    %v669 = vmax.f32 %v561, %v610
    %v670 = vmax.f32 %v562, %v612
    %v671 = vmax.f32 %v563, %v614
    %v672 = vmax.f32 %v564, %v616
    %v673 = vmax.f32 %v565, %v618
    %v674 = vmax.f32 %v566, %v620
    %v675 = vmax.f32 %v567, %v622
    %v676 = vmax.f32 %v568, %v624
    %v677 = vmax.f32 %v569, %v626
    %v678 = vmax.f32 %v570, %v628
    %v679 = vmax.f32 %v571, %v630
    %v680 = vmax.f32 %v572, %v632
    %v681 = vmax.f32 %v573, %v634
    %v682 = vmax.f32 %v574, %v636
    %v683 = vmax.f32 %v575, %v638
    %v684 = vmax.f32 %v576, %v640
    %v685 = vmax.f32 %v577, %v642
    %v686 = vmax.f32 %v578, %v644
    %v687 = vmax.f32 %v579, %v646
    %v688 = vmax.f32 %v580, %v648
    %v689 = vmax.f32 %v581, %v650
    %v690 = vmax.f32 %v582, %v652
    %v691 = vmax.f32 %v583, %v654
    %v692 = vmax.f32 %v584, %v656
    %693 = vrot.lane.b32.xlu0 %v657, 32
    %v694 = vpop.permute.xlu0 %693
    %695 = vrot.lane.b32.xlu0 %v658, 32
    %v696 = vpop.permute.xlu0 %695
    %697 = vrot.lane.b32.xlu0 %v659, 32
    %v698 = vpop.permute.xlu0 %697
    %699 = vrot.lane.b32.xlu0 %v660, 32
    %v700 = vpop.permute.xlu0 %699
    %701 = vrot.lane.b32.xlu0 %v661, 32
    %v702 = vpop.permute.xlu0 %701
    %703 = vrot.lane.b32.xlu0 %v662, 32
    %v704 = vpop.permute.xlu0 %703
    %705 = vrot.lane.b32.xlu0 %v663, 32
    %v706 = vpop.permute.xlu0 %705
    %707 = vrot.lane.b32.xlu0 %v664, 32
    %v708 = vpop.permute.xlu0 %707
    %709 = vrot.lane.b32.xlu0 %v665, 32
    %v710 = vpop.permute.xlu0 %709
    %711 = vrot.lane.b32.xlu0 %v666, 32
    %v712 = vpop.permute.xlu0 %711
    %713 = vrot.lane.b32.xlu0 %v667, 32
    %v714 = vpop.permute.xlu0 %713
    %715 = vrot.lane.b32.xlu0 %v668, 32
    %v716 = vpop.permute.xlu0 %715
    %717 = vrot.lane.b32.xlu0 %v669, 32
    %v718 = vpop.permute.xlu0 %717
    %719 = vrot.lane.b32.xlu0 %v670, 32
    %v720 = vpop.permute.xlu0 %719
    %721 = vrot.lane.b32.xlu0 %v671, 32
    %v722 = vpop.permute.xlu0 %721
    %723 = vrot.lane.b32.xlu0 %v672, 32
    %v724 = vpop.permute.xlu0 %723
    %725 = vrot.lane.b32.xlu0 %v673, 32
    %v726 = vpop.permute.xlu0 %725
    %727 = vrot.lane.b32.xlu0 %v674, 32
    %v728 = vpop.permute.xlu0 %727
    %729 = vrot.lane.b32.xlu0 %v675, 32
    %v730 = vpop.permute.xlu0 %729
    %731 = vrot.lane.b32.xlu0 %v676, 32
    %v732 = vpop.permute.xlu0 %731
    %733 = vrot.lane.b32.xlu0 %v677, 32
    %v734 = vpop.permute.xlu0 %733
    %735 = vrot.lane.b32.xlu0 %v678, 32
    %v736 = vpop.permute.xlu0 %735
    %737 = vrot.lane.b32.xlu0 %v679, 32
    %v738 = vpop.permute.xlu0 %737
    %739 = vrot.lane.b32.xlu0 %v680, 32
    %v740 = vpop.permute.xlu0 %739
    %741 = vrot.lane.b32.xlu0 %v681, 32
    %v742 = vpop.permute.xlu0 %741
    %743 = vrot.lane.b32.xlu0 %v682, 32
    %v744 = vpop.permute.xlu0 %743
    %745 = vrot.lane.b32.xlu0 %v683, 32
    %v746 = vpop.permute.xlu0 %745
    %747 = vrot.lane.b32.xlu0 %v684, 32
    %v748 = vpop.permute.xlu0 %747
    %749 = vrot.lane.b32.xlu0 %v685, 32
    %v750 = vpop.permute.xlu0 %749
    %751 = vrot.lane.b32.xlu0 %v686, 32
    %v752 = vpop.permute.xlu0 %751
    %753 = vrot.lane.b32.xlu0 %v687, 32
    %v754 = vpop.permute.xlu0 %753
    %755 = vrot.lane.b32.xlu0 %v688, 32
    %v756 = vpop.permute.xlu0 %755
    %757 = vrot.lane.b32.xlu0 %v689, 32
    %v758 = vpop.permute.xlu0 %757
    %759 = vrot.lane.b32.xlu0 %v690, 32
    %v760 = vpop.permute.xlu0 %759
    %761 = vrot.lane.b32.xlu0 %v691, 32
    %v762 = vpop.permute.xlu0 %761
    %763 = vrot.lane.b32.xlu0 %v692, 32
    %v764 = vpop.permute.xlu0 %763
    %v765 = vmax.f32 %v657, %v694
    %v766 = vmax.f32 %v658, %v696
    %v767 = vmax.f32 %v659, %v698
    %v768 = vmax.f32 %v660, %v700
    %v769 = vmax.f32 %v661, %v702
    %v770 = vmax.f32 %v662, %v704
    %v771 = vmax.f32 %v663, %v706
    %v772 = vmax.f32 %v664, %v708
    %v773 = vmax.f32 %v665, %v710
    %v774 = vmax.f32 %v666, %v712
    %v775 = vmax.f32 %v667, %v714
    %v776 = vmax.f32 %v668, %v716
    %v777 = vmax.f32 %v669, %v718
    %v778 = vmax.f32 %v670, %v720
    %v779 = vmax.f32 %v671, %v722
    %v780 = vmax.f32 %v672, %v724
    %v781 = vmax.f32 %v673, %v726
    %v782 = vmax.f32 %v674, %v728
    %v783 = vmax.f32 %v675, %v730
    %v784 = vmax.f32 %v676, %v732
    %v785 = vmax.f32 %v677, %v734
    %v786 = vmax.f32 %v678, %v736
    %v787 = vmax.f32 %v679, %v738
    %v788 = vmax.f32 %v680, %v740
    %v789 = vmax.f32 %v681, %v742
    %v790 = vmax.f32 %v682, %v744
    %v791 = vmax.f32 %v683, %v746
    %v792 = vmax.f32 %v684, %v748
    %v793 = vmax.f32 %v685, %v750
    %v794 = vmax.f32 %v686, %v752
    %v795 = vmax.f32 %v687, %v754
    %v796 = vmax.f32 %v688, %v756
    %v797 = vmax.f32 %v689, %v758
    %v798 = vmax.f32 %v690, %v760
    %v799 = vmax.f32 %v691, %v762
    %v800 = vmax.f32 %v692, %v764
    %v837 = vcombine.high %v765, %v765
    %v839 = vunpack.c.l.s4 1983009808
    %v840 = vunpack.c.0.s8 %v839
    %v841 = vlaneseq
    %v842 = vshrl.u32 %v841, 7
    %v843 = vsub.s32 %v840, %v842
    %v844 = vrot.slane %v765, %v843
    %v846 = vunpack.c.l.s4 1983009808
    %v847 = vunpack.c.0.s8 %v846
    %v848 = vlaneseq
    %v849 = vshrl.u32 %v848, 7
    %v850 = vsub.s32 %v847, %v849
    %v851 = vrot.slane %v837, %v850
    %v852 = vcombine.high %v844, %v844
    %v853 = vcombine.high %v851, %v851
    %v854 = vcombine.high %v766, %v766
    %v856 = vunpack.c.l.s4 1983009808
    %v857 = vunpack.c.0.s8 %v856
    %v858 = vlaneseq
    %v859 = vshrl.u32 %v858, 7
    %v860 = vsub.s32 %v857, %v859
    %v861 = vrot.slane %v766, %v860
    %v863 = vunpack.c.l.s4 1983009808
    %v864 = vunpack.c.0.s8 %v863
    %v865 = vlaneseq
    %v866 = vshrl.u32 %v865, 7
    %v867 = vsub.s32 %v864, %v866
    %v868 = vrot.slane %v854, %v867
    %v869 = vcombine.high %v861, %v861
    %v870 = vcombine.high %v868, %v868
    %v871 = vcombine.high %v767, %v767
    %v873 = vunpack.c.l.s4 1983009808
    %v874 = vunpack.c.0.s8 %v873
    %v875 = vlaneseq
    %v876 = vshrl.u32 %v875, 7
    %v877 = vsub.s32 %v874, %v876
    %v878 = vrot.slane %v767, %v877
    %v880 = vunpack.c.l.s4 1983009808
    %v881 = vunpack.c.0.s8 %v880
    %v882 = vlaneseq
    %v883 = vshrl.u32 %v882, 7
    %v884 = vsub.s32 %v881, %v883
    %v885 = vrot.slane %v871, %v884
    %v886 = vcombine.high %v878, %v878
    %v887 = vcombine.high %v885, %v885
    %v888 = vcombine.high %v768, %v768
    %v890 = vunpack.c.l.s4 1983009808
    %v891 = vunpack.c.0.s8 %v890
    %v892 = vlaneseq
    %v893 = vshrl.u32 %v892, 7
    %v894 = vsub.s32 %v891, %v893
    %v895 = vrot.slane %v768, %v894
    %v897 = vunpack.c.l.s4 1983009808
    %v898 = vunpack.c.0.s8 %v897
    %v899 = vlaneseq
    %v900 = vshrl.u32 %v899, 7
    %v901 = vsub.s32 %v898, %v900
    %v902 = vrot.slane %v888, %v901
    %v903 = vcombine.high %v895, %v895
    %v904 = vcombine.high %v902, %v902
    %v905 = vcombine.high %v769, %v769
    %v907 = vunpack.c.l.s4 1983009808
    %v908 = vunpack.c.0.s8 %v907
    %v909 = vlaneseq
    %v910 = vshrl.u32 %v909, 7
    %v911 = vsub.s32 %v908, %v910
    %v912 = vrot.slane %v769, %v911
    %v914 = vunpack.c.l.s4 1983009808
    %v915 = vunpack.c.0.s8 %v914
    %v916 = vlaneseq
    %v917 = vshrl.u32 %v916, 7
    %v918 = vsub.s32 %v915, %v917
    %v919 = vrot.slane %v905, %v918
    %v920 = vcombine.high %v912, %v912
    %v921 = vcombine.high %v919, %v919
    %v922 = vcombine.high %v770, %v770
    %v924 = vunpack.c.l.s4 1983009808
    %v925 = vunpack.c.0.s8 %v924
    %v926 = vlaneseq
    %v927 = vshrl.u32 %v926, 7
    %v928 = vsub.s32 %v925, %v927
    %v929 = vrot.slane %v770, %v928
    %v931 = vunpack.c.l.s4 1983009808
    %v932 = vunpack.c.0.s8 %v931
    %v933 = vlaneseq
    %v934 = vshrl.u32 %v933, 7
    %v935 = vsub.s32 %v932, %v934
    %v936 = vrot.slane %v922, %v935
    %v937 = vcombine.high %v929, %v929
    %v938 = vcombine.high %v936, %v936
    %v939 = vcombine.high %v771, %v771
    %v941 = vunpack.c.l.s4 1983009808
    %v942 = vunpack.c.0.s8 %v941
    %v943 = vlaneseq
    %v944 = vshrl.u32 %v943, 7
    %v945 = vsub.s32 %v942, %v944
    %v946 = vrot.slane %v771, %v945
    %v948 = vunpack.c.l.s4 1983009808
    %v949 = vunpack.c.0.s8 %v948
    %v950 = vlaneseq
    %v951 = vshrl.u32 %v950, 7
    %v952 = vsub.s32 %v949, %v951
    %v953 = vrot.slane %v939, %v952
    %v954 = vcombine.high %v946, %v946
    %v955 = vcombine.high %v953, %v953
    %v956 = vcombine.high %v772, %v772
    %v958 = vunpack.c.l.s4 1983009808
    %v959 = vunpack.c.0.s8 %v958
    %v960 = vlaneseq
    %v961 = vshrl.u32 %v960, 7
    %v962 = vsub.s32 %v959, %v961
    %v963 = vrot.slane %v772, %v962
    %v965 = vunpack.c.l.s4 1983009808
    %v966 = vunpack.c.0.s8 %v965
    %v967 = vlaneseq
    %v968 = vshrl.u32 %v967, 7
    %v969 = vsub.s32 %v966, %v968
    %v970 = vrot.slane %v956, %v969
    %v971 = vcombine.high %v963, %v963
    %v972 = vcombine.high %v970, %v970
    %v973 = vcombine.high %v773, %v773
    %v975 = vunpack.c.l.s4 1983009808
    %v976 = vunpack.c.0.s8 %v975
    %v977 = vlaneseq
    %v978 = vshrl.u32 %v977, 7
    %v979 = vsub.s32 %v976, %v978
    %v980 = vrot.slane %v773, %v979
    %v982 = vunpack.c.l.s4 1983009808
    %v983 = vunpack.c.0.s8 %v982
    %v984 = vlaneseq
    %v985 = vshrl.u32 %v984, 7
    %v986 = vsub.s32 %v983, %v985
    %v987 = vrot.slane %v973, %v986
    %v988 = vcombine.high %v980, %v980
    %v989 = vcombine.high %v987, %v987
    %v990 = vcombine.high %v774, %v774
    %v992 = vunpack.c.l.s4 1983009808
    %v993 = vunpack.c.0.s8 %v992
    %v994 = vlaneseq
    %v995 = vshrl.u32 %v994, 7
    %v996 = vsub.s32 %v993, %v995
    %v997 = vrot.slane %v774, %v996
    %v999 = vunpack.c.l.s4 1983009808
    %v1000 = vunpack.c.0.s8 %v999
    %v1001 = vlaneseq
    %v1002 = vshrl.u32 %v1001, 7
    %v1003 = vsub.s32 %v1000, %v1002
    %v1004 = vrot.slane %v990, %v1003
    %v1005 = vcombine.high %v997, %v997
    %v1006 = vcombine.high %v1004, %v1004
    %v1007 = vcombine.high %v775, %v775
    %v1009 = vunpack.c.l.s4 1983009808
    %v1010 = vunpack.c.0.s8 %v1009
    %v1011 = vlaneseq
    %v1012 = vshrl.u32 %v1011, 7
    %v1013 = vsub.s32 %v1010, %v1012
    %v1014 = vrot.slane %v775, %v1013
    %v1016 = vunpack.c.l.s4 1983009808
    %v1017 = vunpack.c.0.s8 %v1016
    %v1018 = vlaneseq
    %v1019 = vshrl.u32 %v1018, 7
    %v1020 = vsub.s32 %v1017, %v1019
    %v1021 = vrot.slane %v1007, %v1020
    %v1022 = vcombine.high %v1014, %v1014
    %v1023 = vcombine.high %v1021, %v1021
    %v1024 = vcombine.high %v776, %v776
    %v1026 = vunpack.c.l.s4 1983009808
    %v1027 = vunpack.c.0.s8 %v1026
    %v1028 = vlaneseq
    %v1029 = vshrl.u32 %v1028, 7
    %v1030 = vsub.s32 %v1027, %v1029
    %v1031 = vrot.slane %v776, %v1030
    %v1033 = vunpack.c.l.s4 1983009808
    %v1034 = vunpack.c.0.s8 %v1033
    %v1035 = vlaneseq
    %v1036 = vshrl.u32 %v1035, 7
    %v1037 = vsub.s32 %v1034, %v1036
    %v1038 = vrot.slane %v1024, %v1037
    %v1039 = vcombine.high %v1031, %v1031
    %v1040 = vcombine.high %v1038, %v1038
    %v1041 = vcombine.high %v777, %v777
    %v1043 = vunpack.c.l.s4 1983009808
    %v1044 = vunpack.c.0.s8 %v1043
    %v1045 = vlaneseq
    %v1046 = vshrl.u32 %v1045, 7
    %v1047 = vsub.s32 %v1044, %v1046
    %v1048 = vrot.slane %v777, %v1047
    %v1050 = vunpack.c.l.s4 1983009808
    %v1051 = vunpack.c.0.s8 %v1050
    %v1052 = vlaneseq
    %v1053 = vshrl.u32 %v1052, 7
    %v1054 = vsub.s32 %v1051, %v1053
    %v1055 = vrot.slane %v1041, %v1054
    %v1056 = vcombine.high %v1048, %v1048
    %v1057 = vcombine.high %v1055, %v1055
    %v1058 = vcombine.high %v778, %v778
    %v1060 = vunpack.c.l.s4 1983009808
    %v1061 = vunpack.c.0.s8 %v1060
    %v1062 = vlaneseq
    %v1063 = vshrl.u32 %v1062, 7
    %v1064 = vsub.s32 %v1061, %v1063
    %v1065 = vrot.slane %v778, %v1064
    %v1067 = vunpack.c.l.s4 1983009808
    %v1068 = vunpack.c.0.s8 %v1067
    %v1069 = vlaneseq
    %v1070 = vshrl.u32 %v1069, 7
    %v1071 = vsub.s32 %v1068, %v1070
    %v1072 = vrot.slane %v1058, %v1071
    %v1073 = vcombine.high %v1065, %v1065
    %v1074 = vcombine.high %v1072, %v1072
    %v1075 = vcombine.high %v779, %v779
    %v1077 = vunpack.c.l.s4 1983009808
    %v1078 = vunpack.c.0.s8 %v1077
    %v1079 = vlaneseq
    %v1080 = vshrl.u32 %v1079, 7
    %v1081 = vsub.s32 %v1078, %v1080
    %v1082 = vrot.slane %v779, %v1081
    %v1084 = vunpack.c.l.s4 1983009808
    %v1085 = vunpack.c.0.s8 %v1084
    %v1086 = vlaneseq
    %v1087 = vshrl.u32 %v1086, 7
    %v1088 = vsub.s32 %v1085, %v1087
    %v1089 = vrot.slane %v1075, %v1088
    %v1090 = vcombine.high %v1082, %v1082
    %v1091 = vcombine.high %v1089, %v1089
    %v1092 = vcombine.high %v780, %v780
    %v1094 = vunpack.c.l.s4 1983009808
    %v1095 = vunpack.c.0.s8 %v1094
    %v1096 = vlaneseq
    %v1097 = vshrl.u32 %v1096, 7
    %v1098 = vsub.s32 %v1095, %v1097
    %v1099 = vrot.slane %v780, %v1098
    %v1101 = vunpack.c.l.s4 1983009808
    %v1102 = vunpack.c.0.s8 %v1101
    %v1103 = vlaneseq
    %v1104 = vshrl.u32 %v1103, 7
    %v1105 = vsub.s32 %v1102, %v1104
    %v1106 = vrot.slane %v1092, %v1105
    %v1107 = vcombine.high %v1099, %v1099
    %v1108 = vcombine.high %v1106, %v1106
    %v1109 = vcombine.high %v781, %v781
    %v1111 = vunpack.c.l.s4 1983009808
    %v1112 = vunpack.c.0.s8 %v1111
    %v1113 = vlaneseq
    %v1114 = vshrl.u32 %v1113, 7
    %v1115 = vsub.s32 %v1112, %v1114
    %v1116 = vrot.slane %v781, %v1115
    %v1118 = vunpack.c.l.s4 1983009808
    %v1119 = vunpack.c.0.s8 %v1118
    %v1120 = vlaneseq
    %v1121 = vshrl.u32 %v1120, 7
    %v1122 = vsub.s32 %v1119, %v1121
    %v1123 = vrot.slane %v1109, %v1122
    %v1124 = vcombine.high %v1116, %v1116
    %v1125 = vcombine.high %v1123, %v1123
    %v1126 = vcombine.high %v782, %v782
    %v1128 = vunpack.c.l.s4 1983009808
    %v1129 = vunpack.c.0.s8 %v1128
    %v1130 = vlaneseq
    %v1131 = vshrl.u32 %v1130, 7
    %v1132 = vsub.s32 %v1129, %v1131
    %v1133 = vrot.slane %v782, %v1132
    %v1135 = vunpack.c.l.s4 1983009808
    %v1136 = vunpack.c.0.s8 %v1135
    %v1137 = vlaneseq
    %v1138 = vshrl.u32 %v1137, 7
    %v1139 = vsub.s32 %v1136, %v1138
    %v1140 = vrot.slane %v1126, %v1139
    %v1141 = vcombine.high %v1133, %v1133
    %v1142 = vcombine.high %v1140, %v1140
    %v1143 = vcombine.high %v783, %v783
    %v1145 = vunpack.c.l.s4 1983009808
    %v1146 = vunpack.c.0.s8 %v1145
    %v1147 = vlaneseq
    %v1148 = vshrl.u32 %v1147, 7
    %v1149 = vsub.s32 %v1146, %v1148
    %v1150 = vrot.slane %v783, %v1149
    %v1152 = vunpack.c.l.s4 1983009808
    %v1153 = vunpack.c.0.s8 %v1152
    %v1154 = vlaneseq
    %v1155 = vshrl.u32 %v1154, 7
    %v1156 = vsub.s32 %v1153, %v1155
    %v1157 = vrot.slane %v1143, %v1156
    %v1158 = vcombine.high %v1150, %v1150
    %v1159 = vcombine.high %v1157, %v1157
    %v1160 = vcombine.high %v784, %v784
    %v1162 = vunpack.c.l.s4 1983009808
    %v1163 = vunpack.c.0.s8 %v1162
    %v1164 = vlaneseq
    %v1165 = vshrl.u32 %v1164, 7
    %v1166 = vsub.s32 %v1163, %v1165
    %v1167 = vrot.slane %v784, %v1166
    %v1169 = vunpack.c.l.s4 1983009808
    %v1170 = vunpack.c.0.s8 %v1169
    %v1171 = vlaneseq
    %v1172 = vshrl.u32 %v1171, 7
    %v1173 = vsub.s32 %v1170, %v1172
    %v1174 = vrot.slane %v1160, %v1173
    %v1175 = vcombine.high %v1167, %v1167
    %v1176 = vcombine.high %v1174, %v1174
    %v1177 = vcombine.high %v785, %v785
    %v1179 = vunpack.c.l.s4 1983009808
    %v1180 = vunpack.c.0.s8 %v1179
    %v1181 = vlaneseq
    %v1182 = vshrl.u32 %v1181, 7
    %v1183 = vsub.s32 %v1180, %v1182
    %v1184 = vrot.slane %v785, %v1183
    %v1186 = vunpack.c.l.s4 1983009808
    %v1187 = vunpack.c.0.s8 %v1186
    %v1188 = vlaneseq
    %v1189 = vshrl.u32 %v1188, 7
    %v1190 = vsub.s32 %v1187, %v1189
    %v1191 = vrot.slane %v1177, %v1190
    %v1192 = vcombine.high %v1184, %v1184
    %v1193 = vcombine.high %v1191, %v1191
    %v1194 = vcombine.high %v786, %v786
    %v1196 = vunpack.c.l.s4 1983009808
    %v1197 = vunpack.c.0.s8 %v1196
    %v1198 = vlaneseq
    %v1199 = vshrl.u32 %v1198, 7
    %v1200 = vsub.s32 %v1197, %v1199
    %v1201 = vrot.slane %v786, %v1200
    %v1203 = vunpack.c.l.s4 1983009808
    %v1204 = vunpack.c.0.s8 %v1203
    %v1205 = vlaneseq
    %v1206 = vshrl.u32 %v1205, 7
    %v1207 = vsub.s32 %v1204, %v1206
    %v1208 = vrot.slane %v1194, %v1207
    %v1209 = vcombine.high %v1201, %v1201
    %v1210 = vcombine.high %v1208, %v1208
    %v1211 = vcombine.high %v787, %v787
    %v1213 = vunpack.c.l.s4 1983009808
    %v1214 = vunpack.c.0.s8 %v1213
    %v1215 = vlaneseq
    %v1216 = vshrl.u32 %v1215, 7
    %v1217 = vsub.s32 %v1214, %v1216
    %v1218 = vrot.slane %v787, %v1217
    %v1220 = vunpack.c.l.s4 1983009808
    %v1221 = vunpack.c.0.s8 %v1220
    %v1222 = vlaneseq
    %v1223 = vshrl.u32 %v1222, 7
    %v1224 = vsub.s32 %v1221, %v1223
    %v1225 = vrot.slane %v1211, %v1224
    %v1226 = vcombine.high %v1218, %v1218
    %v1227 = vcombine.high %v1225, %v1225
    %v1228 = vcombine.high %v788, %v788
    %v1230 = vunpack.c.l.s4 1983009808
    %v1231 = vunpack.c.0.s8 %v1230
    %v1232 = vlaneseq
    %v1233 = vshrl.u32 %v1232, 7
    %v1234 = vsub.s32 %v1231, %v1233
    %v1235 = vrot.slane %v788, %v1234
    %v1237 = vunpack.c.l.s4 1983009808
    %v1238 = vunpack.c.0.s8 %v1237
    %v1239 = vlaneseq
    %v1240 = vshrl.u32 %v1239, 7
    %v1241 = vsub.s32 %v1238, %v1240
    %v1242 = vrot.slane %v1228, %v1241
    %v1243 = vcombine.high %v1235, %v1235
    %v1244 = vcombine.high %v1242, %v1242
    %v1245 = vcombine.high %v789, %v789
    %v1247 = vunpack.c.l.s4 1983009808
    %v1248 = vunpack.c.0.s8 %v1247
    %v1249 = vlaneseq
    %v1250 = vshrl.u32 %v1249, 7
    %v1251 = vsub.s32 %v1248, %v1250
    %v1252 = vrot.slane %v789, %v1251
    %v1254 = vunpack.c.l.s4 1983009808
    %v1255 = vunpack.c.0.s8 %v1254
    %v1256 = vlaneseq
    %v1257 = vshrl.u32 %v1256, 7
    %v1258 = vsub.s32 %v1255, %v1257
    %v1259 = vrot.slane %v1245, %v1258
    %v1260 = vcombine.high %v1252, %v1252
    %v1261 = vcombine.high %v1259, %v1259
    %v1262 = vcombine.high %v790, %v790
    %v1264 = vunpack.c.l.s4 1983009808
    %v1265 = vunpack.c.0.s8 %v1264
    %v1266 = vlaneseq
    %v1267 = vshrl.u32 %v1266, 7
    %v1268 = vsub.s32 %v1265, %v1267
    %v1269 = vrot.slane %v790, %v1268
    %v1271 = vunpack.c.l.s4 1983009808
    %v1272 = vunpack.c.0.s8 %v1271
    %v1273 = vlaneseq
    %v1274 = vshrl.u32 %v1273, 7
    %v1275 = vsub.s32 %v1272, %v1274
    %v1276 = vrot.slane %v1262, %v1275
    %v1277 = vcombine.high %v1269, %v1269
    %v1278 = vcombine.high %v1276, %v1276
    %v1279 = vcombine.high %v791, %v791
    %v1281 = vunpack.c.l.s4 1983009808
    %v1282 = vunpack.c.0.s8 %v1281
    %v1283 = vlaneseq
    %v1284 = vshrl.u32 %v1283, 7
    %v1285 = vsub.s32 %v1282, %v1284
    %v1286 = vrot.slane %v791, %v1285
    %v1288 = vunpack.c.l.s4 1983009808
    %v1289 = vunpack.c.0.s8 %v1288
    %v1290 = vlaneseq
    %v1291 = vshrl.u32 %v1290, 7
    %v1292 = vsub.s32 %v1289, %v1291
    %v1293 = vrot.slane %v1279, %v1292
    %v1294 = vcombine.high %v1286, %v1286
    %v1295 = vcombine.high %v1293, %v1293
    %v1296 = vcombine.high %v792, %v792
    %v1298 = vunpack.c.l.s4 1983009808
    %v1299 = vunpack.c.0.s8 %v1298
    %v1300 = vlaneseq
    %v1301 = vshrl.u32 %v1300, 7
    %v1302 = vsub.s32 %v1299, %v1301
    %v1303 = vrot.slane %v792, %v1302
    %v1305 = vunpack.c.l.s4 1983009808
    %v1306 = vunpack.c.0.s8 %v1305
    %v1307 = vlaneseq
    %v1308 = vshrl.u32 %v1307, 7
    %v1309 = vsub.s32 %v1306, %v1308
    %v1310 = vrot.slane %v1296, %v1309
    %v1311 = vcombine.high %v1303, %v1303
    %v1312 = vcombine.high %v1310, %v1310
    %v1313 = vcombine.high %v793, %v793
    %v1315 = vunpack.c.l.s4 1983009808
    %v1316 = vunpack.c.0.s8 %v1315
    %v1317 = vlaneseq
    %v1318 = vshrl.u32 %v1317, 7
    %v1319 = vsub.s32 %v1316, %v1318
    %v1320 = vrot.slane %v793, %v1319
    %v1322 = vunpack.c.l.s4 1983009808
    %v1323 = vunpack.c.0.s8 %v1322
    %v1324 = vlaneseq
    %v1325 = vshrl.u32 %v1324, 7
    %v1326 = vsub.s32 %v1323, %v1325
    %v1327 = vrot.slane %v1313, %v1326
    %v1328 = vcombine.high %v1320, %v1320
    %v1329 = vcombine.high %v1327, %v1327
    %v1330 = vcombine.high %v794, %v794
    %v1332 = vunpack.c.l.s4 1983009808
    %v1333 = vunpack.c.0.s8 %v1332
    %v1334 = vlaneseq
    %v1335 = vshrl.u32 %v1334, 7
    %v1336 = vsub.s32 %v1333, %v1335
    %v1337 = vrot.slane %v794, %v1336
    %v1339 = vunpack.c.l.s4 1983009808
    %v1340 = vunpack.c.0.s8 %v1339
    %v1341 = vlaneseq
    %v1342 = vshrl.u32 %v1341, 7
    %v1343 = vsub.s32 %v1340, %v1342
    %v1344 = vrot.slane %v1330, %v1343
    %v1345 = vcombine.high %v1337, %v1337
    %v1346 = vcombine.high %v1344, %v1344
    %v1347 = vcombine.high %v795, %v795
    %v1349 = vunpack.c.l.s4 1983009808
    %v1350 = vunpack.c.0.s8 %v1349
    %v1351 = vlaneseq
    %v1352 = vshrl.u32 %v1351, 7
    %v1353 = vsub.s32 %v1350, %v1352
    %v1354 = vrot.slane %v795, %v1353
    %v1356 = vunpack.c.l.s4 1983009808
    %v1357 = vunpack.c.0.s8 %v1356
    %v1358 = vlaneseq
    %v1359 = vshrl.u32 %v1358, 7
    %v1360 = vsub.s32 %v1357, %v1359
    %v1361 = vrot.slane %v1347, %v1360
    %v1362 = vcombine.high %v1354, %v1354
    %v1363 = vcombine.high %v1361, %v1361
    %v1364 = vcombine.high %v796, %v796
    %v1366 = vunpack.c.l.s4 1983009808
    %v1367 = vunpack.c.0.s8 %v1366
    %v1368 = vlaneseq
    %v1369 = vshrl.u32 %v1368, 7
    %v1370 = vsub.s32 %v1367, %v1369
    %v1371 = vrot.slane %v796, %v1370
    %v1373 = vunpack.c.l.s4 1983009808
    %v1374 = vunpack.c.0.s8 %v1373
    %v1375 = vlaneseq
    %v1376 = vshrl.u32 %v1375, 7
    %v1377 = vsub.s32 %v1374, %v1376
    %v1378 = vrot.slane %v1364, %v1377
    %v1379 = vcombine.high %v1371, %v1371
    %v1380 = vcombine.high %v1378, %v1378
    %v1381 = vcombine.high %v797, %v797
    %v1383 = vunpack.c.l.s4 1983009808
    %v1384 = vunpack.c.0.s8 %v1383
    %v1385 = vlaneseq
    %v1386 = vshrl.u32 %v1385, 7
    %v1387 = vsub.s32 %v1384, %v1386
    %v1388 = vrot.slane %v797, %v1387
    %v1390 = vunpack.c.l.s4 1983009808
    %v1391 = vunpack.c.0.s8 %v1390
    %v1392 = vlaneseq
    %v1393 = vshrl.u32 %v1392, 7
    %v1394 = vsub.s32 %v1391, %v1393
    %v1395 = vrot.slane %v1381, %v1394
    %v1396 = vcombine.high %v1388, %v1388
    %v1397 = vcombine.high %v1395, %v1395
    %v1398 = vcombine.high %v798, %v798
    %v1400 = vunpack.c.l.s4 1983009808
    %v1401 = vunpack.c.0.s8 %v1400
    %v1402 = vlaneseq
    %v1403 = vshrl.u32 %v1402, 7
    %v1404 = vsub.s32 %v1401, %v1403
    %v1405 = vrot.slane %v798, %v1404
    %v1407 = vunpack.c.l.s4 1983009808
    %v1408 = vunpack.c.0.s8 %v1407
    %v1409 = vlaneseq
    %v1410 = vshrl.u32 %v1409, 7
    %v1411 = vsub.s32 %v1408, %v1410
    %v1412 = vrot.slane %v1398, %v1411
    %v1413 = vcombine.high %v1405, %v1405
    %v1414 = vcombine.high %v1412, %v1412
    %v1415 = vcombine.high %v799, %v799
    %v1417 = vunpack.c.l.s4 1983009808
    %v1418 = vunpack.c.0.s8 %v1417
    %v1419 = vlaneseq
    %v1420 = vshrl.u32 %v1419, 7
    %v1421 = vsub.s32 %v1418, %v1420
    %v1422 = vrot.slane %v799, %v1421
    %v1424 = vunpack.c.l.s4 1983009808
    %v1425 = vunpack.c.0.s8 %v1424
    %v1426 = vlaneseq
    %v1427 = vshrl.u32 %v1426, 7
    %v1428 = vsub.s32 %v1425, %v1427
    %v1429 = vrot.slane %v1415, %v1428
    %v1430 = vcombine.high %v1422, %v1422
    %v1431 = vcombine.high %v1429, %v1429
    %v1432 = vcombine.high %v800, %v800
    %v1434 = vunpack.c.l.s4 1983009808
    %v1435 = vunpack.c.0.s8 %v1434
    %v1436 = vlaneseq
    %v1437 = vshrl.u32 %v1436, 7
    %v1438 = vsub.s32 %v1435, %v1437
    %v1439 = vrot.slane %v800, %v1438
    %v1441 = vunpack.c.l.s4 1983009808
    %v1442 = vunpack.c.0.s8 %v1441
    %v1443 = vlaneseq
    %v1444 = vshrl.u32 %v1443, 7
    %v1445 = vsub.s32 %v1442, %v1444
    %v1446 = vrot.slane %v1432, %v1445
    %v1447 = vcombine.high %v1439, %v1439
    %v1448 = vcombine.high %v1446, %v1446
    %v1449 = vld [vmem:[#allocation8] sm:$0xff]
    %v1450 = vld [vmem:[#allocation8 + $0x8] sm:$0xff]
    %v1451 = vld [vmem:[#allocation8 + $0x10] sm:$0xff]
    %v1452 = vld [vmem:[#allocation8 + $0x18] sm:$0xff]
    %v1453 = vld [vmem:[#allocation8 + $0x20] sm:$0xff]
    %v1454 = vld [vmem:[#allocation8 + $0x28] sm:$0xff]
    %v1455 = vld [vmem:[#allocation8 + $0x30] sm:$0xff]
    %v1456 = vld [vmem:[#allocation8 + $0x38] sm:$0xff]
    %v1457 = vld [vmem:[#allocation8 + $0x40] sm:$0xff]
    %v1458 = vld [vmem:[#allocation8 + $0x48] sm:$0xff]
    %v1459 = vld [vmem:[#allocation8 + $0x50] sm:$0xff]
    %v1460 = vld [vmem:[#allocation8 + $0x58] sm:$0xff]
    %v1461 = vld [vmem:[#allocation8 + $0x60] sm:$0xff]
    %v1462 = vld [vmem:[#allocation8 + $0x68] sm:$0xff]
    %v1463 = vld [vmem:[#allocation8 + $0x70] sm:$0xff]
    %v1464 = vld [vmem:[#allocation8 + $0x78] sm:$0xff]
    %vm1465 = vcmask 1040384
    %vm1466 = vcmask 1042434
    %vm1467 = vmor %vm1465, %vm1466
    %vm1468 = vcmask 1044484
    %vm1469 = vmor %vm1467, %vm1468
    %vm1470 = vcmask 1046534
    %vm1471 = vmor %vm1469, %vm1470
    %v1472 = vrot.slane %v844, 7
    %v1473 = vrot.slane %v1472, 2
    %v1474 = vrot.slane %v852, 7
    %v1475 = vsel %vm1471, %v1473, %v1474
    %v1476 = vrot.slane %v1474, 2
    %v1477 = vrot.slane %v851, 7
    %v1478 = vsel %vm1471, %v1476, %v1477
    %v1479 = vrot.slane %v853, 7
    %v1480 = vrot.slane %v1479, 2
    %v1481 = vrot.slane %v861, 7
    %v1482 = vsel %vm1471, %v1480, %v1481
    %v1483 = vrot.slane %v1481, 2
    %v1484 = vrot.slane %v869, 7
    %v1485 = vsel %vm1471, %v1483, %v1484
    %v1486 = vrot.slane %v868, 7
    %v1487 = vrot.slane %v1486, 2
    %v1488 = vrot.slane %v870, 7
    %v1489 = vsel %vm1471, %v1487, %v1488
    %v1490 = vrot.slane %v1488, 2
    %v1491 = vrot.slane %v878, 7
    %v1492 = vsel %vm1471, %v1490, %v1491
    %v1493 = vrot.slane %v886, 7
    %v1494 = vrot.slane %v1493, 2
    %v1495 = vrot.slane %v885, 7
    %v1496 = vsel %vm1471, %v1494, %v1495
    %v1497 = vrot.slane %v1495, 2
    %v1498 = vrot.slane %v887, 7
    %v1499 = vsel %vm1471, %v1497, %v1498
    %v1500 = vrot.slane %v919, 7
    %v1501 = vrot.slane %v1500, 2
    %v1502 = vrot.slane %v921, 7
    %v1503 = vsel %vm1471, %v1501, %v1502
    %v1504 = vrot.slane %v1502, 2
    %v1505 = vrot.slane %v929, 7
    %v1506 = vsel %vm1471, %v1504, %v1505
    %v1507 = vrot.slane %v937, 7
    %v1508 = vrot.slane %v1507, 2
    %v1509 = vrot.slane %v936, 7
    %v1510 = vsel %vm1471, %v1508, %v1509
    %v1511 = vrot.slane %v1509, 2
    %v1512 = vrot.slane %v938, 7
    %v1513 = vsel %vm1471, %v1511, %v1512
    %v1514 = vrot.slane %v946, 7
    %v1515 = vrot.slane %v1514, 2
    %v1516 = vrot.slane %v954, 7
    %v1517 = vsel %vm1471, %v1515, %v1516
    %v1518 = vrot.slane %v1516, 2
    %v1519 = vrot.slane %v953, 7
    %v1520 = vsel %vm1471, %v1518, %v1519
    %v1521 = vrot.slane %v955, 7
    %v1522 = vrot.slane %v1521, 2
    %v1523 = vrot.slane %v963, 7
    %v1524 = vsel %vm1471, %v1522, %v1523
    %v1525 = vrot.slane %v1523, 2
    %v1526 = vrot.slane %v971, 7
    %v1527 = vsel %vm1471, %v1525, %v1526
    %v1528 = vrot.slane %v997, 7
    %v1529 = vrot.slane %v1528, 2
    %v1530 = vrot.slane %v1005, 7
    %v1531 = vsel %vm1471, %v1529, %v1530
    %v1532 = vrot.slane %v1530, 2
    %v1533 = vrot.slane %v1004, 7
    %v1534 = vsel %vm1471, %v1532, %v1533
    %v1535 = vrot.slane %v1006, 7
    %v1536 = vrot.slane %v1535, 2
    %v1537 = vrot.slane %v1014, 7
    %v1538 = vsel %vm1471, %v1536, %v1537
    %v1539 = vrot.slane %v1537, 2
    %v1540 = vrot.slane %v1022, 7
    %v1541 = vsel %vm1471, %v1539, %v1540
    %v1542 = vrot.slane %v1021, 7
    %v1543 = vrot.slane %v1542, 2
    %v1544 = vrot.slane %v1023, 7
    %v1545 = vsel %vm1471, %v1543, %v1544
    %v1546 = vrot.slane %v1544, 2
    %v1547 = vrot.slane %v1031, 7
    %v1548 = vsel %vm1471, %v1546, %v1547
    %v1549 = vrot.slane %v1039, 7
    %v1550 = vrot.slane %v1549, 2
    %v1551 = vrot.slane %v1038, 7
    %v1552 = vsel %vm1471, %v1550, %v1551
    %v1553 = vrot.slane %v1551, 2
    %v1554 = vrot.slane %v1040, 7
    %v1555 = vsel %vm1471, %v1553, %v1554
    %v1556 = vrot.slane %v1072, 7
    %v1557 = vrot.slane %v1556, 2
    %v1558 = vrot.slane %v1074, 7
    %v1559 = vsel %vm1471, %v1557, %v1558
    %v1560 = vrot.slane %v1558, 2
    %v1561 = vrot.slane %v1082, 7
    %v1562 = vsel %vm1471, %v1560, %v1561
    %v1563 = vrot.slane %v1090, 7
    %v1564 = vrot.slane %v1563, 2
    %v1565 = vrot.slane %v1089, 7
    %v1566 = vsel %vm1471, %v1564, %v1565
    %v1567 = vrot.slane %v1565, 2
    %v1568 = vrot.slane %v1091, 7
    %v1569 = vsel %vm1471, %v1567, %v1568
    %v1570 = vrot.slane %v1099, 7
    %v1571 = vrot.slane %v1570, 2
    %v1572 = vrot.slane %v1107, 7
    %v1573 = vsel %vm1471, %v1571, %v1572
    %v1574 = vrot.slane %v1572, 2
    %v1575 = vrot.slane %v1106, 7
    %v1576 = vsel %vm1471, %v1574, %v1575
    %v1577 = vrot.slane %v1108, 7
    %v1578 = vrot.slane %v1577, 2
    %v1579 = vrot.slane %v1116, 7
    %v1580 = vsel %vm1471, %v1578, %v1579
    %v1581 = vrot.slane %v1579, 2
    %v1582 = vrot.slane %v1124, 7
    %v1583 = vsel %vm1471, %v1581, %v1582
    %v1584 = vrot.slane %v1150, 7
    %v1585 = vrot.slane %v1584, 2
    %v1586 = vrot.slane %v1158, 7
    %v1587 = vsel %vm1471, %v1585, %v1586
    %v1588 = vrot.slane %v1586, 2
    %v1589 = vrot.slane %v1157, 7
    %v1590 = vsel %vm1471, %v1588, %v1589
    %v1591 = vrot.slane %v1159, 7
    %v1592 = vrot.slane %v1591, 2
    %v1593 = vrot.slane %v1167, 7
    %v1594 = vsel %vm1471, %v1592, %v1593
    %v1595 = vrot.slane %v1593, 2
    %v1596 = vrot.slane %v1175, 7
    %v1597 = vsel %vm1471, %v1595, %v1596
    %v1598 = vrot.slane %v1174, 7
    %v1599 = vrot.slane %v1598, 2
    %v1600 = vrot.slane %v1176, 7
    %v1601 = vsel %vm1471, %v1599, %v1600
    %v1602 = vrot.slane %v1600, 2
    %v1603 = vrot.slane %v1184, 7
    %v1604 = vsel %vm1471, %v1602, %v1603
    %v1605 = vrot.slane %v1192, 7
    %v1606 = vrot.slane %v1605, 2
    %v1607 = vrot.slane %v1191, 7
    %v1608 = vsel %vm1471, %v1606, %v1607
    %v1609 = vrot.slane %v1607, 2
    %v1610 = vrot.slane %v1193, 7
    %v1611 = vsel %vm1471, %v1609, %v1610
    %v1612 = vrot.slane %v1225, 7
    %v1613 = vrot.slane %v1612, 2
    %v1614 = vrot.slane %v1227, 7
    %v1615 = vsel %vm1471, %v1613, %v1614
    %v1616 = vrot.slane %v1614, 2
    %v1617 = vrot.slane %v1235, 7
    %v1618 = vsel %vm1471, %v1616, %v1617
    %v1619 = vrot.slane %v1243, 7
    %v1620 = vrot.slane %v1619, 2
    %v1621 = vrot.slane %v1242, 7
    %v1622 = vsel %vm1471, %v1620, %v1621
    %v1623 = vrot.slane %v1621, 2
    %v1624 = vrot.slane %v1244, 7
    %v1625 = vsel %vm1471, %v1623, %v1624
    %v1626 = vrot.slane %v1252, 7
    %v1627 = vrot.slane %v1626, 2
    %v1628 = vrot.slane %v1260, 7
    %v1629 = vsel %vm1471, %v1627, %v1628
    %v1630 = vrot.slane %v1628, 2
    %v1631 = vrot.slane %v1259, 7
    %v1632 = vsel %vm1471, %v1630, %v1631
    %v1633 = vrot.slane %v1261, 7
    %v1634 = vrot.slane %v1633, 2
    %v1635 = vrot.slane %v1269, 7
    %v1636 = vsel %vm1471, %v1634, %v1635
    %v1637 = vrot.slane %v1635, 2
    %v1638 = vrot.slane %v1277, 7
    %v1639 = vsel %vm1471, %v1637, %v1638
    %v1640 = vrot.slane %v1303, 7
    %v1641 = vrot.slane %v1640, 2
    %v1642 = vrot.slane %v1311, 7
    %v1643 = vsel %vm1471, %v1641, %v1642
    %v1644 = vrot.slane %v1642, 2
    %v1645 = vrot.slane %v1310, 7
    %v1646 = vsel %vm1471, %v1644, %v1645
    %v1647 = vrot.slane %v1312, 7
    %v1648 = vrot.slane %v1647, 2
    %v1649 = vrot.slane %v1320, 7
    %v1650 = vsel %vm1471, %v1648, %v1649
    %v1651 = vrot.slane %v1649, 2
    %v1652 = vrot.slane %v1328, 7
    %v1653 = vsel %vm1471, %v1651, %v1652
    %v1654 = vrot.slane %v1327, 7
    %v1655 = vrot.slane %v1654, 2
    %v1656 = vrot.slane %v1329, 7
    %v1657 = vsel %vm1471, %v1655, %v1656
    %v1658 = vrot.slane %v1656, 2
    %v1659 = vrot.slane %v1337, 7
    %v1660 = vsel %vm1471, %v1658, %v1659
    %v1661 = vrot.slane %v1345, 7
    %v1662 = vrot.slane %v1661, 2
    %v1663 = vrot.slane %v1344, 7
    %v1664 = vsel %vm1471, %v1662, %v1663
    %v1665 = vrot.slane %v1663, 2
    %v1666 = vrot.slane %v1346, 7
    %v1667 = vsel %vm1471, %v1665, %v1666
    %v1668 = vrot.slane %v1378, 7
    %v1669 = vrot.slane %v1668, 2
    %v1670 = vrot.slane %v1380, 7
    %v1671 = vsel %vm1471, %v1669, %v1670
    %v1672 = vrot.slane %v1670, 2
    %v1673 = vrot.slane %v1388, 7
    %v1674 = vsel %vm1471, %v1672, %v1673
    %v1675 = vrot.slane %v1396, 7
    %v1676 = vrot.slane %v1675, 2
    %v1677 = vrot.slane %v1395, 7
    %v1678 = vsel %vm1471, %v1676, %v1677
    %v1679 = vrot.slane %v1677, 2
    %v1680 = vrot.slane %v1397, 7
    %v1681 = vsel %vm1471, %v1679, %v1680
    %v1682 = vrot.slane %v1405, 7
    %v1683 = vrot.slane %v1682, 2
    %v1684 = vrot.slane %v1413, 7
    %v1685 = vsel %vm1471, %v1683, %v1684
    %v1686 = vrot.slane %v1684, 2
    %v1687 = vrot.slane %v1412, 7
    %v1688 = vsel %vm1471, %v1686, %v1687
    %v1689 = vrot.slane %v1414, 7
    %v1690 = vrot.slane %v1689, 2
    %v1691 = vrot.slane %v1422, 7
    %v1692 = vsel %vm1471, %v1690, %v1691
    %v1693 = vrot.slane %v1691, 2
    %v1694 = vrot.slane %v1430, 7
    %v1695 = vsel %vm1471, %v1693, %v1694
    %s1696 = scalar_lea.vmem [#allocation8], 128
    %v1697 = vld [vmem:[%s1696] sm:$0xff]
    %v1698 = vld [vmem:[%s1696 + $0x8] sm:$0xff]
    %v1699 = vld [vmem:[%s1696 + $0x10] sm:$0xff]
    %v1700 = vld [vmem:[%s1696 + $0x18] sm:$0xff]
    %v1701 = vld [vmem:[%s1696 + $0x20] sm:$0xff]
    %v1702 = vld [vmem:[%s1696 + $0x28] sm:$0xff]
    %v1703 = vld [vmem:[%s1696 + $0x30] sm:$0xff]
    %v1704 = vld [vmem:[%s1696 + $0x38] sm:$0xff]
    %v1705 = vld [vmem:[%s1696 + $0x40] sm:$0xff]
    %v1706 = vld [vmem:[%s1696 + $0x48] sm:$0xff]
    %v1707 = vld [vmem:[%s1696 + $0x50] sm:$0xff]
    %v1708 = vld [vmem:[%s1696 + $0x58] sm:$0xff]
    %v1709 = vld [vmem:[%s1696 + $0x60] sm:$0xff]
    %v1710 = vld [vmem:[%s1696 + $0x68] sm:$0xff]
    %v1711 = vld [vmem:[%s1696 + $0x70] sm:$0xff]
    %v1712 = vld [vmem:[%s1696 + $0x78] sm:$0xff]
    %v1713 = vcombine.low %v1475, %v1478
    %v1714 = vcombine.low %v1482, %v1485
    %v1716 = vunpack.c.l.s4 1983009808
    %v1717 = vunpack.c.0.s8 %v1716
    %v1718 = vlaneseq
    %v1719 = vshrl.u32 %v1718, 7
    %v1720 = vsub.s32 %v1717, %v1719
    %v1721 = vrot.slane %v1713, %v1720
    %v1723 = vunpack.c.l.s4 1983009808
    %v1724 = vunpack.c.0.s8 %v1723
    %v1725 = vlaneseq
    %v1726 = vshrl.u32 %v1725, 7
    %v1727 = vsub.s32 %v1724, %v1726
    %v1728 = vrot.slane %v1714, %v1727
    %v1729 = vcombine.low %v1721, %v1728
    %v1730 = vcombine.low %v1489, %v1492
    %v1731 = vcombine.low %v1496, %v1499
    %v1733 = vunpack.c.l.s4 1983009808
    %v1734 = vunpack.c.0.s8 %v1733
    %v1735 = vlaneseq
    %v1736 = vshrl.u32 %v1735, 7
    %v1737 = vsub.s32 %v1734, %v1736
    %v1738 = vrot.slane %v1730, %v1737
    %v1740 = vunpack.c.l.s4 1983009808
    %v1741 = vunpack.c.0.s8 %v1740
    %v1742 = vlaneseq
    %v1743 = vshrl.u32 %v1742, 7
    %v1744 = vsub.s32 %v1741, %v1743
    %v1745 = vrot.slane %v1731, %v1744
    %v1746 = vcombine.low %v1738, %v1745
    %v1747 = vcombine.low %v1503, %v1506
    %v1748 = vcombine.low %v1510, %v1513
    %v1750 = vunpack.c.l.s4 1983009808
    %v1751 = vunpack.c.0.s8 %v1750
    %v1752 = vlaneseq
    %v1753 = vshrl.u32 %v1752, 7
    %v1754 = vsub.s32 %v1751, %v1753
    %v1755 = vrot.slane %v1747, %v1754
    %v1757 = vunpack.c.l.s4 1983009808
    %v1758 = vunpack.c.0.s8 %v1757
    %v1759 = vlaneseq
    %v1760 = vshrl.u32 %v1759, 7
    %v1761 = vsub.s32 %v1758, %v1760
    %v1762 = vrot.slane %v1748, %v1761
    %v1763 = vcombine.low %v1755, %v1762
    %v1764 = vcombine.low %v1517, %v1520
    %v1765 = vcombine.low %v1524, %v1527
    %v1767 = vunpack.c.l.s4 1983009808
    %v1768 = vunpack.c.0.s8 %v1767
    %v1769 = vlaneseq
    %v1770 = vshrl.u32 %v1769, 7
    %v1771 = vsub.s32 %v1768, %v1770
    %v1772 = vrot.slane %v1764, %v1771
    %v1774 = vunpack.c.l.s4 1983009808
    %v1775 = vunpack.c.0.s8 %v1774
    %v1776 = vlaneseq
    %v1777 = vshrl.u32 %v1776, 7
    %v1778 = vsub.s32 %v1775, %v1777
    %v1779 = vrot.slane %v1765, %v1778
    %v1780 = vcombine.low %v1772, %v1779
    %v1781 = vcombine.low %v1531, %v1534
    %v1782 = vcombine.low %v1538, %v1541
    %v1784 = vunpack.c.l.s4 1983009808
    %v1785 = vunpack.c.0.s8 %v1784
    %v1786 = vlaneseq
    %v1787 = vshrl.u32 %v1786, 7
    %v1788 = vsub.s32 %v1785, %v1787
    %v1789 = vrot.slane %v1781, %v1788
    %v1791 = vunpack.c.l.s4 1983009808
    %v1792 = vunpack.c.0.s8 %v1791
    %v1793 = vlaneseq
    %v1794 = vshrl.u32 %v1793, 7
    %v1795 = vsub.s32 %v1792, %v1794
    %v1796 = vrot.slane %v1782, %v1795
    %v1797 = vcombine.low %v1789, %v1796
    %v1798 = vcombine.low %v1545, %v1548
    %v1799 = vcombine.low %v1552, %v1555
    %v1801 = vunpack.c.l.s4 1983009808
    %v1802 = vunpack.c.0.s8 %v1801
    %v1803 = vlaneseq
    %v1804 = vshrl.u32 %v1803, 7
    %v1805 = vsub.s32 %v1802, %v1804
    %v1806 = vrot.slane %v1798, %v1805
    %v1808 = vunpack.c.l.s4 1983009808
    %v1809 = vunpack.c.0.s8 %v1808
    %v1810 = vlaneseq
    %v1811 = vshrl.u32 %v1810, 7
    %v1812 = vsub.s32 %v1809, %v1811
    %v1813 = vrot.slane %v1799, %v1812
    %v1814 = vcombine.low %v1806, %v1813
    %v1815 = vcombine.low %v1559, %v1562
    %v1816 = vcombine.low %v1566, %v1569
    %v1818 = vunpack.c.l.s4 1983009808
    %v1819 = vunpack.c.0.s8 %v1818
    %v1820 = vlaneseq
    %v1821 = vshrl.u32 %v1820, 7
    %v1822 = vsub.s32 %v1819, %v1821
    %v1823 = vrot.slane %v1815, %v1822
    %v1825 = vunpack.c.l.s4 1983009808
    %v1826 = vunpack.c.0.s8 %v1825
    %v1827 = vlaneseq
    %v1828 = vshrl.u32 %v1827, 7
    %v1829 = vsub.s32 %v1826, %v1828
    %v1830 = vrot.slane %v1816, %v1829
    %v1831 = vcombine.low %v1823, %v1830
    %v1832 = vcombine.low %v1573, %v1576
    %v1833 = vcombine.low %v1580, %v1583
    %v1835 = vunpack.c.l.s4 1983009808
    %v1836 = vunpack.c.0.s8 %v1835
    %v1837 = vlaneseq
    %v1838 = vshrl.u32 %v1837, 7
    %v1839 = vsub.s32 %v1836, %v1838
    %v1840 = vrot.slane %v1832, %v1839
    %v1842 = vunpack.c.l.s4 1983009808
    %v1843 = vunpack.c.0.s8 %v1842
    %v1844 = vlaneseq
    %v1845 = vshrl.u32 %v1844, 7
    %v1846 = vsub.s32 %v1843, %v1845
    %v1847 = vrot.slane %v1833, %v1846
    %v1848 = vcombine.low %v1840, %v1847
    %v1849 = vcombine.low %v1587, %v1590
    %v1850 = vcombine.low %v1594, %v1597
    %v1852 = vunpack.c.l.s4 1983009808
    %v1853 = vunpack.c.0.s8 %v1852
    %v1854 = vlaneseq
    %v1855 = vshrl.u32 %v1854, 7
    %v1856 = vsub.s32 %v1853, %v1855
    %v1857 = vrot.slane %v1849, %v1856
    %v1859 = vunpack.c.l.s4 1983009808
    %v1860 = vunpack.c.0.s8 %v1859
    %v1861 = vlaneseq
    %v1862 = vshrl.u32 %v1861, 7
    %v1863 = vsub.s32 %v1860, %v1862
    %v1864 = vrot.slane %v1850, %v1863
    %v1865 = vcombine.low %v1857, %v1864
    %v1866 = vcombine.low %v1601, %v1604
    %v1867 = vcombine.low %v1608, %v1611
    %v1869 = vunpack.c.l.s4 1983009808
    %v1870 = vunpack.c.0.s8 %v1869
    %v1871 = vlaneseq
    %v1872 = vshrl.u32 %v1871, 7
    %v1873 = vsub.s32 %v1870, %v1872
    %v1874 = vrot.slane %v1866, %v1873
    %v1876 = vunpack.c.l.s4 1983009808
    %v1877 = vunpack.c.0.s8 %v1876
    %v1878 = vlaneseq
    %v1879 = vshrl.u32 %v1878, 7
    %v1880 = vsub.s32 %v1877, %v1879
    %v1881 = vrot.slane %v1867, %v1880
    %v1882 = vcombine.low %v1874, %v1881
    %v1883 = vcombine.low %v1615, %v1618
    %v1884 = vcombine.low %v1622, %v1625
    %v1886 = vunpack.c.l.s4 1983009808
    %v1887 = vunpack.c.0.s8 %v1886
    %v1888 = vlaneseq
    %v1889 = vshrl.u32 %v1888, 7
    %v1890 = vsub.s32 %v1887, %v1889
    %v1891 = vrot.slane %v1883, %v1890
    %v1893 = vunpack.c.l.s4 1983009808
    %v1894 = vunpack.c.0.s8 %v1893
    %v1895 = vlaneseq
    %v1896 = vshrl.u32 %v1895, 7
    %v1897 = vsub.s32 %v1894, %v1896
    %v1898 = vrot.slane %v1884, %v1897
    %v1899 = vcombine.low %v1891, %v1898
    %v1900 = vcombine.low %v1629, %v1632
    %v1901 = vcombine.low %v1636, %v1639
    %v1903 = vunpack.c.l.s4 1983009808
    %v1904 = vunpack.c.0.s8 %v1903
    %v1905 = vlaneseq
    %v1906 = vshrl.u32 %v1905, 7
    %v1907 = vsub.s32 %v1904, %v1906
    %v1908 = vrot.slane %v1900, %v1907
    %v1910 = vunpack.c.l.s4 1983009808
    %v1911 = vunpack.c.0.s8 %v1910
    %v1912 = vlaneseq
    %v1913 = vshrl.u32 %v1912, 7
    %v1914 = vsub.s32 %v1911, %v1913
    %v1915 = vrot.slane %v1901, %v1914
    %v1916 = vcombine.low %v1908, %v1915
    %v1917 = vcombine.low %v1643, %v1646
    %v1918 = vcombine.low %v1650, %v1653
    %v1920 = vunpack.c.l.s4 1983009808
    %v1921 = vunpack.c.0.s8 %v1920
    %v1922 = vlaneseq
    %v1923 = vshrl.u32 %v1922, 7
    %v1924 = vsub.s32 %v1921, %v1923
    %v1925 = vrot.slane %v1917, %v1924
    %v1927 = vunpack.c.l.s4 1983009808
    %v1928 = vunpack.c.0.s8 %v1927
    %v1929 = vlaneseq
    %v1930 = vshrl.u32 %v1929, 7
    %v1931 = vsub.s32 %v1928, %v1930
    %v1932 = vrot.slane %v1918, %v1931
    %v1933 = vcombine.low %v1925, %v1932
    %v1934 = vcombine.low %v1657, %v1660
    %v1935 = vcombine.low %v1664, %v1667
    %v1937 = vunpack.c.l.s4 1983009808
    %v1938 = vunpack.c.0.s8 %v1937
    %v1939 = vlaneseq
    %v1940 = vshrl.u32 %v1939, 7
    %v1941 = vsub.s32 %v1938, %v1940
    %v1942 = vrot.slane %v1934, %v1941
    %v1944 = vunpack.c.l.s4 1983009808
    %v1945 = vunpack.c.0.s8 %v1944
    %v1946 = vlaneseq
    %v1947 = vshrl.u32 %v1946, 7
    %v1948 = vsub.s32 %v1945, %v1947
    %v1949 = vrot.slane %v1935, %v1948
    %v1950 = vcombine.low %v1942, %v1949
    %v1951 = vcombine.low %v1671, %v1674
    %v1952 = vcombine.low %v1678, %v1681
    %v1954 = vunpack.c.l.s4 1983009808
    %v1955 = vunpack.c.0.s8 %v1954
    %v1956 = vlaneseq
    %v1957 = vshrl.u32 %v1956, 7
    %v1958 = vsub.s32 %v1955, %v1957
    %v1959 = vrot.slane %v1951, %v1958
    %v1961 = vunpack.c.l.s4 1983009808
    %v1962 = vunpack.c.0.s8 %v1961
    %v1963 = vlaneseq
    %v1964 = vshrl.u32 %v1963, 7
    %v1965 = vsub.s32 %v1962, %v1964
    %v1966 = vrot.slane %v1952, %v1965
    %v1967 = vcombine.low %v1959, %v1966
    %v1968 = vcombine.low %v1685, %v1688
    %v1969 = vcombine.low %v1692, %v1695
    %v1971 = vunpack.c.l.s4 1983009808
    %v1972 = vunpack.c.0.s8 %v1971
    %v1973 = vlaneseq
    %v1974 = vshrl.u32 %v1973, 7
    %v1975 = vsub.s32 %v1972, %v1974
    %v1976 = vrot.slane %v1968, %v1975
    %v1978 = vunpack.c.l.s4 1983009808
    %v1979 = vunpack.c.0.s8 %v1978
    %v1980 = vlaneseq
    %v1981 = vshrl.u32 %v1980, 7
    %v1982 = vsub.s32 %v1979, %v1981
    %v1983 = vrot.slane %v1969, %v1982
    %v1984 = vcombine.low %v1976, %v1983
    %2001 = vmatprep.subr.mxu0 0.0
    %2002 = vmatpush1.msra.mxu0 %v1697
    %2003 = vmatprep.subr.mxu0 0.0
    %2004 = vmatpush1.msra.mxu0 %v1698
    %2005 = vmatprep.subr.mxu0 0.0
    %2006 = vmatpush1.msra.mxu0 %v1699
    %2007 = vmatprep.subr.mxu0 0.0
    %2008 = vmatpush1.msra.mxu0 %v1700
    %2009 = vmatprep.subr.mxu0 0.0
    %2010 = vmatpush1.msra.mxu0 %v1701
    %2011 = vmatprep.subr.mxu0 0.0
    %2012 = vmatpush1.msra.mxu0 %v1702
    %2013 = vmatprep.subr.mxu0 0.0
    %2014 = vmatpush1.msra.mxu0 %v1703
    %2015 = vmatprep.subr.mxu0 0.0
    %2016 = vmatpush1.msra.mxu0 %v1704
    %2017 = vmatprep.subr.mxu0 0.0
    %2018 = vmatpush1.msra.mxu0 %v1705
    %2019 = vmatprep.subr.mxu0 0.0
    %2020 = vmatpush1.msra.mxu0 %v1706
    %2021 = vmatprep.subr.mxu0 0.0
    %2022 = vmatpush1.msra.mxu0 %v1707
    %2023 = vmatprep.subr.mxu0 0.0
    %2024 = vmatpush1.msra.mxu0 %v1708
    %2025 = vmatprep.subr.mxu0 0.0
    %2026 = vmatpush1.msra.mxu0 %v1709
    %2027 = vmatprep.subr.mxu0 0.0
    %2028 = vmatpush1.msra.mxu0 %v1710
    %2029 = vmatprep.subr.mxu0 0.0
    %2030 = vmatpush1.msra.mxu0 %v1711
    %2031 = vmatprep.subr.mxu0 0.0
    %2032 = vmatpush1.msra.mxu0 %v1712
    %2033 = vmatprep.subr.mxu0 0.0
    %2034 = vmatpush1.msra.mxu0 0.0
    %2035 = vmatprep.subr.mxu0 0.0
    %2036 = vmatpush1.msra.mxu0 0.0
    %2037 = vmatprep.subr.mxu0 0.0
    %2038 = vmatpush1.msra.mxu0 0.0
    %2039 = vmatprep.subr.mxu0 0.0
    %2040 = vmatpush1.msra.mxu0 0.0
    %2041 = vmatprep.subr.mxu0 0.0
    %2042 = vmatpush1.msra.mxu0 0.0
    %2043 = vmatprep.subr.mxu0 0.0
    %2044 = vmatpush1.msra.mxu0 0.0
    %2045 = vmatprep.subr.mxu0 0.0
    %2046 = vmatpush1.msra.mxu0 0.0
    %2047 = vmatprep.subr.mxu0 0.0
    %2048 = vmatpush1.msra.mxu0 0.0
    %2049 = vmatprep.subr.mxu0 0.0
    %2050 = vmatpush1.msra.mxu0 0.0
    %2051 = vmatprep.subr.mxu0 0.0
    %2052 = vmatpush1.msra.mxu0 0.0
    %2053 = vmatprep.subr.mxu0 0.0
    %2054 = vmatpush1.msra.mxu0 0.0
    %2055 = vmatprep.subr.mxu0 0.0
    %2056 = vmatpush1.msra.mxu0 0.0
    %2057 = vmatprep.subr.mxu0 0.0
    %2058 = vmatpush1.msra.mxu0 0.0
    %2059 = vmatprep.subr.mxu0 0.0
    %2060 = vmatpush1.msra.mxu0 0.0
    %2061 = vmatprep.subr.mxu0 0.0
    %2062 = vmatpush1.msra.mxu0 0.0
    %2063 = vmatprep.subr.mxu0 0.0
    %2064 = vmatpush1.msra.mxu0 0.0
    %2065 = vmatprep.mubr.f32.mxu0 0.0
    %2066 = vmatmul.mubr.f32.gmra.mrb[0].mxu0 %v1729
    %v2067 = vpop.f32.mrb[0].mxu0
    %v2068 = vadd.f32 0.0, %v2067
    %v2069 = vpop.f32.mrb[0].mxu0
    %2070 = vmatprep.mubr.f32.mxu0 0.0
    %2071 = vmatmul.mubr.f32.gmra.mrb[0].mxu0 %v1746
    %v2072 = vpop.f32.mrb[0].mxu0
    %v2073 = vadd.f32 0.0, %v2072
    %v2074 = vpop.f32.mrb[0].mxu0
    %2075 = vmatprep.mubr.f32.mxu0 0.0
    %2076 = vmatmul.mubr.f32.gmra.mrb[0].mxu0 %v1763
    %v2077 = vpop.f32.mrb[0].mxu0
    %v2078 = vadd.f32 0.0, %v2077
    %v2079 = vpop.f32.mrb[0].mxu0
    %2080 = vmatprep.mubr.f32.mxu0 0.0
    %2081 = vmatmul.mubr.f32.gmra.mrb[0].mxu0 %v1780
    %v2082 = vpop.f32.mrb[0].mxu0
    %v2083 = vadd.f32 0.0, %v2082
    %v2084 = vpop.f32.mrb[0].mxu0
    %2085 = vmatprep.mubr.f32.mxu0 0.0
    %2086 = vmatmul.mubr.f32.gmra.mrb[0].mxu0 %v1797
    %v2087 = vpop.f32.mrb[0].mxu0
    %v2088 = vadd.f32 0.0, %v2087
    %v2089 = vpop.f32.mrb[0].mxu0
    %2090 = vmatprep.mubr.f32.mxu0 0.0
    %2091 = vmatmul.mubr.f32.gmra.mrb[0].mxu0 %v1814
    %v2092 = vpop.f32.mrb[0].mxu0
    %v2093 = vadd.f32 0.0, %v2092
    %v2094 = vpop.f32.mrb[0].mxu0
    %2095 = vmatprep.mubr.f32.mxu0 0.0
    %2096 = vmatmul.mubr.f32.gmra.mrb[0].mxu0 %v1831
    %v2097 = vpop.f32.mrb[0].mxu0
    %v2098 = vadd.f32 0.0, %v2097
    %v2099 = vpop.f32.mrb[0].mxu0
    %2100 = vmatprep.mubr.f32.mxu0 0.0
    %2101 = vmatmul.mubr.f32.gmra.mrb[0].mxu0 %v1848
    %v2102 = vpop.f32.mrb[0].mxu0
    %v2103 = vadd.f32 0.0, %v2102
    %v2104 = vpop.f32.mrb[0].mxu0
    %2105 = vmatprep.mubr.f32.mxu0 0.0
    %2106 = vmatmul.mubr.f32.gmra.mrb[0].mxu0 %v1865
    %v2107 = vpop.f32.mrb[0].mxu0
    %v2108 = vadd.f32 0.0, %v2107
    %v2109 = vpop.f32.mrb[0].mxu0
    %2110 = vmatprep.mubr.f32.mxu0 0.0
    %2111 = vmatmul.mubr.f32.gmra.mrb[0].mxu0 %v1882
    %v2112 = vpop.f32.mrb[0].mxu0
    %v2113 = vadd.f32 0.0, %v2112
    %v2114 = vpop.f32.mrb[0].mxu0
    %2115 = vmatprep.mubr.f32.mxu0 0.0
    %2116 = vmatmul.mubr.f32.gmra.mrb[0].mxu0 %v1899
    %v2117 = vpop.f32.mrb[0].mxu0
    %v2118 = vadd.f32 0.0, %v2117
    %v2119 = vpop.f32.mrb[0].mxu0
    %2120 = vmatprep.mubr.f32.mxu0 0.0
    %2121 = vmatmul.mubr.f32.gmra.mrb[0].mxu0 %v1916
    %v2122 = vpop.f32.mrb[0].mxu0
    %v2123 = vadd.f32 0.0, %v2122
    %v2124 = vpop.f32.mrb[0].mxu0
    %2125 = vmatprep.mubr.f32.mxu0 0.0
    %2126 = vmatmul.mubr.f32.gmra.mrb[0].mxu0 %v1933
    %v2127 = vpop.f32.mrb[0].mxu0
    %v2128 = vadd.f32 0.0, %v2127
    %v2129 = vpop.f32.mrb[0].mxu0
    %2130 = vmatprep.mubr.f32.mxu0 0.0
    %2131 = vmatmul.mubr.f32.gmra.mrb[0].mxu0 %v1950
    %v2132 = vpop.f32.mrb[0].mxu0
    %v2133 = vadd.f32 0.0, %v2132
    %v2134 = vpop.f32.mrb[0].mxu0
    %2135 = vmatprep.mubr.f32.mxu0 0.0
    %2136 = vmatmul.mubr.f32.gmra.mrb[0].mxu0 %v1967
    %v2137 = vpop.f32.mrb[0].mxu0
    %v2138 = vadd.f32 0.0, %v2137
    %v2139 = vpop.f32.mrb[0].mxu0
    %2140 = vmatprep.mubr.f32.mxu0 0.0
    %2141 = vmatmul.mubr.f32.gmra.mrb[0].mxu0 %v1984
    %v2142 = vpop.f32.mrb[0].mxu0
    %v2143 = vadd.f32 0.0, %v2142
    %v2144 = vpop.f32.mrb[0].mxu0
    %2145 = vdwg.mxu0
    %v2146 = vcombine.low %v844, %v852
    %v2147 = vcombine.low %v853, %v861
    %v2149 = vunpack.c.l.s4 1983009808
    %v2150 = vunpack.c.0.s8 %v2149
    %v2151 = vlaneseq
    %v2152 = vshrl.u32 %v2151, 7
    %v2153 = vsub.s32 %v2150, %v2152
    %v2154 = vrot.slane %v2146, %v2153
    %v2156 = vunpack.c.l.s4 1983009808
    %v2157 = vunpack.c.0.s8 %v2156
    %v2158 = vlaneseq
    %v2159 = vshrl.u32 %v2158, 7
    %v2160 = vsub.s32 %v2157, %v2159
    %v2161 = vrot.slane %v2147, %v2160
    %v2162 = vcombine.low %v2154, %v2161
    %v2163 = vcombine.low %v868, %v870
    %v2164 = vcombine.low %v886, %v885
    %v2166 = vunpack.c.l.s4 1983009808
    %v2167 = vunpack.c.0.s8 %v2166
    %v2168 = vlaneseq
    %v2169 = vshrl.u32 %v2168, 7
    %v2170 = vsub.s32 %v2167, %v2169
    %v2171 = vrot.slane %v2163, %v2170
    %v2173 = vunpack.c.l.s4 1983009808
    %v2174 = vunpack.c.0.s8 %v2173
    %v2175 = vlaneseq
    %v2176 = vshrl.u32 %v2175, 7
    %v2177 = vsub.s32 %v2174, %v2176
    %v2178 = vrot.slane %v2164, %v2177
    %v2179 = vcombine.low %v2171, %v2178
    %v2180 = vcombine.low %v919, %v921
    %v2181 = vcombine.low %v937, %v936
    %v2183 = vunpack.c.l.s4 1983009808
    %v2184 = vunpack.c.0.s8 %v2183
    %v2185 = vlaneseq
    %v2186 = vshrl.u32 %v2185, 7
    %v2187 = vsub.s32 %v2184, %v2186
    %v2188 = vrot.slane %v2180, %v2187
    %v2190 = vunpack.c.l.s4 1983009808
    %v2191 = vunpack.c.0.s8 %v2190
    %v2192 = vlaneseq
    %v2193 = vshrl.u32 %v2192, 7
    %v2194 = vsub.s32 %v2191, %v2193
    %v2195 = vrot.slane %v2181, %v2194
    %v2196 = vcombine.low %v2188, %v2195
    %v2197 = vcombine.low %v946, %v954
    %v2198 = vcombine.low %v955, %v963
    %v2200 = vunpack.c.l.s4 1983009808
    %v2201 = vunpack.c.0.s8 %v2200
    %v2202 = vlaneseq
    %v2203 = vshrl.u32 %v2202, 7
    %v2204 = vsub.s32 %v2201, %v2203
    %v2205 = vrot.slane %v2197, %v2204
    %v2207 = vunpack.c.l.s4 1983009808
    %v2208 = vunpack.c.0.s8 %v2207
    %v2209 = vlaneseq
    %v2210 = vshrl.u32 %v2209, 7
    %v2211 = vsub.s32 %v2208, %v2210
    %v2212 = vrot.slane %v2198, %v2211
    %v2213 = vcombine.low %v2205, %v2212
    %v2214 = vcombine.low %v997, %v1005
    %v2215 = vcombine.low %v1006, %v1014
    %v2217 = vunpack.c.l.s4 1983009808
    %v2218 = vunpack.c.0.s8 %v2217
    %v2219 = vlaneseq
    %v2220 = vshrl.u32 %v2219, 7
    %v2221 = vsub.s32 %v2218, %v2220
    %v2222 = vrot.slane %v2214, %v2221
    %v2224 = vunpack.c.l.s4 1983009808
    %v2225 = vunpack.c.0.s8 %v2224
    %v2226 = vlaneseq
    %v2227 = vshrl.u32 %v2226, 7
    %v2228 = vsub.s32 %v2225, %v2227
    %v2229 = vrot.slane %v2215, %v2228
    %v2230 = vcombine.low %v2222, %v2229
    %v2231 = vcombine.low %v1021, %v1023
    %v2232 = vcombine.low %v1039, %v1038
    %v2234 = vunpack.c.l.s4 1983009808
    %v2235 = vunpack.c.0.s8 %v2234
    %v2236 = vlaneseq
    %v2237 = vshrl.u32 %v2236, 7
    %v2238 = vsub.s32 %v2235, %v2237
    %v2239 = vrot.slane %v2231, %v2238
    %v2241 = vunpack.c.l.s4 1983009808
    %v2242 = vunpack.c.0.s8 %v2241
    %v2243 = vlaneseq
    %v2244 = vshrl.u32 %v2243, 7
    %v2245 = vsub.s32 %v2242, %v2244
    %v2246 = vrot.slane %v2232, %v2245
    %v2247 = vcombine.low %v2239, %v2246
    %v2248 = vcombine.low %v1072, %v1074
    %v2249 = vcombine.low %v1090, %v1089
    %v2251 = vunpack.c.l.s4 1983009808
    %v2252 = vunpack.c.0.s8 %v2251
    %v2253 = vlaneseq
    %v2254 = vshrl.u32 %v2253, 7
    %v2255 = vsub.s32 %v2252, %v2254
    %v2256 = vrot.slane %v2248, %v2255
    %v2258 = vunpack.c.l.s4 1983009808
    %v2259 = vunpack.c.0.s8 %v2258
    %v2260 = vlaneseq
    %v2261 = vshrl.u32 %v2260, 7
    %v2262 = vsub.s32 %v2259, %v2261
    %v2263 = vrot.slane %v2249, %v2262
    %v2264 = vcombine.low %v2256, %v2263
    %v2265 = vcombine.low %v1099, %v1107
    %v2266 = vcombine.low %v1108, %v1116
    %v2268 = vunpack.c.l.s4 1983009808
    %v2269 = vunpack.c.0.s8 %v2268
    %v2270 = vlaneseq
    %v2271 = vshrl.u32 %v2270, 7
    %v2272 = vsub.s32 %v2269, %v2271
    %v2273 = vrot.slane %v2265, %v2272
    %v2275 = vunpack.c.l.s4 1983009808
    %v2276 = vunpack.c.0.s8 %v2275
    %v2277 = vlaneseq
    %v2278 = vshrl.u32 %v2277, 7
    %v2279 = vsub.s32 %v2276, %v2278
    %v2280 = vrot.slane %v2266, %v2279
    %v2281 = vcombine.low %v2273, %v2280
    %v2282 = vcombine.low %v1150, %v1158
    %v2283 = vcombine.low %v1159, %v1167
    %v2285 = vunpack.c.l.s4 1983009808
    %v2286 = vunpack.c.0.s8 %v2285
    %v2287 = vlaneseq
    %v2288 = vshrl.u32 %v2287, 7
    %v2289 = vsub.s32 %v2286, %v2288
    %v2290 = vrot.slane %v2282, %v2289
    %v2292 = vunpack.c.l.s4 1983009808
    %v2293 = vunpack.c.0.s8 %v2292
    %v2294 = vlaneseq
    %v2295 = vshrl.u32 %v2294, 7
    %v2296 = vsub.s32 %v2293, %v2295
    %v2297 = vrot.slane %v2283, %v2296
    %v2298 = vcombine.low %v2290, %v2297
    %v2299 = vcombine.low %v1174, %v1176
    %v2300 = vcombine.low %v1192, %v1191
    %v2302 = vunpack.c.l.s4 1983009808
    %v2303 = vunpack.c.0.s8 %v2302
    %v2304 = vlaneseq
    %v2305 = vshrl.u32 %v2304, 7
    %v2306 = vsub.s32 %v2303, %v2305
    %v2307 = vrot.slane %v2299, %v2306
    %v2309 = vunpack.c.l.s4 1983009808
    %v2310 = vunpack.c.0.s8 %v2309
    %v2311 = vlaneseq
    %v2312 = vshrl.u32 %v2311, 7
    %v2313 = vsub.s32 %v2310, %v2312
    %v2314 = vrot.slane %v2300, %v2313
    %v2315 = vcombine.low %v2307, %v2314
    %v2316 = vcombine.low %v1225, %v1227
    %v2317 = vcombine.low %v1243, %v1242
    %v2319 = vunpack.c.l.s4 1983009808
    %v2320 = vunpack.c.0.s8 %v2319
    %v2321 = vlaneseq
    %v2322 = vshrl.u32 %v2321, 7
    %v2323 = vsub.s32 %v2320, %v2322
    %v2324 = vrot.slane %v2316, %v2323
    %v2326 = vunpack.c.l.s4 1983009808
    %v2327 = vunpack.c.0.s8 %v2326
    %v2328 = vlaneseq
    %v2329 = vshrl.u32 %v2328, 7
    %v2330 = vsub.s32 %v2327, %v2329
    %v2331 = vrot.slane %v2317, %v2330
    %v2332 = vcombine.low %v2324, %v2331
    %v2333 = vcombine.low %v1252, %v1260
    %v2334 = vcombine.low %v1261, %v1269
    %v2336 = vunpack.c.l.s4 1983009808
    %v2337 = vunpack.c.0.s8 %v2336
    %v2338 = vlaneseq
    %v2339 = vshrl.u32 %v2338, 7
    %v2340 = vsub.s32 %v2337, %v2339
    %v2341 = vrot.slane %v2333, %v2340
    %v2343 = vunpack.c.l.s4 1983009808
    %v2344 = vunpack.c.0.s8 %v2343
    %v2345 = vlaneseq
    %v2346 = vshrl.u32 %v2345, 7
    %v2347 = vsub.s32 %v2344, %v2346
    %v2348 = vrot.slane %v2334, %v2347
    %v2349 = vcombine.low %v2341, %v2348
    %v2350 = vcombine.low %v1303, %v1311
    %v2351 = vcombine.low %v1312, %v1320
    %v2353 = vunpack.c.l.s4 1983009808
    %v2354 = vunpack.c.0.s8 %v2353
    %v2355 = vlaneseq
    %v2356 = vshrl.u32 %v2355, 7
    %v2357 = vsub.s32 %v2354, %v2356
    %v2358 = vrot.slane %v2350, %v2357
    %v2360 = vunpack.c.l.s4 1983009808
    %v2361 = vunpack.c.0.s8 %v2360
    %v2362 = vlaneseq
    %v2363 = vshrl.u32 %v2362, 7
    %v2364 = vsub.s32 %v2361, %v2363
    %v2365 = vrot.slane %v2351, %v2364
    %v2366 = vcombine.low %v2358, %v2365
    %v2367 = vcombine.low %v1327, %v1329
    %v2368 = vcombine.low %v1345, %v1344
    %v2370 = vunpack.c.l.s4 1983009808
    %v2371 = vunpack.c.0.s8 %v2370
    %v2372 = vlaneseq
    %v2373 = vshrl.u32 %v2372, 7
    %v2374 = vsub.s32 %v2371, %v2373
    %v2375 = vrot.slane %v2367, %v2374
    %v2377 = vunpack.c.l.s4 1983009808
    %v2378 = vunpack.c.0.s8 %v2377
    %v2379 = vlaneseq
    %v2380 = vshrl.u32 %v2379, 7
    %v2381 = vsub.s32 %v2378, %v2380
    %v2382 = vrot.slane %v2368, %v2381
    %v2383 = vcombine.low %v2375, %v2382
    %v2384 = vcombine.low %v1378, %v1380
    %v2385 = vcombine.low %v1396, %v1395
    %v2387 = vunpack.c.l.s4 1983009808
    %v2388 = vunpack.c.0.s8 %v2387
    %v2389 = vlaneseq
    %v2390 = vshrl.u32 %v2389, 7
    %v2391 = vsub.s32 %v2388, %v2390
    %v2392 = vrot.slane %v2384, %v2391
    %v2394 = vunpack.c.l.s4 1983009808
    %v2395 = vunpack.c.0.s8 %v2394
    %v2396 = vlaneseq
    %v2397 = vshrl.u32 %v2396, 7
    %v2398 = vsub.s32 %v2395, %v2397
    %v2399 = vrot.slane %v2385, %v2398
    %v2400 = vcombine.low %v2392, %v2399
    %v2401 = vcombine.low %v1405, %v1413
    %v2402 = vcombine.low %v1414, %v1422
    %v2404 = vunpack.c.l.s4 1983009808
    %v2405 = vunpack.c.0.s8 %v2404
    %v2406 = vlaneseq
    %v2407 = vshrl.u32 %v2406, 7
    %v2408 = vsub.s32 %v2405, %v2407
    %v2409 = vrot.slane %v2401, %v2408
    %v2411 = vunpack.c.l.s4 1983009808
    %v2412 = vunpack.c.0.s8 %v2411
    %v2413 = vlaneseq
    %v2414 = vshrl.u32 %v2413, 7
    %v2415 = vsub.s32 %v2412, %v2414
    %v2416 = vrot.slane %v2402, %v2415
    %v2417 = vcombine.low %v2409, %v2416
    %2434 = vmatprep.subr.mxu0 0.0
    %2435 = vmatpush1.msra.mxu0 %v1449
    %2436 = vmatprep.subr.mxu0 0.0
    %2437 = vmatpush1.msra.mxu0 %v1450
    %2438 = vmatprep.subr.mxu0 0.0
    %2439 = vmatpush1.msra.mxu0 %v1451
    %2440 = vmatprep.subr.mxu0 0.0
    %2441 = vmatpush1.msra.mxu0 %v1452
    %2442 = vmatprep.subr.mxu0 0.0
    %2443 = vmatpush1.msra.mxu0 %v1453
    %2444 = vmatprep.subr.mxu0 0.0
    %2445 = vmatpush1.msra.mxu0 %v1454
    %2446 = vmatprep.subr.mxu0 0.0
    %2447 = vmatpush1.msra.mxu0 %v1455
    %2448 = vmatprep.subr.mxu0 0.0
    %2449 = vmatpush1.msra.mxu0 %v1456
    %2450 = vmatprep.subr.mxu0 0.0
    %2451 = vmatpush1.msra.mxu0 %v1457
    %2452 = vmatprep.subr.mxu0 0.0
    %2453 = vmatpush1.msra.mxu0 %v1458
    %2454 = vmatprep.subr.mxu0 0.0
    %2455 = vmatpush1.msra.mxu0 %v1459
    %2456 = vmatprep.subr.mxu0 0.0
    %2457 = vmatpush1.msra.mxu0 %v1460
    %2458 = vmatprep.subr.mxu0 0.0
    %2459 = vmatpush1.msra.mxu0 %v1461
    %2460 = vmatprep.subr.mxu0 0.0
    %2461 = vmatpush1.msra.mxu0 %v1462
    %2462 = vmatprep.subr.mxu0 0.0
    %2463 = vmatpush1.msra.mxu0 %v1463
    %2464 = vmatprep.subr.mxu0 0.0
    %2465 = vmatpush1.msra.mxu0 %v1464
    %2466 = vmatprep.subr.mxu0 0.0
    %2467 = vmatpush1.msra.mxu0 0.0
    %2468 = vmatprep.subr.mxu0 0.0
    %2469 = vmatpush1.msra.mxu0 0.0
    %2470 = vmatprep.subr.mxu0 0.0
    %2471 = vmatpush1.msra.mxu0 0.0
    %2472 = vmatprep.subr.mxu0 0.0
    %2473 = vmatpush1.msra.mxu0 0.0
    %2474 = vmatprep.subr.mxu0 0.0
    %2475 = vmatpush1.msra.mxu0 0.0
    %2476 = vmatprep.subr.mxu0 0.0
    %2477 = vmatpush1.msra.mxu0 0.0
    %2478 = vmatprep.subr.mxu0 0.0
    %2479 = vmatpush1.msra.mxu0 0.0
    %2480 = vmatprep.subr.mxu0 0.0
    %2481 = vmatpush1.msra.mxu0 0.0
    %2482 = vmatprep.subr.mxu0 0.0
    %2483 = vmatpush1.msra.mxu0 0.0
    %2484 = vmatprep.subr.mxu0 0.0
    %2485 = vmatpush1.msra.mxu0 0.0
    %2486 = vmatprep.subr.mxu0 0.0
    %2487 = vmatpush1.msra.mxu0 0.0
    %2488 = vmatprep.subr.mxu0 0.0
    %2489 = vmatpush1.msra.mxu0 0.0
    %2490 = vmatprep.subr.mxu0 0.0
    %2491 = vmatpush1.msra.mxu0 0.0
    %2492 = vmatprep.subr.mxu0 0.0
    %2493 = vmatpush1.msra.mxu0 0.0
    %2494 = vmatprep.subr.mxu0 0.0
    %2495 = vmatpush1.msra.mxu0 0.0
    %2496 = vmatprep.subr.mxu0 0.0
    %2497 = vmatpush1.msra.mxu0 0.0
    %2498 = vmatprep.mubr.f32.mxu0 0.0
    %2499 = vmatmul.mubr.f32.gmra.mrb[0].mxu0 %v2162
    %v2500 = vpop.f32.mrb[0].mxu0
    %v2501 = vadd.f32 %v2068, %v2500
    %v2502 = vpop.f32.mrb[0].mxu0
    %2503 = vmatprep.mubr.f32.mxu0 0.0
    %2504 = vmatmul.mubr.f32.gmra.mrb[0].mxu0 %v2179
    %v2505 = vpop.f32.mrb[0].mxu0
    %v2506 = vadd.f32 %v2073, %v2505
    %v2507 = vpop.f32.mrb[0].mxu0
    %2508 = vmatprep.mubr.f32.mxu0 0.0
    %2509 = vmatmul.mubr.f32.gmra.mrb[0].mxu0 %v2196
    %v2510 = vpop.f32.mrb[0].mxu0
    %v2511 = vadd.f32 %v2078, %v2510
    %v2512 = vpop.f32.mrb[0].mxu0
    %2513 = vmatprep.mubr.f32.mxu0 0.0
    %2514 = vmatmul.mubr.f32.gmra.mrb[0].mxu0 %v2213
    %v2515 = vpop.f32.mrb[0].mxu0
    %v2516 = vadd.f32 %v2083, %v2515
    %v2517 = vpop.f32.mrb[0].mxu0
    %2518 = vmatprep.mubr.f32.mxu0 0.0
    %2519 = vmatmul.mubr.f32.gmra.mrb[0].mxu0 %v2230
    %v2520 = vpop.f32.mrb[0].mxu0
    %v2521 = vadd.f32 %v2088, %v2520
    %v2522 = vpop.f32.mrb[0].mxu0
    %2523 = vmatprep.mubr.f32.mxu0 0.0
    %2524 = vmatmul.mubr.f32.gmra.mrb[0].mxu0 %v2247
    %v2525 = vpop.f32.mrb[0].mxu0
    %v2526 = vadd.f32 %v2093, %v2525
    %v2527 = vpop.f32.mrb[0].mxu0
    %2528 = vmatprep.mubr.f32.mxu0 0.0
    %2529 = vmatmul.mubr.f32.gmra.mrb[0].mxu0 %v2264
    %v2530 = vpop.f32.mrb[0].mxu0
    %v2531 = vadd.f32 %v2098, %v2530
    %v2532 = vpop.f32.mrb[0].mxu0
    %2533 = vmatprep.mubr.f32.mxu0 0.0
    %2534 = vmatmul.mubr.f32.gmra.mrb[0].mxu0 %v2281
    %v2535 = vpop.f32.mrb[0].mxu0
    %v2536 = vadd.f32 %v2103, %v2535
    %v2537 = vpop.f32.mrb[0].mxu0
    %2538 = vmatprep.mubr.f32.mxu0 0.0
    %2539 = vmatmul.mubr.f32.gmra.mrb[0].mxu0 %v2298
    %v2540 = vpop.f32.mrb[0].mxu0
    %v2541 = vadd.f32 %v2108, %v2540
    %v2542 = vpop.f32.mrb[0].mxu0
    %2543 = vmatprep.mubr.f32.mxu0 0.0
    %2544 = vmatmul.mubr.f32.gmra.mrb[0].mxu0 %v2315
    %v2545 = vpop.f32.mrb[0].mxu0
    %v2546 = vadd.f32 %v2113, %v2545
    %v2547 = vpop.f32.mrb[0].mxu0
    %2548 = vmatprep.mubr.f32.mxu0 0.0
    %2549 = vmatmul.mubr.f32.gmra.mrb[0].mxu0 %v2332
    %v2550 = vpop.f32.mrb[0].mxu0
    %v2551 = vadd.f32 %v2118, %v2550
    %v2552 = vpop.f32.mrb[0].mxu0
    %2553 = vmatprep.mubr.f32.mxu0 0.0
    %2554 = vmatmul.mubr.f32.gmra.mrb[0].mxu0 %v2349
    %v2555 = vpop.f32.mrb[0].mxu0
    %v2556 = vadd.f32 %v2123, %v2555
    %v2557 = vpop.f32.mrb[0].mxu0
    %2558 = vmatprep.mubr.f32.mxu0 0.0
    %2559 = vmatmul.mubr.f32.gmra.mrb[0].mxu0 %v2366
    %v2560 = vpop.f32.mrb[0].mxu0
    %v2561 = vadd.f32 %v2128, %v2560
    %v2562 = vpop.f32.mrb[0].mxu0
    %2563 = vmatprep.mubr.f32.mxu0 0.0
    %2564 = vmatmul.mubr.f32.gmra.mrb[0].mxu0 %v2383
    %v2565 = vpop.f32.mrb[0].mxu0
    %v2566 = vadd.f32 %v2133, %v2565
    %v2567 = vpop.f32.mrb[0].mxu0
    %2568 = vmatprep.mubr.f32.mxu0 0.0
    %2569 = vmatmul.mubr.f32.gmra.mrb[0].mxu0 %v2400
    %v2570 = vpop.f32.mrb[0].mxu0
    %v2571 = vadd.f32 %v2138, %v2570
    %v2572 = vpop.f32.mrb[0].mxu0
    %2573 = vmatprep.mubr.f32.mxu0 0.0
    %2574 = vmatmul.mubr.f32.gmra.mrb[0].mxu0 %v2417
    %v2575 = vpop.f32.mrb[0].mxu0
    %v2576 = vadd.f32 %v2143, %v2575
    %v2577 = vpop.f32.mrb[0].mxu0
    %2578 = vdwg.mxu0
    %s2579 = scalar_lea.vmem [#allocation8], 256
    %v2580 = vld [vmem:[%s2579] sm:$0xff]
    %v2581 = vld [vmem:[%s2579 + $0x8] sm:$0xff]
    %v2582 = vld [vmem:[%s2579 + $0x10] sm:$0xff]
    %v2583 = vld [vmem:[%s2579 + $0x18] sm:$0xff]
    %v2584 = vld [vmem:[%s2579 + $0x20] sm:$0xff]
    %v2585 = vld [vmem:[%s2579 + $0x28] sm:$0xff]
    %v2586 = vld [vmem:[%s2579 + $0x30] sm:$0xff]
    %v2587 = vld [vmem:[%s2579 + $0x38] sm:$0xff]
    %v2588 = vld [vmem:[%s2579 + $0x40] sm:$0xff]
    %v2589 = vld [vmem:[%s2579 + $0x48] sm:$0xff]
    %v2590 = vld [vmem:[%s2579 + $0x50] sm:$0xff]
    %v2591 = vld [vmem:[%s2579 + $0x58] sm:$0xff]
    %v2592 = vld [vmem:[%s2579 + $0x60] sm:$0xff]
    %v2593 = vld [vmem:[%s2579 + $0x68] sm:$0xff]
    %v2594 = vld [vmem:[%s2579 + $0x70] sm:$0xff]
    %v2595 = vld [vmem:[%s2579 + $0x78] sm:$0xff]
    %v2596 = vcombine.low %v852, %v851
    %v2597 = vcombine.low %v861, %v869
    %v2599 = vunpack.c.l.s4 1983009808
    %v2600 = vunpack.c.0.s8 %v2599
    %v2601 = vlaneseq
    %v2602 = vshrl.u32 %v2601, 7
    %v2603 = vsub.s32 %v2600, %v2602
    %v2604 = vrot.slane %v2596, %v2603
    %v2606 = vunpack.c.l.s4 1983009808
    %v2607 = vunpack.c.0.s8 %v2606
    %v2608 = vlaneseq
    %v2609 = vshrl.u32 %v2608, 7
    %v2610 = vsub.s32 %v2607, %v2609
    %v2611 = vrot.slane %v2597, %v2610
    %v2612 = vcombine.low %v2604, %v2611
    %v2613 = vcombine.low %v870, %v878
    %v2614 = vcombine.low %v885, %v887
    %v2616 = vunpack.c.l.s4 1983009808
    %v2617 = vunpack.c.0.s8 %v2616
    %v2618 = vlaneseq
    %v2619 = vshrl.u32 %v2618, 7
    %v2620 = vsub.s32 %v2617, %v2619
    %v2621 = vrot.slane %v2613, %v2620
    %v2623 = vunpack.c.l.s4 1983009808
    %v2624 = vunpack.c.0.s8 %v2623
    %v2625 = vlaneseq
    %v2626 = vshrl.u32 %v2625, 7
    %v2627 = vsub.s32 %v2624, %v2626
    %v2628 = vrot.slane %v2614, %v2627
    %v2629 = vcombine.low %v2621, %v2628
    %v2630 = vcombine.low %v921, %v929
    %v2631 = vcombine.low %v936, %v938
    %v2633 = vunpack.c.l.s4 1983009808
    %v2634 = vunpack.c.0.s8 %v2633
    %v2635 = vlaneseq
    %v2636 = vshrl.u32 %v2635, 7
    %v2637 = vsub.s32 %v2634, %v2636
    %v2638 = vrot.slane %v2630, %v2637
    %v2640 = vunpack.c.l.s4 1983009808
    %v2641 = vunpack.c.0.s8 %v2640
    %v2642 = vlaneseq
    %v2643 = vshrl.u32 %v2642, 7
    %v2644 = vsub.s32 %v2641, %v2643
    %v2645 = vrot.slane %v2631, %v2644
    %v2646 = vcombine.low %v2638, %v2645
    %v2647 = vcombine.low %v954, %v953
    %v2648 = vcombine.low %v963, %v971
    %v2650 = vunpack.c.l.s4 1983009808
    %v2651 = vunpack.c.0.s8 %v2650
    %v2652 = vlaneseq
    %v2653 = vshrl.u32 %v2652, 7
    %v2654 = vsub.s32 %v2651, %v2653
    %v2655 = vrot.slane %v2647, %v2654
    %v2657 = vunpack.c.l.s4 1983009808
    %v2658 = vunpack.c.0.s8 %v2657
    %v2659 = vlaneseq
    %v2660 = vshrl.u32 %v2659, 7
    %v2661 = vsub.s32 %v2658, %v2660
    %v2662 = vrot.slane %v2648, %v2661
    %v2663 = vcombine.low %v2655, %v2662
    %v2664 = vcombine.low %v1005, %v1004
    %v2665 = vcombine.low %v1014, %v1022
    %v2667 = vunpack.c.l.s4 1983009808
    %v2668 = vunpack.c.0.s8 %v2667
    %v2669 = vlaneseq
    %v2670 = vshrl.u32 %v2669, 7
    %v2671 = vsub.s32 %v2668, %v2670
    %v2672 = vrot.slane %v2664, %v2671
    %v2674 = vunpack.c.l.s4 1983009808
    %v2675 = vunpack.c.0.s8 %v2674
    %v2676 = vlaneseq
    %v2677 = vshrl.u32 %v2676, 7
    %v2678 = vsub.s32 %v2675, %v2677
    %v2679 = vrot.slane %v2665, %v2678
    %v2680 = vcombine.low %v2672, %v2679
    %v2681 = vcombine.low %v1023, %v1031
    %v2682 = vcombine.low %v1038, %v1040
    %v2684 = vunpack.c.l.s4 1983009808
    %v2685 = vunpack.c.0.s8 %v2684
    %v2686 = vlaneseq
    %v2687 = vshrl.u32 %v2686, 7
    %v2688 = vsub.s32 %v2685, %v2687
    %v2689 = vrot.slane %v2681, %v2688
    %v2691 = vunpack.c.l.s4 1983009808
    %v2692 = vunpack.c.0.s8 %v2691
    %v2693 = vlaneseq
    %v2694 = vshrl.u32 %v2693, 7
    %v2695 = vsub.s32 %v2692, %v2694
    %v2696 = vrot.slane %v2682, %v2695
    %v2697 = vcombine.low %v2689, %v2696
    %v2698 = vcombine.low %v1074, %v1082
    %v2699 = vcombine.low %v1089, %v1091
    %v2701 = vunpack.c.l.s4 1983009808
    %v2702 = vunpack.c.0.s8 %v2701
    %v2703 = vlaneseq
    %v2704 = vshrl.u32 %v2703, 7
    %v2705 = vsub.s32 %v2702, %v2704
    %v2706 = vrot.slane %v2698, %v2705
    %v2708 = vunpack.c.l.s4 1983009808
    %v2709 = vunpack.c.0.s8 %v2708
    %v2710 = vlaneseq
    %v2711 = vshrl.u32 %v2710, 7
    %v2712 = vsub.s32 %v2709, %v2711
    %v2713 = vrot.slane %v2699, %v2712
    %v2714 = vcombine.low %v2706, %v2713
    %v2715 = vcombine.low %v1107, %v1106
    %v2716 = vcombine.low %v1116, %v1124
    %v2718 = vunpack.c.l.s4 1983009808
    %v2719 = vunpack.c.0.s8 %v2718
    %v2720 = vlaneseq
    %v2721 = vshrl.u32 %v2720, 7
    %v2722 = vsub.s32 %v2719, %v2721
    %v2723 = vrot.slane %v2715, %v2722
    %v2725 = vunpack.c.l.s4 1983009808
    %v2726 = vunpack.c.0.s8 %v2725
    %v2727 = vlaneseq
    %v2728 = vshrl.u32 %v2727, 7
    %v2729 = vsub.s32 %v2726, %v2728
    %v2730 = vrot.slane %v2716, %v2729
    %v2731 = vcombine.low %v2723, %v2730
    %v2732 = vcombine.low %v1158, %v1157
    %v2733 = vcombine.low %v1167, %v1175
    %v2735 = vunpack.c.l.s4 1983009808
    %v2736 = vunpack.c.0.s8 %v2735
    %v2737 = vlaneseq
    %v2738 = vshrl.u32 %v2737, 7
    %v2739 = vsub.s32 %v2736, %v2738
    %v2740 = vrot.slane %v2732, %v2739
    %v2742 = vunpack.c.l.s4 1983009808
    %v2743 = vunpack.c.0.s8 %v2742
    %v2744 = vlaneseq
    %v2745 = vshrl.u32 %v2744, 7
    %v2746 = vsub.s32 %v2743, %v2745
    %v2747 = vrot.slane %v2733, %v2746
    %v2748 = vcombine.low %v2740, %v2747
    %v2749 = vcombine.low %v1176, %v1184
    %v2750 = vcombine.low %v1191, %v1193
    %v2752 = vunpack.c.l.s4 1983009808
    %v2753 = vunpack.c.0.s8 %v2752
    %v2754 = vlaneseq
    %v2755 = vshrl.u32 %v2754, 7
    %v2756 = vsub.s32 %v2753, %v2755
    %v2757 = vrot.slane %v2749, %v2756
    %v2759 = vunpack.c.l.s4 1983009808
    %v2760 = vunpack.c.0.s8 %v2759
    %v2761 = vlaneseq
    %v2762 = vshrl.u32 %v2761, 7
    %v2763 = vsub.s32 %v2760, %v2762
    %v2764 = vrot.slane %v2750, %v2763
    %v2765 = vcombine.low %v2757, %v2764
    %v2766 = vcombine.low %v1227, %v1235
    %v2767 = vcombine.low %v1242, %v1244
    %v2769 = vunpack.c.l.s4 1983009808
    %v2770 = vunpack.c.0.s8 %v2769
    %v2771 = vlaneseq
    %v2772 = vshrl.u32 %v2771, 7
    %v2773 = vsub.s32 %v2770, %v2772
    %v2774 = vrot.slane %v2766, %v2773
    %v2776 = vunpack.c.l.s4 1983009808
    %v2777 = vunpack.c.0.s8 %v2776
    %v2778 = vlaneseq
    %v2779 = vshrl.u32 %v2778, 7
    %v2780 = vsub.s32 %v2777, %v2779
    %v2781 = vrot.slane %v2767, %v2780
    %v2782 = vcombine.low %v2774, %v2781
    %v2783 = vcombine.low %v1260, %v1259
    %v2784 = vcombine.low %v1269, %v1277
    %v2786 = vunpack.c.l.s4 1983009808
    %v2787 = vunpack.c.0.s8 %v2786
    %v2788 = vlaneseq
    %v2789 = vshrl.u32 %v2788, 7
    %v2790 = vsub.s32 %v2787, %v2789
    %v2791 = vrot.slane %v2783, %v2790
    %v2793 = vunpack.c.l.s4 1983009808
    %v2794 = vunpack.c.0.s8 %v2793
    %v2795 = vlaneseq
    %v2796 = vshrl.u32 %v2795, 7
    %v2797 = vsub.s32 %v2794, %v2796
    %v2798 = vrot.slane %v2784, %v2797
    %v2799 = vcombine.low %v2791, %v2798
    %v2800 = vcombine.low %v1311, %v1310
    %v2801 = vcombine.low %v1320, %v1328
    %v2803 = vunpack.c.l.s4 1983009808
    %v2804 = vunpack.c.0.s8 %v2803
    %v2805 = vlaneseq
    %v2806 = vshrl.u32 %v2805, 7
    %v2807 = vsub.s32 %v2804, %v2806
    %v2808 = vrot.slane %v2800, %v2807
    %v2810 = vunpack.c.l.s4 1983009808
    %v2811 = vunpack.c.0.s8 %v2810
    %v2812 = vlaneseq
    %v2813 = vshrl.u32 %v2812, 7
    %v2814 = vsub.s32 %v2811, %v2813
    %v2815 = vrot.slane %v2801, %v2814
    %v2816 = vcombine.low %v2808, %v2815
    %v2817 = vcombine.low %v1329, %v1337
    %v2818 = vcombine.low %v1344, %v1346
    %v2820 = vunpack.c.l.s4 1983009808
    %v2821 = vunpack.c.0.s8 %v2820
    %v2822 = vlaneseq
    %v2823 = vshrl.u32 %v2822, 7
    %v2824 = vsub.s32 %v2821, %v2823
    %v2825 = vrot.slane %v2817, %v2824
    %v2827 = vunpack.c.l.s4 1983009808
    %v2828 = vunpack.c.0.s8 %v2827
    %v2829 = vlaneseq
    %v2830 = vshrl.u32 %v2829, 7
    %v2831 = vsub.s32 %v2828, %v2830
    %v2832 = vrot.slane %v2818, %v2831
    %v2833 = vcombine.low %v2825, %v2832
    %v2834 = vcombine.low %v1380, %v1388
    %v2835 = vcombine.low %v1395, %v1397
    %v2837 = vunpack.c.l.s4 1983009808
    %v2838 = vunpack.c.0.s8 %v2837
    %v2839 = vlaneseq
    %v2840 = vshrl.u32 %v2839, 7
    %v2841 = vsub.s32 %v2838, %v2840
    %v2842 = vrot.slane %v2834, %v2841
    %v2844 = vunpack.c.l.s4 1983009808
    %v2845 = vunpack.c.0.s8 %v2844
    %v2846 = vlaneseq
    %v2847 = vshrl.u32 %v2846, 7
    %v2848 = vsub.s32 %v2845, %v2847
    %v2849 = vrot.slane %v2835, %v2848
    %v2850 = vcombine.low %v2842, %v2849
    %v2851 = vcombine.low %v1413, %v1412
    %v2852 = vcombine.low %v1422, %v1430
    %v2854 = vunpack.c.l.s4 1983009808
    %v2855 = vunpack.c.0.s8 %v2854
    %v2856 = vlaneseq
    %v2857 = vshrl.u32 %v2856, 7
    %v2858 = vsub.s32 %v2855, %v2857
    %v2859 = vrot.slane %v2851, %v2858
    %v2861 = vunpack.c.l.s4 1983009808
    %v2862 = vunpack.c.0.s8 %v2861
    %v2863 = vlaneseq
    %v2864 = vshrl.u32 %v2863, 7
    %v2865 = vsub.s32 %v2862, %v2864
    %v2866 = vrot.slane %v2852, %v2865
    %v2867 = vcombine.low %v2859, %v2866
    %2884 = vmatprep.subr.mxu0 0.0
    %2885 = vmatpush1.msra.mxu0 %v2580
    %2886 = vmatprep.subr.mxu0 0.0
    %2887 = vmatpush1.msra.mxu0 %v2581
    %2888 = vmatprep.subr.mxu0 0.0
    %2889 = vmatpush1.msra.mxu0 %v2582
    %2890 = vmatprep.subr.mxu0 0.0
    %2891 = vmatpush1.msra.mxu0 %v2583
    %2892 = vmatprep.subr.mxu0 0.0
    %2893 = vmatpush1.msra.mxu0 %v2584
    %2894 = vmatprep.subr.mxu0 0.0
    %2895 = vmatpush1.msra.mxu0 %v2585
    %2896 = vmatprep.subr.mxu0 0.0
    %2897 = vmatpush1.msra.mxu0 %v2586
    %2898 = vmatprep.subr.mxu0 0.0
    %2899 = vmatpush1.msra.mxu0 %v2587
    %2900 = vmatprep.subr.mxu0 0.0
    %2901 = vmatpush1.msra.mxu0 %v2588
    %2902 = vmatprep.subr.mxu0 0.0
    %2903 = vmatpush1.msra.mxu0 %v2589
    %2904 = vmatprep.subr.mxu0 0.0
    %2905 = vmatpush1.msra.mxu0 %v2590
    %2906 = vmatprep.subr.mxu0 0.0
    %2907 = vmatpush1.msra.mxu0 %v2591
    %2908 = vmatprep.subr.mxu0 0.0
    %2909 = vmatpush1.msra.mxu0 %v2592
    %2910 = vmatprep.subr.mxu0 0.0
    %2911 = vmatpush1.msra.mxu0 %v2593
    %2912 = vmatprep.subr.mxu0 0.0
    %2913 = vmatpush1.msra.mxu0 %v2594
    %2914 = vmatprep.subr.mxu0 0.0
    %2915 = vmatpush1.msra.mxu0 %v2595
    %2916 = vmatprep.subr.mxu0 0.0
    %2917 = vmatpush1.msra.mxu0 0.0
    %2918 = vmatprep.subr.mxu0 0.0
    %2919 = vmatpush1.msra.mxu0 0.0
    %2920 = vmatprep.subr.mxu0 0.0
    %2921 = vmatpush1.msra.mxu0 0.0
    %2922 = vmatprep.subr.mxu0 0.0
    %2923 = vmatpush1.msra.mxu0 0.0
    %2924 = vmatprep.subr.mxu0 0.0
    %2925 = vmatpush1.msra.mxu0 0.0
    %2926 = vmatprep.subr.mxu0 0.0
    %2927 = vmatpush1.msra.mxu0 0.0
    %2928 = vmatprep.subr.mxu0 0.0
    %2929 = vmatpush1.msra.mxu0 0.0
    %2930 = vmatprep.subr.mxu0 0.0
    %2931 = vmatpush1.msra.mxu0 0.0
    %2932 = vmatprep.subr.mxu0 0.0
    %2933 = vmatpush1.msra.mxu0 0.0
    %2934 = vmatprep.subr.mxu0 0.0
    %2935 = vmatpush1.msra.mxu0 0.0
    %2936 = vmatprep.subr.mxu0 0.0
    %2937 = vmatpush1.msra.mxu0 0.0
    %2938 = vmatprep.subr.mxu0 0.0
    %2939 = vmatpush1.msra.mxu0 0.0
    %2940 = vmatprep.subr.mxu0 0.0
    %2941 = vmatpush1.msra.mxu0 0.0
    %2942 = vmatprep.subr.mxu0 0.0
    %2943 = vmatpush1.msra.mxu0 0.0
    %2944 = vmatprep.subr.mxu0 0.0
    %2945 = vmatpush1.msra.mxu0 0.0
    %2946 = vmatprep.subr.mxu0 0.0
    %2947 = vmatpush1.msra.mxu0 0.0
    %2948 = vmatprep.mubr.f32.mxu0 0.0
    %2949 = vmatmul.mubr.f32.gmra.mrb[0].mxu0 %v2612
    %v2950 = vpop.f32.mrb[0].mxu0
    %v2951 = vadd.f32 0.0, %v2950
    %v2952 = vpop.f32.mrb[0].mxu0
    %2953 = vmatprep.mubr.f32.mxu0 0.0
    %2954 = vmatmul.mubr.f32.gmra.mrb[0].mxu0 %v2629
    %v2955 = vpop.f32.mrb[0].mxu0
    %v2956 = vadd.f32 0.0, %v2955
    %v2957 = vpop.f32.mrb[0].mxu0
    %2958 = vmatprep.mubr.f32.mxu0 0.0
    %2959 = vmatmul.mubr.f32.gmra.mrb[0].mxu0 %v2646
    %v2960 = vpop.f32.mrb[0].mxu0
    %v2961 = vadd.f32 0.0, %v2960
    %v2962 = vpop.f32.mrb[0].mxu0
    %2963 = vmatprep.mubr.f32.mxu0 0.0
    %2964 = vmatmul.mubr.f32.gmra.mrb[0].mxu0 %v2663
    %v2965 = vpop.f32.mrb[0].mxu0
    %v2966 = vadd.f32 0.0, %v2965
    %v2967 = vpop.f32.mrb[0].mxu0
    %2968 = vmatprep.mubr.f32.mxu0 0.0
    %2969 = vmatmul.mubr.f32.gmra.mrb[0].mxu0 %v2680
    %v2970 = vpop.f32.mrb[0].mxu0
    %v2971 = vadd.f32 0.0, %v2970
    %v2972 = vpop.f32.mrb[0].mxu0
    %2973 = vmatprep.mubr.f32.mxu0 0.0
    %2974 = vmatmul.mubr.f32.gmra.mrb[0].mxu0 %v2697
    %v2975 = vpop.f32.mrb[0].mxu0
    %v2976 = vadd.f32 0.0, %v2975
    %v2977 = vpop.f32.mrb[0].mxu0
    %2978 = vmatprep.mubr.f32.mxu0 0.0
    %2979 = vmatmul.mubr.f32.gmra.mrb[0].mxu0 %v2714
    %v2980 = vpop.f32.mrb[0].mxu0
    %v2981 = vadd.f32 0.0, %v2980
    %v2982 = vpop.f32.mrb[0].mxu0
    %2983 = vmatprep.mubr.f32.mxu0 0.0
    %2984 = vmatmul.mubr.f32.gmra.mrb[0].mxu0 %v2731
    %v2985 = vpop.f32.mrb[0].mxu0
    %v2986 = vadd.f32 0.0, %v2985
    %v2987 = vpop.f32.mrb[0].mxu0
    %2988 = vmatprep.mubr.f32.mxu0 0.0
    %2989 = vmatmul.mubr.f32.gmra.mrb[0].mxu0 %v2748
    %v2990 = vpop.f32.mrb[0].mxu0
    %v2991 = vadd.f32 0.0, %v2990
    %v2992 = vpop.f32.mrb[0].mxu0
    %2993 = vmatprep.mubr.f32.mxu0 0.0
    %2994 = vmatmul.mubr.f32.gmra.mrb[0].mxu0 %v2765
    %v2995 = vpop.f32.mrb[0].mxu0
    %v2996 = vadd.f32 0.0, %v2995
    %v2997 = vpop.f32.mrb[0].mxu0
    %2998 = vmatprep.mubr.f32.mxu0 0.0
    %2999 = vmatmul.mubr.f32.gmra.mrb[0].mxu0 %v2782
    %v3000 = vpop.f32.mrb[0].mxu0
    %v3001 = vadd.f32 0.0, %v3000
    %v3002 = vpop.f32.mrb[0].mxu0
    %3003 = vmatprep.mubr.f32.mxu0 0.0
    %3004 = vmatmul.mubr.f32.gmra.mrb[0].mxu0 %v2799
    %v3005 = vpop.f32.mrb[0].mxu0
    %v3006 = vadd.f32 0.0, %v3005
    %v3007 = vpop.f32.mrb[0].mxu0
    %3008 = vmatprep.mubr.f32.mxu0 0.0
    %3009 = vmatmul.mubr.f32.gmra.mrb[0].mxu0 %v2816
    %v3010 = vpop.f32.mrb[0].mxu0
    %v3011 = vadd.f32 0.0, %v3010
    %v3012 = vpop.f32.mrb[0].mxu0
    %3013 = vmatprep.mubr.f32.mxu0 0.0
    %3014 = vmatmul.mubr.f32.gmra.mrb[0].mxu0 %v2833
    %v3015 = vpop.f32.mrb[0].mxu0
    %v3016 = vadd.f32 0.0, %v3015
    %v3017 = vpop.f32.mrb[0].mxu0
    %3018 = vmatprep.mubr.f32.mxu0 0.0
    %3019 = vmatmul.mubr.f32.gmra.mrb[0].mxu0 %v2850
    %v3020 = vpop.f32.mrb[0].mxu0
    %v3021 = vadd.f32 0.0, %v3020
    %v3022 = vpop.f32.mrb[0].mxu0
    %3023 = vmatprep.mubr.f32.mxu0 0.0
    %3024 = vmatmul.mubr.f32.gmra.mrb[0].mxu0 %v2867
    %v3025 = vpop.f32.mrb[0].mxu0
    %v3026 = vadd.f32 0.0, %v3025
    %v3027 = vpop.f32.mrb[0].mxu0
    %3028 = vdwg.mxu0
    %v3029 = vadd.f32 %v2501, %v2951
    %v3030 = vadd.f32 %v2506, %v2956
    %v3031 = vadd.f32 %v2511, %v2961
    %v3032 = vadd.f32 %v2516, %v2966
    %v3033 = vadd.f32 %v2521, %v2971
    %v3034 = vadd.f32 %v2526, %v2976
    %v3035 = vadd.f32 %v2531, %v2981
    %v3036 = vadd.f32 %v2536, %v2986
    %v3037 = vadd.f32 %v2541, %v2991
    %v3038 = vadd.f32 %v2546, %v2996
    %v3039 = vadd.f32 %v2551, %v3001
    %v3040 = vadd.f32 %v2556, %v3006
    %v3041 = vadd.f32 %v2561, %v3011
    %v3042 = vadd.f32 %v2566, %v3016
    %v3043 = vadd.f32 %v2571, %v3021
    %v3044 = vadd.f32 %v2576, %v3026
    %s3045 = scalar_lea.vmem [#allocation8], 384
    %v3046 = vld [vmem:[%s3045] sm:$0xff]
    %v3047 = vld [vmem:[%s3045 + $0x8] sm:$0xff]
    %v3048 = vld [vmem:[%s3045 + $0x10] sm:$0xff]
    %v3049 = vld [vmem:[%s3045 + $0x18] sm:$0xff]
    %v3050 = vld [vmem:[%s3045 + $0x20] sm:$0xff]
    %v3051 = vld [vmem:[%s3045 + $0x28] sm:$0xff]
    %v3052 = vld [vmem:[%s3045 + $0x30] sm:$0xff]
    %v3053 = vld [vmem:[%s3045 + $0x38] sm:$0xff]
    %v3054 = vld [vmem:[%s3045 + $0x40] sm:$0xff]
    %v3055 = vld [vmem:[%s3045 + $0x48] sm:$0xff]
    %v3056 = vld [vmem:[%s3045 + $0x50] sm:$0xff]
    %v3057 = vld [vmem:[%s3045 + $0x58] sm:$0xff]
    %v3058 = vld [vmem:[%s3045 + $0x60] sm:$0xff]
    %v3059 = vld [vmem:[%s3045 + $0x68] sm:$0xff]
    %v3060 = vld [vmem:[%s3045 + $0x70] sm:$0xff]
    %v3061 = vld [vmem:[%s3045 + $0x78] sm:$0xff]
    %v3062 = vcombine.low %v2161, %v2171
    %v3063 = vcombine.low %v895, %v903
    %v3065 = vunpack.c.l.s4 1983009808
    %v3066 = vunpack.c.0.s8 %v3065
    %v3067 = vlaneseq
    %v3068 = vshrl.u32 %v3067, 7
    %v3069 = vsub.s32 %v3066, %v3068
    %v3070 = vrot.slane %v3063, %v3069
    %v3071 = vcombine.low %v2178, %v3070
    %v3072 = vcombine.low %v2195, %v2205
    %v3073 = vcombine.low %v970, %v972
    %v3075 = vunpack.c.l.s4 1983009808
    %v3076 = vunpack.c.0.s8 %v3075
    %v3077 = vlaneseq
    %v3078 = vshrl.u32 %v3077, 7
    %v3079 = vsub.s32 %v3076, %v3078
    %v3080 = vrot.slane %v3073, %v3079
    %v3081 = vcombine.low %v2212, %v3080
    %v3082 = vcombine.low %v2229, %v2239
    %v3083 = vcombine.low %v1048, %v1056
    %v3085 = vunpack.c.l.s4 1983009808
    %v3086 = vunpack.c.0.s8 %v3085
    %v3087 = vlaneseq
    %v3088 = vshrl.u32 %v3087, 7
    %v3089 = vsub.s32 %v3086, %v3088
    %v3090 = vrot.slane %v3083, %v3089
    %v3091 = vcombine.low %v2246, %v3090
    %v3092 = vcombine.low %v2263, %v2273
    %v3093 = vcombine.low %v1123, %v1125
    %v3095 = vunpack.c.l.s4 1983009808
    %v3096 = vunpack.c.0.s8 %v3095
    %v3097 = vlaneseq
    %v3098 = vshrl.u32 %v3097, 7
    %v3099 = vsub.s32 %v3096, %v3098
    %v3100 = vrot.slane %v3093, %v3099
    %v3101 = vcombine.low %v2280, %v3100
    %v3102 = vcombine.low %v2297, %v2307
    %v3103 = vcombine.low %v1201, %v1209
    %v3105 = vunpack.c.l.s4 1983009808
    %v3106 = vunpack.c.0.s8 %v3105
    %v3107 = vlaneseq
    %v3108 = vshrl.u32 %v3107, 7
    %v3109 = vsub.s32 %v3106, %v3108
    %v3110 = vrot.slane %v3103, %v3109
    %v3111 = vcombine.low %v2314, %v3110
    %v3112 = vcombine.low %v2331, %v2341
    %v3113 = vcombine.low %v1276, %v1278
    %v3115 = vunpack.c.l.s4 1983009808
    %v3116 = vunpack.c.0.s8 %v3115
    %v3117 = vlaneseq
    %v3118 = vshrl.u32 %v3117, 7
    %v3119 = vsub.s32 %v3116, %v3118
    %v3120 = vrot.slane %v3113, %v3119
    %v3121 = vcombine.low %v2348, %v3120
    %v3122 = vcombine.low %v2365, %v2375
    %v3123 = vcombine.low %v1354, %v1362
    %v3125 = vunpack.c.l.s4 1983009808
    %v3126 = vunpack.c.0.s8 %v3125
    %v3127 = vlaneseq
    %v3128 = vshrl.u32 %v3127, 7
    %v3129 = vsub.s32 %v3126, %v3128
    %v3130 = vrot.slane %v3123, %v3129
    %v3131 = vcombine.low %v2382, %v3130
    %v3132 = vcombine.low %v2399, %v2409
    %v3133 = vcombine.low %v1429, %v1431
    %v3135 = vunpack.c.l.s4 1983009808
    %v3136 = vunpack.c.0.s8 %v3135
    %v3137 = vlaneseq
    %v3138 = vshrl.u32 %v3137, 7
    %v3139 = vsub.s32 %v3136, %v3138
    %v3140 = vrot.slane %v3133, %v3139
    %v3141 = vcombine.low %v2416, %v3140
    %3158 = vmatprep.subr.mxu0 0.0
    %3159 = vmatpush1.msra.mxu0 %v3046
    %3160 = vmatprep.subr.mxu0 0.0
    %3161 = vmatpush1.msra.mxu0 %v3047
    %3162 = vmatprep.subr.mxu0 0.0
    %3163 = vmatpush1.msra.mxu0 %v3048
    %3164 = vmatprep.subr.mxu0 0.0
    %3165 = vmatpush1.msra.mxu0 %v3049
    %3166 = vmatprep.subr.mxu0 0.0
    %3167 = vmatpush1.msra.mxu0 %v3050
    %3168 = vmatprep.subr.mxu0 0.0
    %3169 = vmatpush1.msra.mxu0 %v3051
    %3170 = vmatprep.subr.mxu0 0.0
    %3171 = vmatpush1.msra.mxu0 %v3052
    %3172 = vmatprep.subr.mxu0 0.0
    %3173 = vmatpush1.msra.mxu0 %v3053
    %3174 = vmatprep.subr.mxu0 0.0
    %3175 = vmatpush1.msra.mxu0 %v3054
    %3176 = vmatprep.subr.mxu0 0.0
    %3177 = vmatpush1.msra.mxu0 %v3055
    %3178 = vmatprep.subr.mxu0 0.0
    %3179 = vmatpush1.msra.mxu0 %v3056
    %3180 = vmatprep.subr.mxu0 0.0
    %3181 = vmatpush1.msra.mxu0 %v3057
    %3182 = vmatprep.subr.mxu0 0.0
    %3183 = vmatpush1.msra.mxu0 %v3058
    %3184 = vmatprep.subr.mxu0 0.0
    %3185 = vmatpush1.msra.mxu0 %v3059
    %3186 = vmatprep.subr.mxu0 0.0
    %3187 = vmatpush1.msra.mxu0 %v3060
    %3188 = vmatprep.subr.mxu0 0.0
    %3189 = vmatpush1.msra.mxu0 %v3061
    %3190 = vmatprep.subr.mxu0 0.0
    %3191 = vmatpush1.msra.mxu0 0.0
    %3192 = vmatprep.subr.mxu0 0.0
    %3193 = vmatpush1.msra.mxu0 0.0
    %3194 = vmatprep.subr.mxu0 0.0
    %3195 = vmatpush1.msra.mxu0 0.0
    %3196 = vmatprep.subr.mxu0 0.0
    %3197 = vmatpush1.msra.mxu0 0.0
    %3198 = vmatprep.subr.mxu0 0.0
    %3199 = vmatpush1.msra.mxu0 0.0
    %3200 = vmatprep.subr.mxu0 0.0
    %3201 = vmatpush1.msra.mxu0 0.0
    %3202 = vmatprep.subr.mxu0 0.0
    %3203 = vmatpush1.msra.mxu0 0.0
    %3204 = vmatprep.subr.mxu0 0.0
    %3205 = vmatpush1.msra.mxu0 0.0
    %3206 = vmatprep.subr.mxu0 0.0
    %3207 = vmatpush1.msra.mxu0 0.0
    %3208 = vmatprep.subr.mxu0 0.0
    %3209 = vmatpush1.msra.mxu0 0.0
    %3210 = vmatprep.subr.mxu0 0.0
    %3211 = vmatpush1.msra.mxu0 0.0
    %3212 = vmatprep.subr.mxu0 0.0
    %3213 = vmatpush1.msra.mxu0 0.0
    %3214 = vmatprep.subr.mxu0 0.0
    %3215 = vmatpush1.msra.mxu0 0.0
    %3216 = vmatprep.subr.mxu0 0.0
    %3217 = vmatpush1.msra.mxu0 0.0
    %3218 = vmatprep.subr.mxu0 0.0
    %3219 = vmatpush1.msra.mxu0 0.0
    %3220 = vmatprep.subr.mxu0 0.0
    %3221 = vmatpush1.msra.mxu0 0.0
    %3222 = vmatprep.mubr.f32.mxu0 0.0
    %3223 = vmatmul.mubr.f32.gmra.mrb[0].mxu0 %v3062
    %v3224 = vpop.f32.mrb[0].mxu0
    %v3225 = vadd.f32 0.0, %v3224
    %v3226 = vpop.f32.mrb[0].mxu0
    %3227 = vmatprep.mubr.f32.mxu0 0.0
    %3228 = vmatmul.mubr.f32.gmra.mrb[0].mxu0 %v3071
    %v3229 = vpop.f32.mrb[0].mxu0
    %v3230 = vadd.f32 0.0, %v3229
    %v3231 = vpop.f32.mrb[0].mxu0
    %3232 = vmatprep.mubr.f32.mxu0 0.0
    %3233 = vmatmul.mubr.f32.gmra.mrb[0].mxu0 %v3072
    %v3234 = vpop.f32.mrb[0].mxu0
    %v3235 = vadd.f32 0.0, %v3234
    %v3236 = vpop.f32.mrb[0].mxu0
    %3237 = vmatprep.mubr.f32.mxu0 0.0
    %3238 = vmatmul.mubr.f32.gmra.mrb[0].mxu0 %v3081
    %v3239 = vpop.f32.mrb[0].mxu0
    %v3240 = vadd.f32 0.0, %v3239
    %v3241 = vpop.f32.mrb[0].mxu0
    %3242 = vmatprep.mubr.f32.mxu0 0.0
    %3243 = vmatmul.mubr.f32.gmra.mrb[0].mxu0 %v3082
    %v3244 = vpop.f32.mrb[0].mxu0
    %v3245 = vadd.f32 0.0, %v3244
    %v3246 = vpop.f32.mrb[0].mxu0
    %3247 = vmatprep.mubr.f32.mxu0 0.0
    %3248 = vmatmul.mubr.f32.gmra.mrb[0].mxu0 %v3091
    %v3249 = vpop.f32.mrb[0].mxu0
    %v3250 = vadd.f32 0.0, %v3249
    %v3251 = vpop.f32.mrb[0].mxu0
    %3252 = vmatprep.mubr.f32.mxu0 0.0
    %3253 = vmatmul.mubr.f32.gmra.mrb[0].mxu0 %v3092
    %v3254 = vpop.f32.mrb[0].mxu0
    %v3255 = vadd.f32 0.0, %v3254
    %v3256 = vpop.f32.mrb[0].mxu0
    %3257 = vmatprep.mubr.f32.mxu0 0.0
    %3258 = vmatmul.mubr.f32.gmra.mrb[0].mxu0 %v3101
    %v3259 = vpop.f32.mrb[0].mxu0
    %v3260 = vadd.f32 0.0, %v3259
    %v3261 = vpop.f32.mrb[0].mxu0
    %3262 = vmatprep.mubr.f32.mxu0 0.0
    %3263 = vmatmul.mubr.f32.gmra.mrb[0].mxu0 %v3102
    %v3264 = vpop.f32.mrb[0].mxu0
    %v3265 = vadd.f32 0.0, %v3264
    %v3266 = vpop.f32.mrb[0].mxu0
    %3267 = vmatprep.mubr.f32.mxu0 0.0
    %3268 = vmatmul.mubr.f32.gmra.mrb[0].mxu0 %v3111
    %v3269 = vpop.f32.mrb[0].mxu0
    %v3270 = vadd.f32 0.0, %v3269
    %v3271 = vpop.f32.mrb[0].mxu0
    %3272 = vmatprep.mubr.f32.mxu0 0.0
    %3273 = vmatmul.mubr.f32.gmra.mrb[0].mxu0 %v3112
    %v3274 = vpop.f32.mrb[0].mxu0
    %v3275 = vadd.f32 0.0, %v3274
    %v3276 = vpop.f32.mrb[0].mxu0
    %3277 = vmatprep.mubr.f32.mxu0 0.0
    %3278 = vmatmul.mubr.f32.gmra.mrb[0].mxu0 %v3121
    %v3279 = vpop.f32.mrb[0].mxu0
    %v3280 = vadd.f32 0.0, %v3279
    %v3281 = vpop.f32.mrb[0].mxu0
    %3282 = vmatprep.mubr.f32.mxu0 0.0
    %3283 = vmatmul.mubr.f32.gmra.mrb[0].mxu0 %v3122
    %v3284 = vpop.f32.mrb[0].mxu0
    %v3285 = vadd.f32 0.0, %v3284
    %v3286 = vpop.f32.mrb[0].mxu0
    %3287 = vmatprep.mubr.f32.mxu0 0.0
    %3288 = vmatmul.mubr.f32.gmra.mrb[0].mxu0 %v3131
    %v3289 = vpop.f32.mrb[0].mxu0
    %v3290 = vadd.f32 0.0, %v3289
    %v3291 = vpop.f32.mrb[0].mxu0
    %3292 = vmatprep.mubr.f32.mxu0 0.0
    %3293 = vmatmul.mubr.f32.gmra.mrb[0].mxu0 %v3132
    %v3294 = vpop.f32.mrb[0].mxu0
    %v3295 = vadd.f32 0.0, %v3294
    %v3296 = vpop.f32.mrb[0].mxu0
    %3297 = vmatprep.mubr.f32.mxu0 0.0
    %3298 = vmatmul.mubr.f32.gmra.mrb[0].mxu0 %v3141
    %v3299 = vpop.f32.mrb[0].mxu0
    %v3300 = vadd.f32 0.0, %v3299
    %v3301 = vpop.f32.mrb[0].mxu0
    %3302 = vdwg.mxu0
    %v3303 = vadd.f32 %v3029, %v3225
    %v3304 = vadd.f32 %v3030, %v3230
    %v3305 = vadd.f32 %v3031, %v3235
    %v3306 = vadd.f32 %v3032, %v3240
    %v3307 = vadd.f32 %v3033, %v3245
    %v3308 = vadd.f32 %v3034, %v3250
    %v3309 = vadd.f32 %v3035, %v3255
    %v3310 = vadd.f32 %v3036, %v3260
    %v3311 = vadd.f32 %v3037, %v3265
    %v3312 = vadd.f32 %v3038, %v3270
    %v3313 = vadd.f32 %v3039, %v3275
    %v3314 = vadd.f32 %v3040, %v3280
    %v3315 = vadd.f32 %v3041, %v3285
    %v3316 = vadd.f32 %v3042, %v3290
    %v3317 = vadd.f32 %v3043, %v3295
    %v3318 = vadd.f32 %v3044, %v3300
    %v3319 = vrot.slane %v895, 7
    %v3320 = vrot.slane %v3319, 2
    %v3321 = vrot.slane %v903, 7
    %v3322 = vsel %vm1471, %v3320, %v3321
    %v3323 = vrot.slane %v3321, 2
    %v3324 = vrot.slane %v902, 7
    %v3325 = vsel %vm1471, %v3323, %v3324
    %v3326 = vrot.slane %v970, 7
    %v3327 = vrot.slane %v3326, 2
    %v3328 = vrot.slane %v972, 7
    %v3329 = vsel %vm1471, %v3327, %v3328
    %v3330 = vrot.slane %v3328, 2
    %v3331 = vrot.slane %v980, 7
    %v3332 = vsel %vm1471, %v3330, %v3331
    %v3333 = vrot.slane %v1048, 7
    %v3334 = vrot.slane %v3333, 2
    %v3335 = vrot.slane %v1056, 7
    %v3336 = vsel %vm1471, %v3334, %v3335
    %v3337 = vrot.slane %v3335, 2
    %v3338 = vrot.slane %v1055, 7
    %v3339 = vsel %vm1471, %v3337, %v3338
    %v3340 = vrot.slane %v1123, 7
    %v3341 = vrot.slane %v3340, 2
    %v3342 = vrot.slane %v1125, 7
    %v3343 = vsel %vm1471, %v3341, %v3342
    %v3344 = vrot.slane %v3342, 2
    %v3345 = vrot.slane %v1133, 7
    %v3346 = vsel %vm1471, %v3344, %v3345
    %v3347 = vrot.slane %v1201, 7
    %v3348 = vrot.slane %v3347, 2
    %v3349 = vrot.slane %v1209, 7
    %v3350 = vsel %vm1471, %v3348, %v3349
    %v3351 = vrot.slane %v3349, 2
    %v3352 = vrot.slane %v1208, 7
    %v3353 = vsel %vm1471, %v3351, %v3352
    %v3354 = vrot.slane %v1276, 7
    %v3355 = vrot.slane %v3354, 2
    %v3356 = vrot.slane %v1278, 7
    %v3357 = vsel %vm1471, %v3355, %v3356
    %v3358 = vrot.slane %v3356, 2
    %v3359 = vrot.slane %v1286, 7
    %v3360 = vsel %vm1471, %v3358, %v3359
    %v3361 = vrot.slane %v1354, 7
    %v3362 = vrot.slane %v3361, 2
    %v3363 = vrot.slane %v1362, 7
    %v3364 = vsel %vm1471, %v3362, %v3363
    %v3365 = vrot.slane %v3363, 2
    %v3366 = vrot.slane %v1361, 7
    %v3367 = vsel %vm1471, %v3365, %v3366
    %v3368 = vrot.slane %v1429, 7
    %v3369 = vrot.slane %v3368, 2
    %v3370 = vrot.slane %v1431, 7
    %v3371 = vsel %vm1471, %v3369, %v3370
    %v3372 = vrot.slane %v3370, 2
    %v3373 = vrot.slane %v1439, 7
    %v3374 = vsel %vm1471, %v3372, %v3373
    %s3375 = scalar_lea.vmem [#allocation8], 512
    %v3376 = vld [vmem:[%s3375] sm:$0xff]
    %v3377 = vld [vmem:[%s3375 + $0x8] sm:$0xff]
    %v3378 = vld [vmem:[%s3375 + $0x10] sm:$0xff]
    %v3379 = vld [vmem:[%s3375 + $0x18] sm:$0xff]
    %v3380 = vld [vmem:[%s3375 + $0x20] sm:$0xff]
    %v3381 = vld [vmem:[%s3375 + $0x28] sm:$0xff]
    %v3382 = vld [vmem:[%s3375 + $0x30] sm:$0xff]
    %v3383 = vld [vmem:[%s3375 + $0x38] sm:$0xff]
    %v3384 = vld [vmem:[%s3375 + $0x40] sm:$0xff]
    %v3385 = vld [vmem:[%s3375 + $0x48] sm:$0xff]
    %v3386 = vld [vmem:[%s3375 + $0x50] sm:$0xff]
    %v3387 = vld [vmem:[%s3375 + $0x58] sm:$0xff]
    %v3388 = vld [vmem:[%s3375 + $0x60] sm:$0xff]
    %v3389 = vld [vmem:[%s3375 + $0x68] sm:$0xff]
    %v3390 = vld [vmem:[%s3375 + $0x70] sm:$0xff]
    %v3391 = vld [vmem:[%s3375 + $0x78] sm:$0xff]
    %v3392 = vcombine.low %v1728, %v1738
    %v3393 = vcombine.low %v3322, %v3325
    %v3395 = vunpack.c.l.s4 1983009808
    %v3396 = vunpack.c.0.s8 %v3395
    %v3397 = vlaneseq
    %v3398 = vshrl.u32 %v3397, 7
    %v3399 = vsub.s32 %v3396, %v3398
    %v3400 = vrot.slane %v3393, %v3399
    %v3401 = vcombine.low %v1745, %v3400
    %v3402 = vcombine.low %v1762, %v1772
    %v3403 = vcombine.low %v3329, %v3332
    %v3405 = vunpack.c.l.s4 1983009808
    %v3406 = vunpack.c.0.s8 %v3405
    %v3407 = vlaneseq
    %v3408 = vshrl.u32 %v3407, 7
    %v3409 = vsub.s32 %v3406, %v3408
    %v3410 = vrot.slane %v3403, %v3409
    %v3411 = vcombine.low %v1779, %v3410
    %v3412 = vcombine.low %v1796, %v1806
    %v3413 = vcombine.low %v3336, %v3339
    %v3415 = vunpack.c.l.s4 1983009808
    %v3416 = vunpack.c.0.s8 %v3415
    %v3417 = vlaneseq
    %v3418 = vshrl.u32 %v3417, 7
    %v3419 = vsub.s32 %v3416, %v3418
    %v3420 = vrot.slane %v3413, %v3419
    %v3421 = vcombine.low %v1813, %v3420
    %v3422 = vcombine.low %v1830, %v1840
    %v3423 = vcombine.low %v3343, %v3346
    %v3425 = vunpack.c.l.s4 1983009808
    %v3426 = vunpack.c.0.s8 %v3425
    %v3427 = vlaneseq
    %v3428 = vshrl.u32 %v3427, 7
    %v3429 = vsub.s32 %v3426, %v3428
    %v3430 = vrot.slane %v3423, %v3429
    %v3431 = vcombine.low %v1847, %v3430
    %v3432 = vcombine.low %v1864, %v1874
    %v3433 = vcombine.low %v3350, %v3353
    %v3435 = vunpack.c.l.s4 1983009808
    %v3436 = vunpack.c.0.s8 %v3435
    %v3437 = vlaneseq
    %v3438 = vshrl.u32 %v3437, 7
    %v3439 = vsub.s32 %v3436, %v3438
    %v3440 = vrot.slane %v3433, %v3439
    %v3441 = vcombine.low %v1881, %v3440
    %v3442 = vcombine.low %v1898, %v1908
    %v3443 = vcombine.low %v3357, %v3360
    %v3445 = vunpack.c.l.s4 1983009808
    %v3446 = vunpack.c.0.s8 %v3445
    %v3447 = vlaneseq
    %v3448 = vshrl.u32 %v3447, 7
    %v3449 = vsub.s32 %v3446, %v3448
    %v3450 = vrot.slane %v3443, %v3449
    %v3451 = vcombine.low %v1915, %v3450
    %v3452 = vcombine.low %v1932, %v1942
    %v3453 = vcombine.low %v3364, %v3367
    %v3455 = vunpack.c.l.s4 1983009808
    %v3456 = vunpack.c.0.s8 %v3455
    %v3457 = vlaneseq
    %v3458 = vshrl.u32 %v3457, 7
    %v3459 = vsub.s32 %v3456, %v3458
    %v3460 = vrot.slane %v3453, %v3459
    %v3461 = vcombine.low %v1949, %v3460
    %v3462 = vcombine.low %v1966, %v1976
    %v3463 = vcombine.low %v3371, %v3374
    %v3465 = vunpack.c.l.s4 1983009808
    %v3466 = vunpack.c.0.s8 %v3465
    %v3467 = vlaneseq
    %v3468 = vshrl.u32 %v3467, 7
    %v3469 = vsub.s32 %v3466, %v3468
    %v3470 = vrot.slane %v3463, %v3469
    %v3471 = vcombine.low %v1983, %v3470
    %3488 = vmatprep.subr.mxu0 0.0
    %3489 = vmatpush1.msra.mxu0 %v3376
    %3490 = vmatprep.subr.mxu0 0.0
    %3491 = vmatpush1.msra.mxu0 %v3377
    %3492 = vmatprep.subr.mxu0 0.0
    %3493 = vmatpush1.msra.mxu0 %v3378
    %3494 = vmatprep.subr.mxu0 0.0
    %3495 = vmatpush1.msra.mxu0 %v3379
    %3496 = vmatprep.subr.mxu0 0.0
    %3497 = vmatpush1.msra.mxu0 %v3380
    %3498 = vmatprep.subr.mxu0 0.0
    %3499 = vmatpush1.msra.mxu0 %v3381
    %3500 = vmatprep.subr.mxu0 0.0
    %3501 = vmatpush1.msra.mxu0 %v3382
    %3502 = vmatprep.subr.mxu0 0.0
    %3503 = vmatpush1.msra.mxu0 %v3383
    %3504 = vmatprep.subr.mxu0 0.0
    %3505 = vmatpush1.msra.mxu0 %v3384
    %3506 = vmatprep.subr.mxu0 0.0
    %3507 = vmatpush1.msra.mxu0 %v3385
    %3508 = vmatprep.subr.mxu0 0.0
    %3509 = vmatpush1.msra.mxu0 %v3386
    %3510 = vmatprep.subr.mxu0 0.0
    %3511 = vmatpush1.msra.mxu0 %v3387
    %3512 = vmatprep.subr.mxu0 0.0
    %3513 = vmatpush1.msra.mxu0 %v3388
    %3514 = vmatprep.subr.mxu0 0.0
    %3515 = vmatpush1.msra.mxu0 %v3389
    %3516 = vmatprep.subr.mxu0 0.0
    %3517 = vmatpush1.msra.mxu0 %v3390
    %3518 = vmatprep.subr.mxu0 0.0
    %3519 = vmatpush1.msra.mxu0 %v3391
    %3520 = vmatprep.subr.mxu0 0.0
    %3521 = vmatpush1.msra.mxu0 0.0
    %3522 = vmatprep.subr.mxu0 0.0
    %3523 = vmatpush1.msra.mxu0 0.0
    %3524 = vmatprep.subr.mxu0 0.0
    %3525 = vmatpush1.msra.mxu0 0.0
    %3526 = vmatprep.subr.mxu0 0.0
    %3527 = vmatpush1.msra.mxu0 0.0
    %3528 = vmatprep.subr.mxu0 0.0
    %3529 = vmatpush1.msra.mxu0 0.0
    %3530 = vmatprep.subr.mxu0 0.0
    %3531 = vmatpush1.msra.mxu0 0.0
    %3532 = vmatprep.subr.mxu0 0.0
    %3533 = vmatpush1.msra.mxu0 0.0
    %3534 = vmatprep.subr.mxu0 0.0
    %3535 = vmatpush1.msra.mxu0 0.0
    %3536 = vmatprep.subr.mxu0 0.0
    %3537 = vmatpush1.msra.mxu0 0.0
    %3538 = vmatprep.subr.mxu0 0.0
    %3539 = vmatpush1.msra.mxu0 0.0
    %3540 = vmatprep.subr.mxu0 0.0
    %3541 = vmatpush1.msra.mxu0 0.0
    %3542 = vmatprep.subr.mxu0 0.0
    %3543 = vmatpush1.msra.mxu0 0.0
    %3544 = vmatprep.subr.mxu0 0.0
    %3545 = vmatpush1.msra.mxu0 0.0
    %3546 = vmatprep.subr.mxu0 0.0
    %3547 = vmatpush1.msra.mxu0 0.0
    %3548 = vmatprep.subr.mxu0 0.0
    %3549 = vmatpush1.msra.mxu0 0.0
    %3550 = vmatprep.subr.mxu0 0.0
    %3551 = vmatpush1.msra.mxu0 0.0
    %3552 = vmatprep.mubr.f32.mxu0 0.0
    %3553 = vmatmul.mubr.f32.gmra.mrb[0].mxu0 %v3392
    %v3554 = vpop.f32.mrb[0].mxu0
    %v3555 = vadd.f32 0.0, %v3554
    %v3556 = vpop.f32.mrb[0].mxu0
    %3557 = vmatprep.mubr.f32.mxu0 0.0
    %3558 = vmatmul.mubr.f32.gmra.mrb[0].mxu0 %v3401
    %v3559 = vpop.f32.mrb[0].mxu0
    %v3560 = vadd.f32 0.0, %v3559
    %v3561 = vpop.f32.mrb[0].mxu0
    %3562 = vmatprep.mubr.f32.mxu0 0.0
    %3563 = vmatmul.mubr.f32.gmra.mrb[0].mxu0 %v3402
    %v3564 = vpop.f32.mrb[0].mxu0
    %v3565 = vadd.f32 0.0, %v3564
    %v3566 = vpop.f32.mrb[0].mxu0
    %3567 = vmatprep.mubr.f32.mxu0 0.0
    %3568 = vmatmul.mubr.f32.gmra.mrb[0].mxu0 %v3411
    %v3569 = vpop.f32.mrb[0].mxu0
    %v3570 = vadd.f32 0.0, %v3569
    %v3571 = vpop.f32.mrb[0].mxu0
    %3572 = vmatprep.mubr.f32.mxu0 0.0
    %3573 = vmatmul.mubr.f32.gmra.mrb[0].mxu0 %v3412
    %v3574 = vpop.f32.mrb[0].mxu0
    %v3575 = vadd.f32 0.0, %v3574
    %v3576 = vpop.f32.mrb[0].mxu0
    %3577 = vmatprep.mubr.f32.mxu0 0.0
    %3578 = vmatmul.mubr.f32.gmra.mrb[0].mxu0 %v3421
    %v3579 = vpop.f32.mrb[0].mxu0
    %v3580 = vadd.f32 0.0, %v3579
    %v3581 = vpop.f32.mrb[0].mxu0
    %3582 = vmatprep.mubr.f32.mxu0 0.0
    %3583 = vmatmul.mubr.f32.gmra.mrb[0].mxu0 %v3422
    %v3584 = vpop.f32.mrb[0].mxu0
    %v3585 = vadd.f32 0.0, %v3584
    %v3586 = vpop.f32.mrb[0].mxu0
    %3587 = vmatprep.mubr.f32.mxu0 0.0
    %3588 = vmatmul.mubr.f32.gmra.mrb[0].mxu0 %v3431
    %v3589 = vpop.f32.mrb[0].mxu0
    %v3590 = vadd.f32 0.0, %v3589
    %v3591 = vpop.f32.mrb[0].mxu0
    %3592 = vmatprep.mubr.f32.mxu0 0.0
    %3593 = vmatmul.mubr.f32.gmra.mrb[0].mxu0 %v3432
    %v3594 = vpop.f32.mrb[0].mxu0
    %v3595 = vadd.f32 0.0, %v3594
    %v3596 = vpop.f32.mrb[0].mxu0
    %3597 = vmatprep.mubr.f32.mxu0 0.0
    %3598 = vmatmul.mubr.f32.gmra.mrb[0].mxu0 %v3441
    %v3599 = vpop.f32.mrb[0].mxu0
    %v3600 = vadd.f32 0.0, %v3599
    %v3601 = vpop.f32.mrb[0].mxu0
    %3602 = vmatprep.mubr.f32.mxu0 0.0
    %3603 = vmatmul.mubr.f32.gmra.mrb[0].mxu0 %v3442
    %v3604 = vpop.f32.mrb[0].mxu0
    %v3605 = vadd.f32 0.0, %v3604
    %v3606 = vpop.f32.mrb[0].mxu0
    %3607 = vmatprep.mubr.f32.mxu0 0.0
    %3608 = vmatmul.mubr.f32.gmra.mrb[0].mxu0 %v3451
    %v3609 = vpop.f32.mrb[0].mxu0
    %v3610 = vadd.f32 0.0, %v3609
    %v3611 = vpop.f32.mrb[0].mxu0
    %3612 = vmatprep.mubr.f32.mxu0 0.0
    %3613 = vmatmul.mubr.f32.gmra.mrb[0].mxu0 %v3452
    %v3614 = vpop.f32.mrb[0].mxu0
    %v3615 = vadd.f32 0.0, %v3614
    %v3616 = vpop.f32.mrb[0].mxu0
    %3617 = vmatprep.mubr.f32.mxu0 0.0
    %3618 = vmatmul.mubr.f32.gmra.mrb[0].mxu0 %v3461
    %v3619 = vpop.f32.mrb[0].mxu0
    %v3620 = vadd.f32 0.0, %v3619
    %v3621 = vpop.f32.mrb[0].mxu0
    %3622 = vmatprep.mubr.f32.mxu0 0.0
    %3623 = vmatmul.mubr.f32.gmra.mrb[0].mxu0 %v3462
    %v3624 = vpop.f32.mrb[0].mxu0
    %v3625 = vadd.f32 0.0, %v3624
    %v3626 = vpop.f32.mrb[0].mxu0
    %3627 = vmatprep.mubr.f32.mxu0 0.0
    %3628 = vmatmul.mubr.f32.gmra.mrb[0].mxu0 %v3471
    %v3629 = vpop.f32.mrb[0].mxu0
    %v3630 = vadd.f32 0.0, %v3629
    %v3631 = vpop.f32.mrb[0].mxu0
    %3632 = vdwg.mxu0
    %v3633 = vadd.f32 %v3303, %v3555
    %v3634 = vadd.f32 %v3304, %v3560
    %v3635 = vadd.f32 %v3305, %v3565
    %v3636 = vadd.f32 %v3306, %v3570
    %v3637 = vadd.f32 %v3307, %v3575
    %v3638 = vadd.f32 %v3308, %v3580
    %v3639 = vadd.f32 %v3309, %v3585
    %v3640 = vadd.f32 %v3310, %v3590
    %v3641 = vadd.f32 %v3311, %v3595
    %v3642 = vadd.f32 %v3312, %v3600
    %v3643 = vadd.f32 %v3313, %v3605
    %v3644 = vadd.f32 %v3314, %v3610
    %v3645 = vadd.f32 %v3315, %v3615
    %v3646 = vadd.f32 %v3316, %v3620
    %v3647 = vadd.f32 %v3317, %v3625
    %v3648 = vadd.f32 %v3318, %v3630
    %s3649 = scalar_lea.vmem [#allocation8], 640
    %v3650 = vld [vmem:[%s3649] sm:$0xff]
    %v3651 = vld [vmem:[%s3649 + $0x8] sm:$0xff]
    %v3652 = vld [vmem:[%s3649 + $0x10] sm:$0xff]
    %v3653 = vld [vmem:[%s3649 + $0x18] sm:$0xff]
    %v3654 = vld [vmem:[%s3649 + $0x20] sm:$0xff]
    %v3655 = vld [vmem:[%s3649 + $0x28] sm:$0xff]
    %v3656 = vld [vmem:[%s3649 + $0x30] sm:$0xff]
    %v3657 = vld [vmem:[%s3649 + $0x38] sm:$0xff]
    %v3658 = vld [vmem:[%s3649 + $0x40] sm:$0xff]
    %v3659 = vld [vmem:[%s3649 + $0x48] sm:$0xff]
    %v3660 = vld [vmem:[%s3649 + $0x50] sm:$0xff]
    %v3661 = vld [vmem:[%s3649 + $0x58] sm:$0xff]
    %v3662 = vld [vmem:[%s3649 + $0x60] sm:$0xff]
    %v3663 = vld [vmem:[%s3649 + $0x68] sm:$0xff]
    %v3664 = vld [vmem:[%s3649 + $0x70] sm:$0xff]
    %v3665 = vld [vmem:[%s3649 + $0x78] sm:$0xff]
    %v3666 = vcombine.low %v2611, %v2621
    %v3667 = vcombine.low %v903, %v902
    %v3669 = vunpack.c.l.s4 1983009808
    %v3670 = vunpack.c.0.s8 %v3669
    %v3671 = vlaneseq
    %v3672 = vshrl.u32 %v3671, 7
    %v3673 = vsub.s32 %v3670, %v3672
    %v3674 = vrot.slane %v3667, %v3673
    %v3675 = vcombine.low %v2628, %v3674
    %v3676 = vcombine.low %v2645, %v2655
    %v3677 = vcombine.low %v972, %v980
    %v3679 = vunpack.c.l.s4 1983009808
    %v3680 = vunpack.c.0.s8 %v3679
    %v3681 = vlaneseq
    %v3682 = vshrl.u32 %v3681, 7
    %v3683 = vsub.s32 %v3680, %v3682
    %v3684 = vrot.slane %v3677, %v3683
    %v3685 = vcombine.low %v2662, %v3684
    %v3686 = vcombine.low %v2679, %v2689
    %v3687 = vcombine.low %v1056, %v1055
    %v3689 = vunpack.c.l.s4 1983009808
    %v3690 = vunpack.c.0.s8 %v3689
    %v3691 = vlaneseq
    %v3692 = vshrl.u32 %v3691, 7
    %v3693 = vsub.s32 %v3690, %v3692
    %v3694 = vrot.slane %v3687, %v3693
    %v3695 = vcombine.low %v2696, %v3694
    %v3696 = vcombine.low %v2713, %v2723
    %v3697 = vcombine.low %v1125, %v1133
    %v3699 = vunpack.c.l.s4 1983009808
    %v3700 = vunpack.c.0.s8 %v3699
    %v3701 = vlaneseq
    %v3702 = vshrl.u32 %v3701, 7
    %v3703 = vsub.s32 %v3700, %v3702
    %v3704 = vrot.slane %v3697, %v3703
    %v3705 = vcombine.low %v2730, %v3704
    %v3706 = vcombine.low %v2747, %v2757
    %v3707 = vcombine.low %v1209, %v1208
    %v3709 = vunpack.c.l.s4 1983009808
    %v3710 = vunpack.c.0.s8 %v3709
    %v3711 = vlaneseq
    %v3712 = vshrl.u32 %v3711, 7
    %v3713 = vsub.s32 %v3710, %v3712
    %v3714 = vrot.slane %v3707, %v3713
    %v3715 = vcombine.low %v2764, %v3714
    %v3716 = vcombine.low %v2781, %v2791
    %v3717 = vcombine.low %v1278, %v1286
    %v3719 = vunpack.c.l.s4 1983009808
    %v3720 = vunpack.c.0.s8 %v3719
    %v3721 = vlaneseq
    %v3722 = vshrl.u32 %v3721, 7
    %v3723 = vsub.s32 %v3720, %v3722
    %v3724 = vrot.slane %v3717, %v3723
    %v3725 = vcombine.low %v2798, %v3724
    %v3726 = vcombine.low %v2815, %v2825
    %v3727 = vcombine.low %v1362, %v1361
    %v3729 = vunpack.c.l.s4 1983009808
    %v3730 = vunpack.c.0.s8 %v3729
    %v3731 = vlaneseq
    %v3732 = vshrl.u32 %v3731, 7
    %v3733 = vsub.s32 %v3730, %v3732
    %v3734 = vrot.slane %v3727, %v3733
    %v3735 = vcombine.low %v2832, %v3734
    %v3736 = vcombine.low %v2849, %v2859
    %v3737 = vcombine.low %v1431, %v1439
    %v3739 = vunpack.c.l.s4 1983009808
    %v3740 = vunpack.c.0.s8 %v3739
    %v3741 = vlaneseq
    %v3742 = vshrl.u32 %v3741, 7
    %v3743 = vsub.s32 %v3740, %v3742
    %v3744 = vrot.slane %v3737, %v3743
    %v3745 = vcombine.low %v2866, %v3744
    %3762 = vmatprep.subr.mxu0 0.0
    %3763 = vmatpush1.msra.mxu0 %v3650
    %3764 = vmatprep.subr.mxu0 0.0
    %3765 = vmatpush1.msra.mxu0 %v3651
    %3766 = vmatprep.subr.mxu0 0.0
    %3767 = vmatpush1.msra.mxu0 %v3652
    %3768 = vmatprep.subr.mxu0 0.0
    %3769 = vmatpush1.msra.mxu0 %v3653
    %3770 = vmatprep.subr.mxu0 0.0
    %3771 = vmatpush1.msra.mxu0 %v3654
    %3772 = vmatprep.subr.mxu0 0.0
    %3773 = vmatpush1.msra.mxu0 %v3655
    %3774 = vmatprep.subr.mxu0 0.0
    %3775 = vmatpush1.msra.mxu0 %v3656
    %3776 = vmatprep.subr.mxu0 0.0
    %3777 = vmatpush1.msra.mxu0 %v3657
    %3778 = vmatprep.subr.mxu0 0.0
    %3779 = vmatpush1.msra.mxu0 %v3658
    %3780 = vmatprep.subr.mxu0 0.0
    %3781 = vmatpush1.msra.mxu0 %v3659
    %3782 = vmatprep.subr.mxu0 0.0
    %3783 = vmatpush1.msra.mxu0 %v3660
    %3784 = vmatprep.subr.mxu0 0.0
    %3785 = vmatpush1.msra.mxu0 %v3661
    %3786 = vmatprep.subr.mxu0 0.0
    %3787 = vmatpush1.msra.mxu0 %v3662
    %3788 = vmatprep.subr.mxu0 0.0
    %3789 = vmatpush1.msra.mxu0 %v3663
    %3790 = vmatprep.subr.mxu0 0.0
    %3791 = vmatpush1.msra.mxu0 %v3664
    %3792 = vmatprep.subr.mxu0 0.0
    %3793 = vmatpush1.msra.mxu0 %v3665
    %3794 = vmatprep.subr.mxu0 0.0
    %3795 = vmatpush1.msra.mxu0 0.0
    %3796 = vmatprep.subr.mxu0 0.0
    %3797 = vmatpush1.msra.mxu0 0.0
    %3798 = vmatprep.subr.mxu0 0.0
    %3799 = vmatpush1.msra.mxu0 0.0
    %3800 = vmatprep.subr.mxu0 0.0
    %3801 = vmatpush1.msra.mxu0 0.0
    %3802 = vmatprep.subr.mxu0 0.0
    %3803 = vmatpush1.msra.mxu0 0.0
    %3804 = vmatprep.subr.mxu0 0.0
    %3805 = vmatpush1.msra.mxu0 0.0
    %3806 = vmatprep.subr.mxu0 0.0
    %3807 = vmatpush1.msra.mxu0 0.0
    %3808 = vmatprep.subr.mxu0 0.0
    %3809 = vmatpush1.msra.mxu0 0.0
    %3810 = vmatprep.subr.mxu0 0.0
    %3811 = vmatpush1.msra.mxu0 0.0
    %3812 = vmatprep.subr.mxu0 0.0
    %3813 = vmatpush1.msra.mxu0 0.0
    %3814 = vmatprep.subr.mxu0 0.0
    %3815 = vmatpush1.msra.mxu0 0.0
    %3816 = vmatprep.subr.mxu0 0.0
    %3817 = vmatpush1.msra.mxu0 0.0
    %3818 = vmatprep.subr.mxu0 0.0
    %3819 = vmatpush1.msra.mxu0 0.0
    %3820 = vmatprep.subr.mxu0 0.0
    %3821 = vmatpush1.msra.mxu0 0.0
    %3822 = vmatprep.subr.mxu0 0.0
    %3823 = vmatpush1.msra.mxu0 0.0
    %3824 = vmatprep.subr.mxu0 0.0
    %3825 = vmatpush1.msra.mxu0 0.0
    %3826 = vmatprep.mubr.f32.mxu0 0.0
    %3827 = vmatmul.mubr.f32.gmra.mrb[0].mxu0 %v3666
    %v3828 = vpop.f32.mrb[0].mxu0
    %v3829 = vadd.f32 0.0, %v3828
    %v3830 = vpop.f32.mrb[0].mxu0
    %3831 = vmatprep.mubr.f32.mxu0 0.0
    %3832 = vmatmul.mubr.f32.gmra.mrb[0].mxu0 %v3675
    %v3833 = vpop.f32.mrb[0].mxu0
    %v3834 = vadd.f32 0.0, %v3833
    %v3835 = vpop.f32.mrb[0].mxu0
    %3836 = vmatprep.mubr.f32.mxu0 0.0
    %3837 = vmatmul.mubr.f32.gmra.mrb[0].mxu0 %v3676
    %v3838 = vpop.f32.mrb[0].mxu0
    %v3839 = vadd.f32 0.0, %v3838
    %v3840 = vpop.f32.mrb[0].mxu0
    %3841 = vmatprep.mubr.f32.mxu0 0.0
    %3842 = vmatmul.mubr.f32.gmra.mrb[0].mxu0 %v3685
    %v3843 = vpop.f32.mrb[0].mxu0
    %v3844 = vadd.f32 0.0, %v3843
    %v3845 = vpop.f32.mrb[0].mxu0
    %3846 = vmatprep.mubr.f32.mxu0 0.0
    %3847 = vmatmul.mubr.f32.gmra.mrb[0].mxu0 %v3686
    %v3848 = vpop.f32.mrb[0].mxu0
    %v3849 = vadd.f32 0.0, %v3848
    %v3850 = vpop.f32.mrb[0].mxu0
    %3851 = vmatprep.mubr.f32.mxu0 0.0
    %3852 = vmatmul.mubr.f32.gmra.mrb[0].mxu0 %v3695
    %v3853 = vpop.f32.mrb[0].mxu0
    %v3854 = vadd.f32 0.0, %v3853
    %v3855 = vpop.f32.mrb[0].mxu0
    %3856 = vmatprep.mubr.f32.mxu0 0.0
    %3857 = vmatmul.mubr.f32.gmra.mrb[0].mxu0 %v3696
    %v3858 = vpop.f32.mrb[0].mxu0
    %v3859 = vadd.f32 0.0, %v3858
    %v3860 = vpop.f32.mrb[0].mxu0
    %3861 = vmatprep.mubr.f32.mxu0 0.0
    %3862 = vmatmul.mubr.f32.gmra.mrb[0].mxu0 %v3705
    %v3863 = vpop.f32.mrb[0].mxu0
    %v3864 = vadd.f32 0.0, %v3863
    %v3865 = vpop.f32.mrb[0].mxu0
    %3866 = vmatprep.mubr.f32.mxu0 0.0
    %3867 = vmatmul.mubr.f32.gmra.mrb[0].mxu0 %v3706
    %v3868 = vpop.f32.mrb[0].mxu0
    %v3869 = vadd.f32 0.0, %v3868
    %v3870 = vpop.f32.mrb[0].mxu0
    %3871 = vmatprep.mubr.f32.mxu0 0.0
    %3872 = vmatmul.mubr.f32.gmra.mrb[0].mxu0 %v3715
    %v3873 = vpop.f32.mrb[0].mxu0
    %v3874 = vadd.f32 0.0, %v3873
    %v3875 = vpop.f32.mrb[0].mxu0
    %3876 = vmatprep.mubr.f32.mxu0 0.0
    %3877 = vmatmul.mubr.f32.gmra.mrb[0].mxu0 %v3716
    %v3878 = vpop.f32.mrb[0].mxu0
    %v3879 = vadd.f32 0.0, %v3878
    %v3880 = vpop.f32.mrb[0].mxu0
    %3881 = vmatprep.mubr.f32.mxu0 0.0
    %3882 = vmatmul.mubr.f32.gmra.mrb[0].mxu0 %v3725
    %v3883 = vpop.f32.mrb[0].mxu0
    %v3884 = vadd.f32 0.0, %v3883
    %v3885 = vpop.f32.mrb[0].mxu0
    %3886 = vmatprep.mubr.f32.mxu0 0.0
    %3887 = vmatmul.mubr.f32.gmra.mrb[0].mxu0 %v3726
    %v3888 = vpop.f32.mrb[0].mxu0
    %v3889 = vadd.f32 0.0, %v3888
    %v3890 = vpop.f32.mrb[0].mxu0
    %3891 = vmatprep.mubr.f32.mxu0 0.0
    %3892 = vmatmul.mubr.f32.gmra.mrb[0].mxu0 %v3735
    %v3893 = vpop.f32.mrb[0].mxu0
    %v3894 = vadd.f32 0.0, %v3893
    %v3895 = vpop.f32.mrb[0].mxu0
    %3896 = vmatprep.mubr.f32.mxu0 0.0
    %3897 = vmatmul.mubr.f32.gmra.mrb[0].mxu0 %v3736
    %v3898 = vpop.f32.mrb[0].mxu0
    %v3899 = vadd.f32 0.0, %v3898
    %v3900 = vpop.f32.mrb[0].mxu0
    %3901 = vmatprep.mubr.f32.mxu0 0.0
    %3902 = vmatmul.mubr.f32.gmra.mrb[0].mxu0 %v3745
    %v3903 = vpop.f32.mrb[0].mxu0
    %v3904 = vadd.f32 0.0, %v3903
    %v3905 = vpop.f32.mrb[0].mxu0
    %3906 = vdwg.mxu0
    %v3907 = vadd.f32 %v3633, %v3829
    %v3908 = vadd.f32 %v3634, %v3834
    %v3909 = vadd.f32 %v3635, %v3839
    %v3910 = vadd.f32 %v3636, %v3844
    %v3911 = vadd.f32 %v3637, %v3849
    %v3912 = vadd.f32 %v3638, %v3854
    %v3913 = vadd.f32 %v3639, %v3859
    %v3914 = vadd.f32 %v3640, %v3864
    %v3915 = vadd.f32 %v3641, %v3869
    %v3916 = vadd.f32 %v3642, %v3874
    %v3917 = vadd.f32 %v3643, %v3879
    %v3918 = vadd.f32 %v3644, %v3884
    %v3919 = vadd.f32 %v3645, %v3889
    %v3920 = vadd.f32 %v3646, %v3894
    %v3921 = vadd.f32 %v3647, %v3899
    %v3922 = vadd.f32 %v3648, %v3904
    %s3923 = scalar_lea.vmem [#allocation8], 768
    %v3924 = vld [vmem:[%s3923] sm:$0xff]
    %v3925 = vld [vmem:[%s3923 + $0x8] sm:$0xff]
    %v3926 = vld [vmem:[%s3923 + $0x10] sm:$0xff]
    %v3927 = vld [vmem:[%s3923 + $0x18] sm:$0xff]
    %v3928 = vld [vmem:[%s3923 + $0x20] sm:$0xff]
    %v3929 = vld [vmem:[%s3923 + $0x28] sm:$0xff]
    %v3930 = vld [vmem:[%s3923 + $0x30] sm:$0xff]
    %v3931 = vld [vmem:[%s3923 + $0x38] sm:$0xff]
    %v3932 = vld [vmem:[%s3923 + $0x40] sm:$0xff]
    %v3933 = vld [vmem:[%s3923 + $0x48] sm:$0xff]
    %v3934 = vld [vmem:[%s3923 + $0x50] sm:$0xff]
    %v3935 = vld [vmem:[%s3923 + $0x58] sm:$0xff]
    %v3936 = vld [vmem:[%s3923 + $0x60] sm:$0xff]
    %v3937 = vld [vmem:[%s3923 + $0x68] sm:$0xff]
    %v3938 = vld [vmem:[%s3923 + $0x70] sm:$0xff]
    %v3939 = vld [vmem:[%s3923 + $0x78] sm:$0xff]
    %v3940 = vcombine.low %v904, %v912
    %v3942 = vunpack.c.l.s4 1983009808
    %v3943 = vunpack.c.0.s8 %v3942
    %v3944 = vlaneseq
    %v3945 = vshrl.u32 %v3944, 7
    %v3946 = vsub.s32 %v3943, %v3945
    %v3947 = vrot.slane %v3940, %v3946
    %v3948 = vcombine.low %v3070, %v3947
    %v3949 = vcombine.low %v988, %v987
    %v3951 = vunpack.c.l.s4 1983009808
    %v3952 = vunpack.c.0.s8 %v3951
    %v3953 = vlaneseq
    %v3954 = vshrl.u32 %v3953, 7
    %v3955 = vsub.s32 %v3952, %v3954
    %v3956 = vrot.slane %v3949, %v3955
    %v3957 = vcombine.low %v3080, %v3956
    %v3958 = vcombine.low %v1057, %v1065
    %v3960 = vunpack.c.l.s4 1983009808
    %v3961 = vunpack.c.0.s8 %v3960
    %v3962 = vlaneseq
    %v3963 = vshrl.u32 %v3962, 7
    %v3964 = vsub.s32 %v3961, %v3963
    %v3965 = vrot.slane %v3958, %v3964
    %v3966 = vcombine.low %v3090, %v3965
    %v3967 = vcombine.low %v1141, %v1140
    %v3969 = vunpack.c.l.s4 1983009808
    %v3970 = vunpack.c.0.s8 %v3969
    %v3971 = vlaneseq
    %v3972 = vshrl.u32 %v3971, 7
    %v3973 = vsub.s32 %v3970, %v3972
    %v3974 = vrot.slane %v3967, %v3973
    %v3975 = vcombine.low %v3100, %v3974
    %v3976 = vcombine.low %v1210, %v1218
    %v3978 = vunpack.c.l.s4 1983009808
    %v3979 = vunpack.c.0.s8 %v3978
    %v3980 = vlaneseq
    %v3981 = vshrl.u32 %v3980, 7
    %v3982 = vsub.s32 %v3979, %v3981
    %v3983 = vrot.slane %v3976, %v3982
    %v3984 = vcombine.low %v3110, %v3983
    %v3985 = vcombine.low %v1294, %v1293
    %v3987 = vunpack.c.l.s4 1983009808
    %v3988 = vunpack.c.0.s8 %v3987
    %v3989 = vlaneseq
    %v3990 = vshrl.u32 %v3989, 7
    %v3991 = vsub.s32 %v3988, %v3990
    %v3992 = vrot.slane %v3985, %v3991
    %v3993 = vcombine.low %v3120, %v3992
    %v3994 = vcombine.low %v1363, %v1371
    %v3996 = vunpack.c.l.s4 1983009808
    %v3997 = vunpack.c.0.s8 %v3996
    %v3998 = vlaneseq
    %v3999 = vshrl.u32 %v3998, 7
    %v4000 = vsub.s32 %v3997, %v3999
    %v4001 = vrot.slane %v3994, %v4000
    %v4002 = vcombine.low %v3130, %v4001
    %v4003 = vcombine.low %v1447, %v1446
    %v4005 = vunpack.c.l.s4 1983009808
    %v4006 = vunpack.c.0.s8 %v4005
    %v4007 = vlaneseq
    %v4008 = vshrl.u32 %v4007, 7
    %v4009 = vsub.s32 %v4006, %v4008
    %v4010 = vrot.slane %v4003, %v4009
    %v4011 = vcombine.low %v3140, %v4010
    %4020 = vmatprep.subr.mxu0 0.0
    %4021 = vmatpush1.msra.mxu0 %v3924
    %4022 = vmatprep.subr.mxu0 0.0
    %4023 = vmatpush1.msra.mxu0 %v3925
    %4024 = vmatprep.subr.mxu0 0.0
    %4025 = vmatpush1.msra.mxu0 %v3926
    %4026 = vmatprep.subr.mxu0 0.0
    %4027 = vmatpush1.msra.mxu0 %v3927
    %4028 = vmatprep.subr.mxu0 0.0
    %4029 = vmatpush1.msra.mxu0 %v3928
    %4030 = vmatprep.subr.mxu0 0.0
    %4031 = vmatpush1.msra.mxu0 %v3929
    %4032 = vmatprep.subr.mxu0 0.0
    %4033 = vmatpush1.msra.mxu0 %v3930
    %4034 = vmatprep.subr.mxu0 0.0
    %4035 = vmatpush1.msra.mxu0 %v3931
    %4036 = vmatprep.subr.mxu0 0.0
    %4037 = vmatpush1.msra.mxu0 %v3932
    %4038 = vmatprep.subr.mxu0 0.0
    %4039 = vmatpush1.msra.mxu0 %v3933
    %4040 = vmatprep.subr.mxu0 0.0
    %4041 = vmatpush1.msra.mxu0 %v3934
    %4042 = vmatprep.subr.mxu0 0.0
    %4043 = vmatpush1.msra.mxu0 %v3935
    %4044 = vmatprep.subr.mxu0 0.0
    %4045 = vmatpush1.msra.mxu0 %v3936
    %4046 = vmatprep.subr.mxu0 0.0
    %4047 = vmatpush1.msra.mxu0 %v3937
    %4048 = vmatprep.subr.mxu0 0.0
    %4049 = vmatpush1.msra.mxu0 %v3938
    %4050 = vmatprep.subr.mxu0 0.0
    %4051 = vmatpush1.msra.mxu0 %v3939
    %4052 = vmatprep.subr.mxu0 0.0
    %4053 = vmatpush1.msra.mxu0 0.0
    %4054 = vmatprep.subr.mxu0 0.0
    %4055 = vmatpush1.msra.mxu0 0.0
    %4056 = vmatprep.subr.mxu0 0.0
    %4057 = vmatpush1.msra.mxu0 0.0
    %4058 = vmatprep.subr.mxu0 0.0
    %4059 = vmatpush1.msra.mxu0 0.0
    %4060 = vmatprep.subr.mxu0 0.0
    %4061 = vmatpush1.msra.mxu0 0.0
    %4062 = vmatprep.subr.mxu0 0.0
    %4063 = vmatpush1.msra.mxu0 0.0
    %4064 = vmatprep.subr.mxu0 0.0
    %4065 = vmatpush1.msra.mxu0 0.0
    %4066 = vmatprep.subr.mxu0 0.0
    %4067 = vmatpush1.msra.mxu0 0.0
    %4068 = vmatprep.subr.mxu0 0.0
    %4069 = vmatpush1.msra.mxu0 0.0
    %4070 = vmatprep.subr.mxu0 0.0
    %4071 = vmatpush1.msra.mxu0 0.0
    %4072 = vmatprep.subr.mxu0 0.0
    %4073 = vmatpush1.msra.mxu0 0.0
    %4074 = vmatprep.subr.mxu0 0.0
    %4075 = vmatpush1.msra.mxu0 0.0
    %4076 = vmatprep.subr.mxu0 0.0
    %4077 = vmatpush1.msra.mxu0 0.0
    %4078 = vmatprep.subr.mxu0 0.0
    %4079 = vmatpush1.msra.mxu0 0.0
    %4080 = vmatprep.subr.mxu0 0.0
    %4081 = vmatpush1.msra.mxu0 0.0
    %4082 = vmatprep.subr.mxu0 0.0
    %4083 = vmatpush1.msra.mxu0 0.0
    %4084 = vmatprep.mubr.f32.mxu0 0.0
    %4085 = vmatmul.mubr.f32.gmra.mrb[0].mxu0 %v2179
    %v4086 = vpop.f32.mrb[0].mxu0
    %v4087 = vadd.f32 0.0, %v4086
    %v4088 = vpop.f32.mrb[0].mxu0
    %4089 = vmatprep.mubr.f32.mxu0 0.0
    %4090 = vmatmul.mubr.f32.gmra.mrb[0].mxu0 %v3948
    %v4091 = vpop.f32.mrb[0].mxu0
    %v4092 = vadd.f32 0.0, %v4091
    %v4093 = vpop.f32.mrb[0].mxu0
    %4094 = vmatprep.mubr.f32.mxu0 0.0
    %4095 = vmatmul.mubr.f32.gmra.mrb[0].mxu0 %v2213
    %v4096 = vpop.f32.mrb[0].mxu0
    %v4097 = vadd.f32 0.0, %v4096
    %v4098 = vpop.f32.mrb[0].mxu0
    %4099 = vmatprep.mubr.f32.mxu0 0.0
    %4100 = vmatmul.mubr.f32.gmra.mrb[0].mxu0 %v3957
    %v4101 = vpop.f32.mrb[0].mxu0
    %v4102 = vadd.f32 0.0, %v4101
    %v4103 = vpop.f32.mrb[0].mxu0
    %4104 = vmatprep.mubr.f32.mxu0 0.0
    %4105 = vmatmul.mubr.f32.gmra.mrb[0].mxu0 %v2247
    %v4106 = vpop.f32.mrb[0].mxu0
    %v4107 = vadd.f32 0.0, %v4106
    %v4108 = vpop.f32.mrb[0].mxu0
    %4109 = vmatprep.mubr.f32.mxu0 0.0
    %4110 = vmatmul.mubr.f32.gmra.mrb[0].mxu0 %v3966
    %v4111 = vpop.f32.mrb[0].mxu0
    %v4112 = vadd.f32 0.0, %v4111
    %v4113 = vpop.f32.mrb[0].mxu0
    %4114 = vmatprep.mubr.f32.mxu0 0.0
    %4115 = vmatmul.mubr.f32.gmra.mrb[0].mxu0 %v2281
    %v4116 = vpop.f32.mrb[0].mxu0
    %v4117 = vadd.f32 0.0, %v4116
    %v4118 = vpop.f32.mrb[0].mxu0
    %4119 = vmatprep.mubr.f32.mxu0 0.0
    %4120 = vmatmul.mubr.f32.gmra.mrb[0].mxu0 %v3975
    %v4121 = vpop.f32.mrb[0].mxu0
    %v4122 = vadd.f32 0.0, %v4121
    %v4123 = vpop.f32.mrb[0].mxu0
    %4124 = vmatprep.mubr.f32.mxu0 0.0
    %4125 = vmatmul.mubr.f32.gmra.mrb[0].mxu0 %v2315
    %v4126 = vpop.f32.mrb[0].mxu0
    %v4127 = vadd.f32 0.0, %v4126
    %v4128 = vpop.f32.mrb[0].mxu0
    %4129 = vmatprep.mubr.f32.mxu0 0.0
    %4130 = vmatmul.mubr.f32.gmra.mrb[0].mxu0 %v3984
    %v4131 = vpop.f32.mrb[0].mxu0
    %v4132 = vadd.f32 0.0, %v4131
    %v4133 = vpop.f32.mrb[0].mxu0
    %4134 = vmatprep.mubr.f32.mxu0 0.0
    %4135 = vmatmul.mubr.f32.gmra.mrb[0].mxu0 %v2349
    %v4136 = vpop.f32.mrb[0].mxu0
    %v4137 = vadd.f32 0.0, %v4136
    %v4138 = vpop.f32.mrb[0].mxu0
    %4139 = vmatprep.mubr.f32.mxu0 0.0
    %4140 = vmatmul.mubr.f32.gmra.mrb[0].mxu0 %v3993
    %v4141 = vpop.f32.mrb[0].mxu0
    %v4142 = vadd.f32 0.0, %v4141
    %v4143 = vpop.f32.mrb[0].mxu0
    %4144 = vmatprep.mubr.f32.mxu0 0.0
    %4145 = vmatmul.mubr.f32.gmra.mrb[0].mxu0 %v2383
    %v4146 = vpop.f32.mrb[0].mxu0
    %v4147 = vadd.f32 0.0, %v4146
    %v4148 = vpop.f32.mrb[0].mxu0
    %4149 = vmatprep.mubr.f32.mxu0 0.0
    %4150 = vmatmul.mubr.f32.gmra.mrb[0].mxu0 %v4002
    %v4151 = vpop.f32.mrb[0].mxu0
    %v4152 = vadd.f32 0.0, %v4151
    %v4153 = vpop.f32.mrb[0].mxu0
    %4154 = vmatprep.mubr.f32.mxu0 0.0
    %4155 = vmatmul.mubr.f32.gmra.mrb[0].mxu0 %v2417
    %v4156 = vpop.f32.mrb[0].mxu0
    %v4157 = vadd.f32 0.0, %v4156
    %v4158 = vpop.f32.mrb[0].mxu0
    %4159 = vmatprep.mubr.f32.mxu0 0.0
    %4160 = vmatmul.mubr.f32.gmra.mrb[0].mxu0 %v4011
    %v4161 = vpop.f32.mrb[0].mxu0
    %v4162 = vadd.f32 0.0, %v4161
    %v4163 = vpop.f32.mrb[0].mxu0
    %4164 = vdwg.mxu0
    %v4165 = vadd.f32 %v3907, %v4087
    %v4166 = vadd.f32 %v3908, %v4092
    %v4167 = vadd.f32 %v3909, %v4097
    %v4168 = vadd.f32 %v3910, %v4102
    %v4169 = vadd.f32 %v3911, %v4107
    %v4170 = vadd.f32 %v3912, %v4112
    %v4171 = vadd.f32 %v3913, %v4117
    %v4172 = vadd.f32 %v3914, %v4122
    %v4173 = vadd.f32 %v3915, %v4127
    %v4174 = vadd.f32 %v3916, %v4132
    %v4175 = vadd.f32 %v3917, %v4137
    %v4176 = vadd.f32 %v3918, %v4142
    %v4177 = vadd.f32 %v3919, %v4147
    %v4178 = vadd.f32 %v3920, %v4152
    %v4179 = vadd.f32 %v3921, %v4157
    %v4180 = vadd.f32 %v3922, %v4162
    %v4181 = vrot.slane %v904, 7
    %v4182 = vrot.slane %v4181, 2
    %v4183 = vrot.slane %v912, 7
    %v4184 = vsel %vm1471, %v4182, %v4183
    %v4185 = vrot.slane %v4183, 2
    %v4186 = vrot.slane %v920, 7
    %v4187 = vsel %vm1471, %v4185, %v4186
    %v4188 = vrot.slane %v988, 7
    %v4189 = vrot.slane %v4188, 2
    %v4190 = vrot.slane %v987, 7
    %v4191 = vsel %vm1471, %v4189, %v4190
    %v4192 = vrot.slane %v4190, 2
    %v4193 = vrot.slane %v989, 7
    %v4194 = vsel %vm1471, %v4192, %v4193
    %v4195 = vrot.slane %v1057, 7
    %v4196 = vrot.slane %v4195, 2
    %v4197 = vrot.slane %v1065, 7
    %v4198 = vsel %vm1471, %v4196, %v4197
    %v4199 = vrot.slane %v4197, 2
    %v4200 = vrot.slane %v1073, 7
    %v4201 = vsel %vm1471, %v4199, %v4200
    %v4202 = vrot.slane %v1141, 7
    %v4203 = vrot.slane %v4202, 2
    %v4204 = vrot.slane %v1140, 7
    %v4205 = vsel %vm1471, %v4203, %v4204
    %v4206 = vrot.slane %v4204, 2
    %v4207 = vrot.slane %v1142, 7
    %v4208 = vsel %vm1471, %v4206, %v4207
    %v4209 = vrot.slane %v1210, 7
    %v4210 = vrot.slane %v4209, 2
    %v4211 = vrot.slane %v1218, 7
    %v4212 = vsel %vm1471, %v4210, %v4211
    %v4213 = vrot.slane %v4211, 2
    %v4214 = vrot.slane %v1226, 7
    %v4215 = vsel %vm1471, %v4213, %v4214
    %v4216 = vrot.slane %v1294, 7
    %v4217 = vrot.slane %v4216, 2
    %v4218 = vrot.slane %v1293, 7
    %v4219 = vsel %vm1471, %v4217, %v4218
    %v4220 = vrot.slane %v4218, 2
    %v4221 = vrot.slane %v1295, 7
    %v4222 = vsel %vm1471, %v4220, %v4221
    %v4223 = vrot.slane %v1363, 7
    %v4224 = vrot.slane %v4223, 2
    %v4225 = vrot.slane %v1371, 7
    %v4226 = vsel %vm1471, %v4224, %v4225
    %v4227 = vrot.slane %v4225, 2
    %v4228 = vrot.slane %v1379, 7
    %v4229 = vsel %vm1471, %v4227, %v4228
    %v4230 = vrot.slane %v1447, 7
    %v4231 = vrot.slane %v4230, 2
    %v4232 = vrot.slane %v1446, 7
    %v4233 = vsel %vm1471, %v4231, %v4232
    %v4234 = vrot.slane %v4232, 2
    %v4235 = vrot.slane %v1448, 7
    %v4236 = vsel %vm1471, %v4234, %v4235
    %s4237 = scalar_lea.vmem [#allocation8], 896
    %v4238 = vld [vmem:[%s4237] sm:$0xff]
    %v4239 = vld [vmem:[%s4237 + $0x8] sm:$0xff]
    %v4240 = vld [vmem:[%s4237 + $0x10] sm:$0xff]
    %v4241 = vld [vmem:[%s4237 + $0x18] sm:$0xff]
    %v4242 = vld [vmem:[%s4237 + $0x20] sm:$0xff]
    %v4243 = vld [vmem:[%s4237 + $0x28] sm:$0xff]
    %v4244 = vld [vmem:[%s4237 + $0x30] sm:$0xff]
    %v4245 = vld [vmem:[%s4237 + $0x38] sm:$0xff]
    %v4246 = vld [vmem:[%s4237 + $0x40] sm:$0xff]
    %v4247 = vld [vmem:[%s4237 + $0x48] sm:$0xff]
    %v4248 = vld [vmem:[%s4237 + $0x50] sm:$0xff]
    %v4249 = vld [vmem:[%s4237 + $0x58] sm:$0xff]
    %v4250 = vld [vmem:[%s4237 + $0x60] sm:$0xff]
    %v4251 = vld [vmem:[%s4237 + $0x68] sm:$0xff]
    %v4252 = vld [vmem:[%s4237 + $0x70] sm:$0xff]
    %v4253 = vld [vmem:[%s4237 + $0x78] sm:$0xff]
    %v4254 = vcombine.low %v4184, %v4187
    %v4256 = vunpack.c.l.s4 1983009808
    %v4257 = vunpack.c.0.s8 %v4256
    %v4258 = vlaneseq
    %v4259 = vshrl.u32 %v4258, 7
    %v4260 = vsub.s32 %v4257, %v4259
    %v4261 = vrot.slane %v4254, %v4260
    %v4262 = vcombine.low %v3400, %v4261
    %v4263 = vcombine.low %v4191, %v4194
    %v4265 = vunpack.c.l.s4 1983009808
    %v4266 = vunpack.c.0.s8 %v4265
    %v4267 = vlaneseq
    %v4268 = vshrl.u32 %v4267, 7
    %v4269 = vsub.s32 %v4266, %v4268
    %v4270 = vrot.slane %v4263, %v4269
    %v4271 = vcombine.low %v3410, %v4270
    %v4272 = vcombine.low %v4198, %v4201
    %v4274 = vunpack.c.l.s4 1983009808
    %v4275 = vunpack.c.0.s8 %v4274
    %v4276 = vlaneseq
    %v4277 = vshrl.u32 %v4276, 7
    %v4278 = vsub.s32 %v4275, %v4277
    %v4279 = vrot.slane %v4272, %v4278
    %v4280 = vcombine.low %v3420, %v4279
    %v4281 = vcombine.low %v4205, %v4208
    %v4283 = vunpack.c.l.s4 1983009808
    %v4284 = vunpack.c.0.s8 %v4283
    %v4285 = vlaneseq
    %v4286 = vshrl.u32 %v4285, 7
    %v4287 = vsub.s32 %v4284, %v4286
    %v4288 = vrot.slane %v4281, %v4287
    %v4289 = vcombine.low %v3430, %v4288
    %v4290 = vcombine.low %v4212, %v4215
    %v4292 = vunpack.c.l.s4 1983009808
    %v4293 = vunpack.c.0.s8 %v4292
    %v4294 = vlaneseq
    %v4295 = vshrl.u32 %v4294, 7
    %v4296 = vsub.s32 %v4293, %v4295
    %v4297 = vrot.slane %v4290, %v4296
    %v4298 = vcombine.low %v3440, %v4297
    %v4299 = vcombine.low %v4219, %v4222
    %v4301 = vunpack.c.l.s4 1983009808
    %v4302 = vunpack.c.0.s8 %v4301
    %v4303 = vlaneseq
    %v4304 = vshrl.u32 %v4303, 7
    %v4305 = vsub.s32 %v4302, %v4304
    %v4306 = vrot.slane %v4299, %v4305
    %v4307 = vcombine.low %v3450, %v4306
    %v4308 = vcombine.low %v4226, %v4229
    %v4310 = vunpack.c.l.s4 1983009808
    %v4311 = vunpack.c.0.s8 %v4310
    %v4312 = vlaneseq
    %v4313 = vshrl.u32 %v4312, 7
    %v4314 = vsub.s32 %v4311, %v4313
    %v4315 = vrot.slane %v4308, %v4314
    %v4316 = vcombine.low %v3460, %v4315
    %v4317 = vcombine.low %v4233, %v4236
    %v4319 = vunpack.c.l.s4 1983009808
    %v4320 = vunpack.c.0.s8 %v4319
    %v4321 = vlaneseq
    %v4322 = vshrl.u32 %v4321, 7
    %v4323 = vsub.s32 %v4320, %v4322
    %v4324 = vrot.slane %v4317, %v4323
    %v4325 = vcombine.low %v3470, %v4324
    %4334 = vmatprep.subr.mxu0 0.0
    %4335 = vmatpush1.msra.mxu0 %v4238
    %4336 = vmatprep.subr.mxu0 0.0
    %4337 = vmatpush1.msra.mxu0 %v4239
    %4338 = vmatprep.subr.mxu0 0.0
    %4339 = vmatpush1.msra.mxu0 %v4240
    %4340 = vmatprep.subr.mxu0 0.0
    %4341 = vmatpush1.msra.mxu0 %v4241
    %4342 = vmatprep.subr.mxu0 0.0
    %4343 = vmatpush1.msra.mxu0 %v4242
    %4344 = vmatprep.subr.mxu0 0.0
    %4345 = vmatpush1.msra.mxu0 %v4243
    %4346 = vmatprep.subr.mxu0 0.0
    %4347 = vmatpush1.msra.mxu0 %v4244
    %4348 = vmatprep.subr.mxu0 0.0
    %4349 = vmatpush1.msra.mxu0 %v4245
    %4350 = vmatprep.subr.mxu0 0.0
    %4351 = vmatpush1.msra.mxu0 %v4246
    %4352 = vmatprep.subr.mxu0 0.0
    %4353 = vmatpush1.msra.mxu0 %v4247
    %4354 = vmatprep.subr.mxu0 0.0
    %4355 = vmatpush1.msra.mxu0 %v4248
    %4356 = vmatprep.subr.mxu0 0.0
    %4357 = vmatpush1.msra.mxu0 %v4249
    %4358 = vmatprep.subr.mxu0 0.0
    %4359 = vmatpush1.msra.mxu0 %v4250
    %4360 = vmatprep.subr.mxu0 0.0
    %4361 = vmatpush1.msra.mxu0 %v4251
    %4362 = vmatprep.subr.mxu0 0.0
    %4363 = vmatpush1.msra.mxu0 %v4252
    %4364 = vmatprep.subr.mxu0 0.0
    %4365 = vmatpush1.msra.mxu0 %v4253
    %4366 = vmatprep.subr.mxu0 0.0
    %4367 = vmatpush1.msra.mxu0 0.0
    %4368 = vmatprep.subr.mxu0 0.0
    %4369 = vmatpush1.msra.mxu0 0.0
    %4370 = vmatprep.subr.mxu0 0.0
    %4371 = vmatpush1.msra.mxu0 0.0
    %4372 = vmatprep.subr.mxu0 0.0
    %4373 = vmatpush1.msra.mxu0 0.0
    %4374 = vmatprep.subr.mxu0 0.0
    %4375 = vmatpush1.msra.mxu0 0.0
    %4376 = vmatprep.subr.mxu0 0.0
    %4377 = vmatpush1.msra.mxu0 0.0
    %4378 = vmatprep.subr.mxu0 0.0
    %4379 = vmatpush1.msra.mxu0 0.0
    %4380 = vmatprep.subr.mxu0 0.0
    %4381 = vmatpush1.msra.mxu0 0.0
    %4382 = vmatprep.subr.mxu0 0.0
    %4383 = vmatpush1.msra.mxu0 0.0
    %4384 = vmatprep.subr.mxu0 0.0
    %4385 = vmatpush1.msra.mxu0 0.0
    %4386 = vmatprep.subr.mxu0 0.0
    %4387 = vmatpush1.msra.mxu0 0.0
    %4388 = vmatprep.subr.mxu0 0.0
    %4389 = vmatpush1.msra.mxu0 0.0
    %4390 = vmatprep.subr.mxu0 0.0
    %4391 = vmatpush1.msra.mxu0 0.0
    %4392 = vmatprep.subr.mxu0 0.0
    %4393 = vmatpush1.msra.mxu0 0.0
    %4394 = vmatprep.subr.mxu0 0.0
    %4395 = vmatpush1.msra.mxu0 0.0
    %4396 = vmatprep.subr.mxu0 0.0
    %4397 = vmatpush1.msra.mxu0 0.0
    %4398 = vmatprep.mubr.f32.mxu0 0.0
    %4399 = vmatmul.mubr.f32.gmra.mrb[0].mxu0 %v1746
    %v4400 = vpop.f32.mrb[0].mxu0
    %v4401 = vadd.f32 0.0, %v4400
    %v4402 = vpop.f32.mrb[0].mxu0
    %4403 = vmatprep.mubr.f32.mxu0 0.0
    %4404 = vmatmul.mubr.f32.gmra.mrb[0].mxu0 %v4262
    %v4405 = vpop.f32.mrb[0].mxu0
    %v4406 = vadd.f32 0.0, %v4405
    %v4407 = vpop.f32.mrb[0].mxu0
    %4408 = vmatprep.mubr.f32.mxu0 0.0
    %4409 = vmatmul.mubr.f32.gmra.mrb[0].mxu0 %v1780
    %v4410 = vpop.f32.mrb[0].mxu0
    %v4411 = vadd.f32 0.0, %v4410
    %v4412 = vpop.f32.mrb[0].mxu0
    %4413 = vmatprep.mubr.f32.mxu0 0.0
    %4414 = vmatmul.mubr.f32.gmra.mrb[0].mxu0 %v4271
    %v4415 = vpop.f32.mrb[0].mxu0
    %v4416 = vadd.f32 0.0, %v4415
    %v4417 = vpop.f32.mrb[0].mxu0
    %4418 = vmatprep.mubr.f32.mxu0 0.0
    %4419 = vmatmul.mubr.f32.gmra.mrb[0].mxu0 %v1814
    %v4420 = vpop.f32.mrb[0].mxu0
    %v4421 = vadd.f32 0.0, %v4420
    %v4422 = vpop.f32.mrb[0].mxu0
    %4423 = vmatprep.mubr.f32.mxu0 0.0
    %4424 = vmatmul.mubr.f32.gmra.mrb[0].mxu0 %v4280
    %v4425 = vpop.f32.mrb[0].mxu0
    %v4426 = vadd.f32 0.0, %v4425
    %v4427 = vpop.f32.mrb[0].mxu0
    %4428 = vmatprep.mubr.f32.mxu0 0.0
    %4429 = vmatmul.mubr.f32.gmra.mrb[0].mxu0 %v1848
    %v4430 = vpop.f32.mrb[0].mxu0
    %v4431 = vadd.f32 0.0, %v4430
    %v4432 = vpop.f32.mrb[0].mxu0
    %4433 = vmatprep.mubr.f32.mxu0 0.0
    %4434 = vmatmul.mubr.f32.gmra.mrb[0].mxu0 %v4289
    %v4435 = vpop.f32.mrb[0].mxu0
    %v4436 = vadd.f32 0.0, %v4435
    %v4437 = vpop.f32.mrb[0].mxu0
    %4438 = vmatprep.mubr.f32.mxu0 0.0
    %4439 = vmatmul.mubr.f32.gmra.mrb[0].mxu0 %v1882
    %v4440 = vpop.f32.mrb[0].mxu0
    %v4441 = vadd.f32 0.0, %v4440
    %v4442 = vpop.f32.mrb[0].mxu0
    %4443 = vmatprep.mubr.f32.mxu0 0.0
    %4444 = vmatmul.mubr.f32.gmra.mrb[0].mxu0 %v4298
    %v4445 = vpop.f32.mrb[0].mxu0
    %v4446 = vadd.f32 0.0, %v4445
    %v4447 = vpop.f32.mrb[0].mxu0
    %4448 = vmatprep.mubr.f32.mxu0 0.0
    %4449 = vmatmul.mubr.f32.gmra.mrb[0].mxu0 %v1916
    %v4450 = vpop.f32.mrb[0].mxu0
    %v4451 = vadd.f32 0.0, %v4450
    %v4452 = vpop.f32.mrb[0].mxu0
    %4453 = vmatprep.mubr.f32.mxu0 0.0
    %4454 = vmatmul.mubr.f32.gmra.mrb[0].mxu0 %v4307
    %v4455 = vpop.f32.mrb[0].mxu0
    %v4456 = vadd.f32 0.0, %v4455
    %v4457 = vpop.f32.mrb[0].mxu0
    %4458 = vmatprep.mubr.f32.mxu0 0.0
    %4459 = vmatmul.mubr.f32.gmra.mrb[0].mxu0 %v1950
    %v4460 = vpop.f32.mrb[0].mxu0
    %v4461 = vadd.f32 0.0, %v4460
    %v4462 = vpop.f32.mrb[0].mxu0
    %4463 = vmatprep.mubr.f32.mxu0 0.0
    %4464 = vmatmul.mubr.f32.gmra.mrb[0].mxu0 %v4316
    %v4465 = vpop.f32.mrb[0].mxu0
    %v4466 = vadd.f32 0.0, %v4465
    %v4467 = vpop.f32.mrb[0].mxu0
    %4468 = vmatprep.mubr.f32.mxu0 0.0
    %4469 = vmatmul.mubr.f32.gmra.mrb[0].mxu0 %v1984
    %v4470 = vpop.f32.mrb[0].mxu0
    %v4471 = vadd.f32 0.0, %v4470
    %v4472 = vpop.f32.mrb[0].mxu0
    %4473 = vmatprep.mubr.f32.mxu0 0.0
    %4474 = vmatmul.mubr.f32.gmra.mrb[0].mxu0 %v4325
    %v4475 = vpop.f32.mrb[0].mxu0
    %v4476 = vadd.f32 0.0, %v4475
    %v4477 = vpop.f32.mrb[0].mxu0
    %4478 = vdwg.mxu0
    %v4479 = vadd.f32 %v4165, %v4401
    %v4480 = vadd.f32 %v4166, %v4406
    %v4481 = vadd.f32 %v4167, %v4411
    %v4482 = vadd.f32 %v4168, %v4416
    %v4483 = vadd.f32 %v4169, %v4421
    %v4484 = vadd.f32 %v4170, %v4426
    %v4485 = vadd.f32 %v4171, %v4431
    %v4486 = vadd.f32 %v4172, %v4436
    %v4487 = vadd.f32 %v4173, %v4441
    %v4488 = vadd.f32 %v4174, %v4446
    %v4489 = vadd.f32 %v4175, %v4451
    %v4490 = vadd.f32 %v4176, %v4456
    %v4491 = vadd.f32 %v4177, %v4461
    %v4492 = vadd.f32 %v4178, %v4466
    %v4493 = vadd.f32 %v4179, %v4471
    %v4494 = vadd.f32 %v4180, %v4476
    %s4495 = scalar_lea.vmem [#allocation8], 1024
    %v4496 = vld [vmem:[%s4495] sm:$0xff]
    %v4497 = vld [vmem:[%s4495 + $0x8] sm:$0xff]
    %v4498 = vld [vmem:[%s4495 + $0x10] sm:$0xff]
    %v4499 = vld [vmem:[%s4495 + $0x18] sm:$0xff]
    %v4500 = vld [vmem:[%s4495 + $0x20] sm:$0xff]
    %v4501 = vld [vmem:[%s4495 + $0x28] sm:$0xff]
    %v4502 = vld [vmem:[%s4495 + $0x30] sm:$0xff]
    %v4503 = vld [vmem:[%s4495 + $0x38] sm:$0xff]
    %v4504 = vld [vmem:[%s4495 + $0x40] sm:$0xff]
    %v4505 = vld [vmem:[%s4495 + $0x48] sm:$0xff]
    %v4506 = vld [vmem:[%s4495 + $0x50] sm:$0xff]
    %v4507 = vld [vmem:[%s4495 + $0x58] sm:$0xff]
    %v4508 = vld [vmem:[%s4495 + $0x60] sm:$0xff]
    %v4509 = vld [vmem:[%s4495 + $0x68] sm:$0xff]
    %v4510 = vld [vmem:[%s4495 + $0x70] sm:$0xff]
    %v4511 = vld [vmem:[%s4495 + $0x78] sm:$0xff]
    %v4512 = vcombine.low %v912, %v920
    %v4514 = vunpack.c.l.s4 1983009808
    %v4515 = vunpack.c.0.s8 %v4514
    %v4516 = vlaneseq
    %v4517 = vshrl.u32 %v4516, 7
    %v4518 = vsub.s32 %v4515, %v4517
    %v4519 = vrot.slane %v4512, %v4518
    %v4520 = vcombine.low %v3674, %v4519
    %v4521 = vcombine.low %v987, %v989
    %v4523 = vunpack.c.l.s4 1983009808
    %v4524 = vunpack.c.0.s8 %v4523
    %v4525 = vlaneseq
    %v4526 = vshrl.u32 %v4525, 7
    %v4527 = vsub.s32 %v4524, %v4526
    %v4528 = vrot.slane %v4521, %v4527
    %v4529 = vcombine.low %v3684, %v4528
    %v4530 = vcombine.low %v1065, %v1073
    %v4532 = vunpack.c.l.s4 1983009808
    %v4533 = vunpack.c.0.s8 %v4532
    %v4534 = vlaneseq
    %v4535 = vshrl.u32 %v4534, 7
    %v4536 = vsub.s32 %v4533, %v4535
    %v4537 = vrot.slane %v4530, %v4536
    %v4538 = vcombine.low %v3694, %v4537
    %v4539 = vcombine.low %v1140, %v1142
    %v4541 = vunpack.c.l.s4 1983009808
    %v4542 = vunpack.c.0.s8 %v4541
    %v4543 = vlaneseq
    %v4544 = vshrl.u32 %v4543, 7
    %v4545 = vsub.s32 %v4542, %v4544
    %v4546 = vrot.slane %v4539, %v4545
    %v4547 = vcombine.low %v3704, %v4546
    %v4548 = vcombine.low %v1218, %v1226
    %v4550 = vunpack.c.l.s4 1983009808
    %v4551 = vunpack.c.0.s8 %v4550
    %v4552 = vlaneseq
    %v4553 = vshrl.u32 %v4552, 7
    %v4554 = vsub.s32 %v4551, %v4553
    %v4555 = vrot.slane %v4548, %v4554
    %v4556 = vcombine.low %v3714, %v4555
    %v4557 = vcombine.low %v1293, %v1295
    %v4559 = vunpack.c.l.s4 1983009808
    %v4560 = vunpack.c.0.s8 %v4559
    %v4561 = vlaneseq
    %v4562 = vshrl.u32 %v4561, 7
    %v4563 = vsub.s32 %v4560, %v4562
    %v4564 = vrot.slane %v4557, %v4563
    %v4565 = vcombine.low %v3724, %v4564
    %v4566 = vcombine.low %v1371, %v1379
    %v4568 = vunpack.c.l.s4 1983009808
    %v4569 = vunpack.c.0.s8 %v4568
    %v4570 = vlaneseq
    %v4571 = vshrl.u32 %v4570, 7
    %v4572 = vsub.s32 %v4569, %v4571
    %v4573 = vrot.slane %v4566, %v4572
    %v4574 = vcombine.low %v3734, %v4573
    %v4575 = vcombine.low %v1446, %v1448
    %v4577 = vunpack.c.l.s4 1983009808
    %v4578 = vunpack.c.0.s8 %v4577
    %v4579 = vlaneseq
    %v4580 = vshrl.u32 %v4579, 7
    %v4581 = vsub.s32 %v4578, %v4580
    %v4582 = vrot.slane %v4575, %v4581
    %v4583 = vcombine.low %v3744, %v4582
    %4592 = vmatprep.subr.mxu0 0.0
    %4593 = vmatpush1.msra.mxu0 %v4496
    %4594 = vmatprep.subr.mxu0 0.0
    %4595 = vmatpush1.msra.mxu0 %v4497
    %4596 = vmatprep.subr.mxu0 0.0
    %4597 = vmatpush1.msra.mxu0 %v4498
    %4598 = vmatprep.subr.mxu0 0.0
    %4599 = vmatpush1.msra.mxu0 %v4499
    %4600 = vmatprep.subr.mxu0 0.0
    %4601 = vmatpush1.msra.mxu0 %v4500
    %4602 = vmatprep.subr.mxu0 0.0
    %4603 = vmatpush1.msra.mxu0 %v4501
    %4604 = vmatprep.subr.mxu0 0.0
    %4605 = vmatpush1.msra.mxu0 %v4502
    %4606 = vmatprep.subr.mxu0 0.0
    %4607 = vmatpush1.msra.mxu0 %v4503
    %4608 = vmatprep.subr.mxu0 0.0
    %4609 = vmatpush1.msra.mxu0 %v4504
    %4610 = vmatprep.subr.mxu0 0.0
    %4611 = vmatpush1.msra.mxu0 %v4505
    %4612 = vmatprep.subr.mxu0 0.0
    %4613 = vmatpush1.msra.mxu0 %v4506
    %4614 = vmatprep.subr.mxu0 0.0
    %4615 = vmatpush1.msra.mxu0 %v4507
    %4616 = vmatprep.subr.mxu0 0.0
    %4617 = vmatpush1.msra.mxu0 %v4508
    %4618 = vmatprep.subr.mxu0 0.0
    %4619 = vmatpush1.msra.mxu0 %v4509
    %4620 = vmatprep.subr.mxu0 0.0
    %4621 = vmatpush1.msra.mxu0 %v4510
    %4622 = vmatprep.subr.mxu0 0.0
    %4623 = vmatpush1.msra.mxu0 %v4511
    %4624 = vmatprep.subr.mxu0 0.0
    %4625 = vmatpush1.msra.mxu0 0.0
    %4626 = vmatprep.subr.mxu0 0.0
    %4627 = vmatpush1.msra.mxu0 0.0
    %4628 = vmatprep.subr.mxu0 0.0
    %4629 = vmatpush1.msra.mxu0 0.0
    %4630 = vmatprep.subr.mxu0 0.0
    %4631 = vmatpush1.msra.mxu0 0.0
    %4632 = vmatprep.subr.mxu0 0.0
    %4633 = vmatpush1.msra.mxu0 0.0
    %4634 = vmatprep.subr.mxu0 0.0
    %4635 = vmatpush1.msra.mxu0 0.0
    %4636 = vmatprep.subr.mxu0 0.0
    %4637 = vmatpush1.msra.mxu0 0.0
    %4638 = vmatprep.subr.mxu0 0.0
    %4639 = vmatpush1.msra.mxu0 0.0
    %4640 = vmatprep.subr.mxu0 0.0
    %4641 = vmatpush1.msra.mxu0 0.0
    %4642 = vmatprep.subr.mxu0 0.0
    %4643 = vmatpush1.msra.mxu0 0.0
    %4644 = vmatprep.subr.mxu0 0.0
    %4645 = vmatpush1.msra.mxu0 0.0
    %4646 = vmatprep.subr.mxu0 0.0
    %4647 = vmatpush1.msra.mxu0 0.0
    %4648 = vmatprep.subr.mxu0 0.0
    %4649 = vmatpush1.msra.mxu0 0.0
    %4650 = vmatprep.subr.mxu0 0.0
    %4651 = vmatpush1.msra.mxu0 0.0
    %4652 = vmatprep.subr.mxu0 0.0
    %4653 = vmatpush1.msra.mxu0 0.0
    %4654 = vmatprep.subr.mxu0 0.0
    %4655 = vmatpush1.msra.mxu0 0.0
    %4656 = vmatprep.mubr.f32.mxu0 0.0
    %4657 = vmatmul.mubr.f32.gmra.mrb[0].mxu0 %v2629
    %v4658 = vpop.f32.mrb[0].mxu0
    %v4659 = vadd.f32 0.0, %v4658
    %v4660 = vpop.f32.mrb[0].mxu0
    %4661 = vmatprep.mubr.f32.mxu0 0.0
    %4662 = vmatmul.mubr.f32.gmra.mrb[0].mxu0 %v4520
    %v4663 = vpop.f32.mrb[0].mxu0
    %v4664 = vadd.f32 0.0, %v4663
    %v4665 = vpop.f32.mrb[0].mxu0
    %4666 = vmatprep.mubr.f32.mxu0 0.0
    %4667 = vmatmul.mubr.f32.gmra.mrb[0].mxu0 %v2663
    %v4668 = vpop.f32.mrb[0].mxu0
    %v4669 = vadd.f32 0.0, %v4668
    %v4670 = vpop.f32.mrb[0].mxu0
    %4671 = vmatprep.mubr.f32.mxu0 0.0
    %4672 = vmatmul.mubr.f32.gmra.mrb[0].mxu0 %v4529
    %v4673 = vpop.f32.mrb[0].mxu0
    %v4674 = vadd.f32 0.0, %v4673
    %v4675 = vpop.f32.mrb[0].mxu0
    %4676 = vmatprep.mubr.f32.mxu0 0.0
    %4677 = vmatmul.mubr.f32.gmra.mrb[0].mxu0 %v2697
    %v4678 = vpop.f32.mrb[0].mxu0
    %v4679 = vadd.f32 0.0, %v4678
    %v4680 = vpop.f32.mrb[0].mxu0
    %4681 = vmatprep.mubr.f32.mxu0 0.0
    %4682 = vmatmul.mubr.f32.gmra.mrb[0].mxu0 %v4538
    %v4683 = vpop.f32.mrb[0].mxu0
    %v4684 = vadd.f32 0.0, %v4683
    %v4685 = vpop.f32.mrb[0].mxu0
    %4686 = vmatprep.mubr.f32.mxu0 0.0
    %4687 = vmatmul.mubr.f32.gmra.mrb[0].mxu0 %v2731
    %v4688 = vpop.f32.mrb[0].mxu0
    %v4689 = vadd.f32 0.0, %v4688
    %v4690 = vpop.f32.mrb[0].mxu0
    %4691 = vmatprep.mubr.f32.mxu0 0.0
    %4692 = vmatmul.mubr.f32.gmra.mrb[0].mxu0 %v4547
    %v4693 = vpop.f32.mrb[0].mxu0
    %v4694 = vadd.f32 0.0, %v4693
    %v4695 = vpop.f32.mrb[0].mxu0
    %4696 = vmatprep.mubr.f32.mxu0 0.0
    %4697 = vmatmul.mubr.f32.gmra.mrb[0].mxu0 %v2765
    %v4698 = vpop.f32.mrb[0].mxu0
    %v4699 = vadd.f32 0.0, %v4698
    %v4700 = vpop.f32.mrb[0].mxu0
    %4701 = vmatprep.mubr.f32.mxu0 0.0
    %4702 = vmatmul.mubr.f32.gmra.mrb[0].mxu0 %v4556
    %v4703 = vpop.f32.mrb[0].mxu0
    %v4704 = vadd.f32 0.0, %v4703
    %v4705 = vpop.f32.mrb[0].mxu0
    %4706 = vmatprep.mubr.f32.mxu0 0.0
    %4707 = vmatmul.mubr.f32.gmra.mrb[0].mxu0 %v2799
    %v4708 = vpop.f32.mrb[0].mxu0
    %v4709 = vadd.f32 0.0, %v4708
    %v4710 = vpop.f32.mrb[0].mxu0
    %4711 = vmatprep.mubr.f32.mxu0 0.0
    %4712 = vmatmul.mubr.f32.gmra.mrb[0].mxu0 %v4565
    %v4713 = vpop.f32.mrb[0].mxu0
    %v4714 = vadd.f32 0.0, %v4713
    %v4715 = vpop.f32.mrb[0].mxu0
    %4716 = vmatprep.mubr.f32.mxu0 0.0
    %4717 = vmatmul.mubr.f32.gmra.mrb[0].mxu0 %v2833
    %v4718 = vpop.f32.mrb[0].mxu0
    %v4719 = vadd.f32 0.0, %v4718
    %v4720 = vpop.f32.mrb[0].mxu0
    %4721 = vmatprep.mubr.f32.mxu0 0.0
    %4722 = vmatmul.mubr.f32.gmra.mrb[0].mxu0 %v4574
    %v4723 = vpop.f32.mrb[0].mxu0
    %v4724 = vadd.f32 0.0, %v4723
    %v4725 = vpop.f32.mrb[0].mxu0
    %4726 = vmatprep.mubr.f32.mxu0 0.0
    %4727 = vmatmul.mubr.f32.gmra.mrb[0].mxu0 %v2867
    %v4728 = vpop.f32.mrb[0].mxu0
    %v4729 = vadd.f32 0.0, %v4728
    %v4730 = vpop.f32.mrb[0].mxu0
    %4731 = vmatprep.mubr.f32.mxu0 0.0
    %4732 = vmatmul.mubr.f32.gmra.mrb[0].mxu0 %v4583
    %v4733 = vpop.f32.mrb[0].mxu0
    %v4734 = vadd.f32 0.0, %v4733
    %v4735 = vpop.f32.mrb[0].mxu0
    %4736 = vdwg.mxu0
    %v4737 = vadd.f32 %v4479, %v4659
    %v4738 = vadd.f32 %v4480, %v4664
    %v4739 = vadd.f32 %v4481, %v4669
    %v4740 = vadd.f32 %v4482, %v4674
    %v4741 = vadd.f32 %v4483, %v4679
    %v4742 = vadd.f32 %v4484, %v4684
    %v4743 = vadd.f32 %v4485, %v4689
    %v4744 = vadd.f32 %v4486, %v4694
    %v4745 = vadd.f32 %v4487, %v4699
    %v4746 = vadd.f32 %v4488, %v4704
    %v4747 = vadd.f32 %v4489, %v4709
    %v4748 = vadd.f32 %v4490, %v4714
    %v4749 = vadd.f32 %v4491, %v4719
    %v4750 = vadd.f32 %v4492, %v4724
    %v4751 = vadd.f32 %v4493, %v4729
    %v4752 = vadd.f32 %v4494, %v4734
    %v4753 = vld [vmem:[#allocation10] sm:$0x1]
    %v4755 = vlaneseq
    %v4756 = vshrl.u32 %v4755, 7
    %v4757 = vsub.s32 0, %v4756
    %v4758 = vrot.slane %v4753, %v4757
    %v4760 = vadd.f32 %v4737, %v4758
    %v4761 = vadd.f32 %v4738, %v4758
    %v4762 = vadd.f32 %v4739, %v4758
    %v4763 = vadd.f32 %v4740, %v4758
    %v4764 = vadd.f32 %v4741, %v4758
    %v4765 = vadd.f32 %v4742, %v4758
    %v4766 = vadd.f32 %v4743, %v4758
    %v4767 = vadd.f32 %v4744, %v4758
    %v4768 = vadd.f32 %v4745, %v4758
    %v4769 = vadd.f32 %v4746, %v4758
    %v4770 = vadd.f32 %v4747, %v4758
    %v4771 = vadd.f32 %v4748, %v4758
    %v4772 = vadd.f32 %v4749, %v4758
    %v4773 = vadd.f32 %v4750, %v4758
    %v4774 = vadd.f32 %v4751, %v4758
    %v4775 = vadd.f32 %v4752, %v4758
    %v4776 = vmax.f32 %v4760, 0.0
    %v4777 = vmax.f32 %v4761, 0.0
    %v4778 = vmax.f32 %v4762, 0.0
    %v4779 = vmax.f32 %v4763, 0.0
    %v4780 = vmax.f32 %v4764, 0.0
    %v4781 = vmax.f32 %v4765, 0.0
    %v4782 = vmax.f32 %v4766, 0.0
    %v4783 = vmax.f32 %v4767, 0.0
    %v4784 = vmax.f32 %v4768, 0.0
    %v4785 = vmax.f32 %v4769, 0.0
    %v4786 = vmax.f32 %v4770, 0.0
    %v4787 = vmax.f32 %v4771, 0.0
    %v4788 = vmax.f32 %v4772, 0.0
    %v4789 = vmax.f32 %v4773, 0.0
    %v4790 = vmax.f32 %v4774, 0.0
    %v4791 = vmax.f32 %v4775, 0.0
    %v4808 = vcombine.high %v4776, %v4776
    %v4809 = vcombine.high %v4777, %v4777
    %v4810 = vcombine.high %v4778, %v4778
    %v4811 = vcombine.high %v4779, %v4779
    %v4812 = vcombine.high %v4780, %v4780
    %v4813 = vcombine.high %v4781, %v4781
    %v4814 = vcombine.high %v4782, %v4782
    %v4815 = vcombine.high %v4783, %v4783
    %v4816 = vcombine.high %v4784, %v4784
    %v4817 = vcombine.high %v4785, %v4785
    %v4818 = vcombine.high %v4786, %v4786
    %v4819 = vcombine.high %v4787, %v4787
    %v4820 = vcombine.high %v4788, %v4788
    %v4821 = vcombine.high %v4789, %v4789
    %v4822 = vcombine.high %v4790, %v4790
    %v4823 = vcombine.high %v4791, %v4791
    %v4840 = vrot.slane %v4776, 5
    %v4841 = vrot.slane %v4840, 4
    %v4842 = vrot.slane %v4778, 5
    %v4843 = vrot.slane %v4842, 4
    %v4844 = vrot.slane %v4780, 5
    %v4845 = vrot.slane %v4844, 4
    %v4846 = vrot.slane %v4782, 5
    %v4847 = vrot.slane %v4846, 4
    %v4848 = vrot.slane %v4784, 5
    %v4849 = vrot.slane %v4848, 4
    %v4850 = vrot.slane %v4786, 5
    %v4851 = vrot.slane %v4850, 4
    %v4852 = vrot.slane %v4788, 5
    %v4853 = vrot.slane %v4852, 4
    %v4854 = vrot.slane %v4790, 5
    %v4855 = vrot.slane %v4854, 4
    %v4864 = vmax.f32 %v4776, %v4841
    %v4865 = vmax.f32 %v4778, %v4843
    %v4866 = vmax.f32 %v4780, %v4845
    %v4867 = vmax.f32 %v4782, %v4847
    %v4868 = vmax.f32 %v4784, %v4849
    %v4869 = vmax.f32 %v4786, %v4851
    %v4870 = vmax.f32 %v4788, %v4853
    %v4871 = vmax.f32 %v4790, %v4855
    %v4872 = vrot.slane %v4808, 5
    %v4873 = vrot.slane %v4872, 4
    %v4874 = vrot.slane %v4810, 5
    %v4875 = vrot.slane %v4874, 4
    %v4876 = vrot.slane %v4812, 5
    %v4877 = vrot.slane %v4876, 4
    %v4878 = vrot.slane %v4814, 5
    %v4879 = vrot.slane %v4878, 4
    %v4880 = vrot.slane %v4816, 5
    %v4881 = vrot.slane %v4880, 4
    %v4882 = vrot.slane %v4818, 5
    %v4883 = vrot.slane %v4882, 4
    %v4884 = vrot.slane %v4820, 5
    %v4885 = vrot.slane %v4884, 4
    %v4886 = vrot.slane %v4822, 5
    %v4887 = vrot.slane %v4886, 4
    %v4896 = vmax.f32 %v4808, %v4873
    %v4897 = vmax.f32 %v4810, %v4875
    %v4898 = vmax.f32 %v4812, %v4877
    %v4899 = vmax.f32 %v4814, %v4879
    %v4900 = vmax.f32 %v4816, %v4881
    %v4901 = vmax.f32 %v4818, %v4883
    %v4902 = vmax.f32 %v4820, %v4885
    %v4903 = vmax.f32 %v4822, %v4887
    %v4904 = vmax.f32 %v4864, %v4896
    %v4905 = vmax.f32 %v4865, %v4897
    %v4906 = vmax.f32 %v4866, %v4898
    %v4907 = vmax.f32 %v4867, %v4899
    %v4908 = vmax.f32 %v4868, %v4900
    %v4909 = vmax.f32 %v4869, %v4901
    %v4910 = vmax.f32 %v4870, %v4902
    %v4911 = vmax.f32 %v4871, %v4903
    %v4912 = vld [vmem:[#allocation11] sm:$0xff]
    %v4913 = vld [vmem:[#allocation11 + $0x8] sm:$0xff]
    %v4914 = vld [vmem:[#allocation11 + $0x10] sm:$0xff]
    %v4915 = vld [vmem:[#allocation11 + $0x18] sm:$0xff]
    %v4916 = vld [vmem:[#allocation11 + $0x20] sm:$0xff]
    %v4917 = vld [vmem:[#allocation11 + $0x28] sm:$0xff]
    %v4918 = vld [vmem:[#allocation11 + $0x30] sm:$0xff]
    %v4919 = vld [vmem:[#allocation11 + $0x38] sm:$0xff]
    %s4920 = scalar_lea.vmem [#allocation11], 64
    %v4921 = vld [vmem:[%s4920] sm:$0xff]
    %v4922 = vld [vmem:[%s4920 + $0x8] sm:$0xff]
    %v4923 = vld [vmem:[%s4920 + $0x10] sm:$0xff]
    %v4924 = vld [vmem:[%s4920 + $0x18] sm:$0xff]
    %v4925 = vld [vmem:[%s4920 + $0x20] sm:$0xff]
    %v4926 = vld [vmem:[%s4920 + $0x28] sm:$0xff]
    %v4927 = vld [vmem:[%s4920 + $0x30] sm:$0xff]
    %v4928 = vld [vmem:[%s4920 + $0x38] sm:$0xff]
    %v4937 = vlaneseq
    %v4938 = vshrl.u32 %v4937, 7
    %v4939 = vsub.s32 2, %v4938
    %v4940 = vrot.slane %v4904, %v4939
    %v4941 = vlaneseq
    %v4942 = vshrl.u32 %v4941, 7
    %v4943 = vsub.s32 2, %v4942
    %v4944 = vrot.slane %v4905, %v4943
    %v4945 = vlaneseq
    %v4946 = vshrl.u32 %v4945, 7
    %v4947 = vsub.s32 2, %v4946
    %v4948 = vrot.slane %v4906, %v4947
    %v4949 = vlaneseq
    %v4950 = vshrl.u32 %v4949, 7
    %v4951 = vsub.s32 2, %v4950
    %v4952 = vrot.slane %v4907, %v4951
    %v4953 = vlaneseq
    %v4954 = vshrl.u32 %v4953, 7
    %v4955 = vsub.s32 2, %v4954
    %v4956 = vrot.slane %v4908, %v4955
    %v4957 = vlaneseq
    %v4958 = vshrl.u32 %v4957, 7
    %v4959 = vsub.s32 2, %v4958
    %v4960 = vrot.slane %v4909, %v4959
    %v4961 = vlaneseq
    %v4962 = vshrl.u32 %v4961, 7
    %v4963 = vsub.s32 2, %v4962
    %v4964 = vrot.slane %v4910, %v4963
    %v4965 = vlaneseq
    %v4966 = vshrl.u32 %v4965, 7
    %v4967 = vsub.s32 2, %v4966
    %v4968 = vrot.slane %v4911, %v4967
    %vm4969 = vcmask 1041409
    %v4970 = vsel %vm4969, %v4944, %v4940
    %v4971 = vsel %vm1466, %v4948, %v4970
    %vm4972 = vcmask 1043459
    %v4973 = vsel %vm4972, %v4952, %v4971
    %v4974 = vsel %vm1468, %v4956, %v4973
    %vm4975 = vcmask 1045509
    %v4976 = vsel %vm4975, %v4960, %v4974
    %v4977 = vsel %vm1470, %v4964, %v4976
    %vm4978 = vcmask 1047559
    %v4979 = vsel %vm4978, %v4968, %v4977
    %vm4980 = vcmask 523264
    %v4981 = vsel %vm4980, %v4979, 0
    %4983 = vmatprep.subr.mxu0 0.0
    %4984 = vmatpush1.msra.mxu0 %v4921
    %4985 = vmatprep.subr.mxu0 0.0
    %4986 = vmatpush1.msra.mxu0 %v4922
    %4987 = vmatprep.subr.mxu0 0.0
    %4988 = vmatpush1.msra.mxu0 %v4923
    %4989 = vmatprep.subr.mxu0 0.0
    %4990 = vmatpush1.msra.mxu0 %v4924
    %4991 = vmatprep.subr.mxu0 0.0
    %4992 = vmatpush1.msra.mxu0 %v4925
    %4993 = vmatprep.subr.mxu0 0.0
    %4994 = vmatpush1.msra.mxu0 %v4926
    %4995 = vmatprep.subr.mxu0 0.0
    %4996 = vmatpush1.msra.mxu0 %v4927
    %4997 = vmatprep.subr.mxu0 0.0
    %4998 = vmatpush1.msra.mxu0 %v4928
    %4999 = vmatprep.subr.mxu0 0.0
    %5000 = vmatpush1.msra.mxu0 0.0
    %5001 = vmatprep.subr.mxu0 0.0
    %5002 = vmatpush1.msra.mxu0 0.0
    %5003 = vmatprep.subr.mxu0 0.0
    %5004 = vmatpush1.msra.mxu0 0.0
    %5005 = vmatprep.subr.mxu0 0.0
    %5006 = vmatpush1.msra.mxu0 0.0
    %5007 = vmatprep.subr.mxu0 0.0
    %5008 = vmatpush1.msra.mxu0 0.0
    %5009 = vmatprep.subr.mxu0 0.0
    %5010 = vmatpush1.msra.mxu0 0.0
    %5011 = vmatprep.subr.mxu0 0.0
    %5012 = vmatpush1.msra.mxu0 0.0
    %5013 = vmatprep.subr.mxu0 0.0
    %5014 = vmatpush1.msra.mxu0 0.0
    %5015 = vmatprep.subr.mxu0 0.0
    %5016 = vmatpush1.msra.mxu0 0.0
    %5017 = vmatprep.subr.mxu0 0.0
    %5018 = vmatpush1.msra.mxu0 0.0
    %5019 = vmatprep.subr.mxu0 0.0
    %5020 = vmatpush1.msra.mxu0 0.0
    %5021 = vmatprep.subr.mxu0 0.0
    %5022 = vmatpush1.msra.mxu0 0.0
    %5023 = vmatprep.subr.mxu0 0.0
    %5024 = vmatpush1.msra.mxu0 0.0
    %5025 = vmatprep.subr.mxu0 0.0
    %5026 = vmatpush1.msra.mxu0 0.0
    %5027 = vmatprep.subr.mxu0 0.0
    %5028 = vmatpush1.msra.mxu0 0.0
    %5029 = vmatprep.subr.mxu0 0.0
    %5030 = vmatpush1.msra.mxu0 0.0
    %5031 = vmatprep.subr.mxu0 0.0
    %5032 = vmatpush1.msra.mxu0 0.0
    %5033 = vmatprep.subr.mxu0 0.0
    %5034 = vmatpush1.msra.mxu0 0.0
    %5035 = vmatprep.subr.mxu0 0.0
    %5036 = vmatpush1.msra.mxu0 0.0
    %5037 = vmatprep.subr.mxu0 0.0
    %5038 = vmatpush1.msra.mxu0 0.0
    %5039 = vmatprep.subr.mxu0 0.0
    %5040 = vmatpush1.msra.mxu0 0.0
    %5041 = vmatprep.subr.mxu0 0.0
    %5042 = vmatpush1.msra.mxu0 0.0
    %5043 = vmatprep.subr.mxu0 0.0
    %5044 = vmatpush1.msra.mxu0 0.0
    %5045 = vmatprep.subr.mxu0 0.0
    %5046 = vmatpush1.msra.mxu0 0.0
    %5047 = vmatprep.mubr.f32.mxu0 0.0
    %5048 = vmatmul.mubr.f32.gmra.mrb[0].mxu0 %v4981
    %v5049 = vpop.f32.mrb[0].mxu0
    %v5050 = vadd.f32 0.0, %v5049
    %v5051 = vpop.f32.mrb[0].mxu0
    %5052 = vdwg.mxu0
    %v5053 = vlaneseq
    %v5054 = vshrl.u32 %v5053, 7
    %v5055 = vsub.s32 0, %v5054
    %v5056 = vrot.slane %v4904, %v5055
    %v5057 = vlaneseq
    %v5058 = vshrl.u32 %v5057, 7
    %v5059 = vsub.s32 0, %v5058
    %v5060 = vrot.slane %v4905, %v5059
    %v5061 = vlaneseq
    %v5062 = vshrl.u32 %v5061, 7
    %v5063 = vsub.s32 0, %v5062
    %v5064 = vrot.slane %v4906, %v5063
    %v5065 = vlaneseq
    %v5066 = vshrl.u32 %v5065, 7
    %v5067 = vsub.s32 0, %v5066
    %v5068 = vrot.slane %v4907, %v5067
    %v5069 = vlaneseq
    %v5070 = vshrl.u32 %v5069, 7
    %v5071 = vsub.s32 0, %v5070
    %v5072 = vrot.slane %v4908, %v5071
    %v5073 = vlaneseq
    %v5074 = vshrl.u32 %v5073, 7
    %v5075 = vsub.s32 0, %v5074
    %v5076 = vrot.slane %v4909, %v5075
    %v5077 = vlaneseq
    %v5078 = vshrl.u32 %v5077, 7
    %v5079 = vsub.s32 0, %v5078
    %v5080 = vrot.slane %v4910, %v5079
    %v5081 = vlaneseq
    %v5082 = vshrl.u32 %v5081, 7
    %v5083 = vsub.s32 0, %v5082
    %v5084 = vrot.slane %v4911, %v5083
    %v5085 = vsel %vm4969, %v5060, %v5056
    %v5086 = vsel %vm1466, %v5064, %v5085
    %v5087 = vsel %vm4972, %v5068, %v5086
    %v5088 = vsel %vm1468, %v5072, %v5087
    %v5089 = vsel %vm4975, %v5076, %v5088
    %v5090 = vsel %vm1470, %v5080, %v5089
    %v5091 = vsel %vm4978, %v5084, %v5090
    %v5092 = vsel %vm4980, %v5091, 0
    %5094 = vmatprep.subr.mxu0 0.0
    %5095 = vmatpush1.msra.mxu0 %v4912
    %5096 = vmatprep.subr.mxu0 0.0
    %5097 = vmatpush1.msra.mxu0 %v4913
    %5098 = vmatprep.subr.mxu0 0.0
    %5099 = vmatpush1.msra.mxu0 %v4914
    %5100 = vmatprep.subr.mxu0 0.0
    %5101 = vmatpush1.msra.mxu0 %v4915
    %5102 = vmatprep.subr.mxu0 0.0
    %5103 = vmatpush1.msra.mxu0 %v4916
    %5104 = vmatprep.subr.mxu0 0.0
    %5105 = vmatpush1.msra.mxu0 %v4917
    %5106 = vmatprep.subr.mxu0 0.0
    %5107 = vmatpush1.msra.mxu0 %v4918
    %5108 = vmatprep.subr.mxu0 0.0
    %5109 = vmatpush1.msra.mxu0 %v4919
    %5110 = vmatprep.subr.mxu0 0.0
    %5111 = vmatpush1.msra.mxu0 0.0
    %5112 = vmatprep.subr.mxu0 0.0
    %5113 = vmatpush1.msra.mxu0 0.0
    %5114 = vmatprep.subr.mxu0 0.0
    %5115 = vmatpush1.msra.mxu0 0.0
    %5116 = vmatprep.subr.mxu0 0.0
    %5117 = vmatpush1.msra.mxu0 0.0
    %5118 = vmatprep.subr.mxu0 0.0
    %5119 = vmatpush1.msra.mxu0 0.0
    %5120 = vmatprep.subr.mxu0 0.0
    %5121 = vmatpush1.msra.mxu0 0.0
    %5122 = vmatprep.subr.mxu0 0.0
    %5123 = vmatpush1.msra.mxu0 0.0
    %5124 = vmatprep.subr.mxu0 0.0
    %5125 = vmatpush1.msra.mxu0 0.0
    %5126 = vmatprep.subr.mxu0 0.0
    %5127 = vmatpush1.msra.mxu0 0.0
    %5128 = vmatprep.subr.mxu0 0.0
    %5129 = vmatpush1.msra.mxu0 0.0
    %5130 = vmatprep.subr.mxu0 0.0
    %5131 = vmatpush1.msra.mxu0 0.0
    %5132 = vmatprep.subr.mxu0 0.0
    %5133 = vmatpush1.msra.mxu0 0.0
    %5134 = vmatprep.subr.mxu0 0.0
    %5135 = vmatpush1.msra.mxu0 0.0
    %5136 = vmatprep.subr.mxu0 0.0
    %5137 = vmatpush1.msra.mxu0 0.0
    %5138 = vmatprep.subr.mxu0 0.0
    %5139 = vmatpush1.msra.mxu0 0.0
    %5140 = vmatprep.subr.mxu0 0.0
    %5141 = vmatpush1.msra.mxu0 0.0
    %5142 = vmatprep.subr.mxu0 0.0
    %5143 = vmatpush1.msra.mxu0 0.0
    %5144 = vmatprep.subr.mxu0 0.0
    %5145 = vmatpush1.msra.mxu0 0.0
    %5146 = vmatprep.subr.mxu0 0.0
    %5147 = vmatpush1.msra.mxu0 0.0
    %5148 = vmatprep.subr.mxu0 0.0
    %5149 = vmatpush1.msra.mxu0 0.0
    %5150 = vmatprep.subr.mxu0 0.0
    %5151 = vmatpush1.msra.mxu0 0.0
    %5152 = vmatprep.subr.mxu0 0.0
    %5153 = vmatpush1.msra.mxu0 0.0
    %5154 = vmatprep.subr.mxu0 0.0
    %5155 = vmatpush1.msra.mxu0 0.0
    %5156 = vmatprep.subr.mxu0 0.0
    %5157 = vmatpush1.msra.mxu0 0.0
    %5158 = vmatprep.mubr.f32.mxu0 0.0
    %5159 = vmatmul.mubr.f32.gmra.mrb[0].mxu0 %v5092
    %v5160 = vpop.f32.mrb[0].mxu0
    %v5161 = vadd.f32 %v5050, %v5160
    %v5162 = vpop.f32.mrb[0].mxu0
    %5163 = vdwg.mxu0
    %v5164 = vrot.slane %v4777, 5
    %v5165 = vrot.slane %v5164, 4
    %v5166 = vrot.slane %v4779, 5
    %v5167 = vrot.slane %v5166, 4
    %v5168 = vrot.slane %v4781, 5
    %v5169 = vrot.slane %v5168, 4
    %v5170 = vrot.slane %v4783, 5
    %v5171 = vrot.slane %v5170, 4
    %v5172 = vrot.slane %v4785, 5
    %v5173 = vrot.slane %v5172, 4
    %v5174 = vrot.slane %v4787, 5
    %v5175 = vrot.slane %v5174, 4
    %v5176 = vrot.slane %v4789, 5
    %v5177 = vrot.slane %v5176, 4
    %v5178 = vrot.slane %v4791, 5
    %v5179 = vrot.slane %v5178, 4
    %v5188 = vmax.f32 %v4777, %v5165
    %v5189 = vmax.f32 %v4779, %v5167
    %v5190 = vmax.f32 %v4781, %v5169
    %v5191 = vmax.f32 %v4783, %v5171
    %v5192 = vmax.f32 %v4785, %v5173
    %v5193 = vmax.f32 %v4787, %v5175
    %v5194 = vmax.f32 %v4789, %v5177
    %v5195 = vmax.f32 %v4791, %v5179
    %v5196 = vrot.slane %v4809, 5
    %v5197 = vrot.slane %v5196, 4
    %v5198 = vrot.slane %v4811, 5
    %v5199 = vrot.slane %v5198, 4
    %v5200 = vrot.slane %v4813, 5
    %v5201 = vrot.slane %v5200, 4
    %v5202 = vrot.slane %v4815, 5
    %v5203 = vrot.slane %v5202, 4
    %v5204 = vrot.slane %v4817, 5
    %v5205 = vrot.slane %v5204, 4
    %v5206 = vrot.slane %v4819, 5
    %v5207 = vrot.slane %v5206, 4
    %v5208 = vrot.slane %v4821, 5
    %v5209 = vrot.slane %v5208, 4
    %v5210 = vrot.slane %v4823, 5
    %v5211 = vrot.slane %v5210, 4
    %v5220 = vmax.f32 %v4809, %v5197
    %v5221 = vmax.f32 %v4811, %v5199
    %v5222 = vmax.f32 %v4813, %v5201
    %v5223 = vmax.f32 %v4815, %v5203
    %v5224 = vmax.f32 %v4817, %v5205
    %v5225 = vmax.f32 %v4819, %v5207
    %v5226 = vmax.f32 %v4821, %v5209
    %v5227 = vmax.f32 %v4823, %v5211
    %v5228 = vmax.f32 %v5188, %v5220
    %v5229 = vmax.f32 %v5189, %v5221
    %v5230 = vmax.f32 %v5190, %v5222
    %v5231 = vmax.f32 %v5191, %v5223
    %v5232 = vmax.f32 %v5192, %v5224
    %v5233 = vmax.f32 %v5193, %v5225
    %v5234 = vmax.f32 %v5194, %v5226
    %v5235 = vmax.f32 %v5195, %v5227
    %s5236 = scalar_lea.vmem [#allocation11], 128
    %v5237 = vld [vmem:[%s5236] sm:$0xff]
    %v5238 = vld [vmem:[%s5236 + $0x8] sm:$0xff]
    %v5239 = vld [vmem:[%s5236 + $0x10] sm:$0xff]
    %v5240 = vld [vmem:[%s5236 + $0x18] sm:$0xff]
    %v5241 = vld [vmem:[%s5236 + $0x20] sm:$0xff]
    %v5242 = vld [vmem:[%s5236 + $0x28] sm:$0xff]
    %v5243 = vld [vmem:[%s5236 + $0x30] sm:$0xff]
    %v5244 = vld [vmem:[%s5236 + $0x38] sm:$0xff]
    %v5253 = vlaneseq
    %v5254 = vshrl.u32 %v5253, 7
    %v5255 = vsub.s32 0, %v5254
    %v5256 = vrot.slane %v5228, %v5255
    %v5257 = vlaneseq
    %v5258 = vshrl.u32 %v5257, 7
    %v5259 = vsub.s32 0, %v5258
    %v5260 = vrot.slane %v5229, %v5259
    %v5261 = vlaneseq
    %v5262 = vshrl.u32 %v5261, 7
    %v5263 = vsub.s32 0, %v5262
    %v5264 = vrot.slane %v5230, %v5263
    %v5265 = vlaneseq
    %v5266 = vshrl.u32 %v5265, 7
    %v5267 = vsub.s32 0, %v5266
    %v5268 = vrot.slane %v5231, %v5267
    %v5269 = vlaneseq
    %v5270 = vshrl.u32 %v5269, 7
    %v5271 = vsub.s32 0, %v5270
    %v5272 = vrot.slane %v5232, %v5271
    %v5273 = vlaneseq
    %v5274 = vshrl.u32 %v5273, 7
    %v5275 = vsub.s32 0, %v5274
    %v5276 = vrot.slane %v5233, %v5275
    %v5277 = vlaneseq
    %v5278 = vshrl.u32 %v5277, 7
    %v5279 = vsub.s32 0, %v5278
    %v5280 = vrot.slane %v5234, %v5279
    %v5281 = vlaneseq
    %v5282 = vshrl.u32 %v5281, 7
    %v5283 = vsub.s32 0, %v5282
    %v5284 = vrot.slane %v5235, %v5283
    %v5285 = vsel %vm4969, %v5260, %v5256
    %v5286 = vsel %vm1466, %v5264, %v5285
    %v5287 = vsel %vm4972, %v5268, %v5286
    %v5288 = vsel %vm1468, %v5272, %v5287
    %v5289 = vsel %vm4975, %v5276, %v5288
    %v5290 = vsel %vm1470, %v5280, %v5289
    %v5291 = vsel %vm4978, %v5284, %v5290
    %v5292 = vsel %vm4980, %v5291, 0
    %5294 = vmatprep.subr.mxu0 0.0
    %5295 = vmatpush1.msra.mxu0 %v5237
    %5296 = vmatprep.subr.mxu0 0.0
    %5297 = vmatpush1.msra.mxu0 %v5238
    %5298 = vmatprep.subr.mxu0 0.0
    %5299 = vmatpush1.msra.mxu0 %v5239
    %5300 = vmatprep.subr.mxu0 0.0
    %5301 = vmatpush1.msra.mxu0 %v5240
    %5302 = vmatprep.subr.mxu0 0.0
    %5303 = vmatpush1.msra.mxu0 %v5241
    %5304 = vmatprep.subr.mxu0 0.0
    %5305 = vmatpush1.msra.mxu0 %v5242
    %5306 = vmatprep.subr.mxu0 0.0
    %5307 = vmatpush1.msra.mxu0 %v5243
    %5308 = vmatprep.subr.mxu0 0.0
    %5309 = vmatpush1.msra.mxu0 %v5244
    %5310 = vmatprep.subr.mxu0 0.0
    %5311 = vmatpush1.msra.mxu0 0.0
    %5312 = vmatprep.subr.mxu0 0.0
    %5313 = vmatpush1.msra.mxu0 0.0
    %5314 = vmatprep.subr.mxu0 0.0
    %5315 = vmatpush1.msra.mxu0 0.0
    %5316 = vmatprep.subr.mxu0 0.0
    %5317 = vmatpush1.msra.mxu0 0.0
    %5318 = vmatprep.subr.mxu0 0.0
    %5319 = vmatpush1.msra.mxu0 0.0
    %5320 = vmatprep.subr.mxu0 0.0
    %5321 = vmatpush1.msra.mxu0 0.0
    %5322 = vmatprep.subr.mxu0 0.0
    %5323 = vmatpush1.msra.mxu0 0.0
    %5324 = vmatprep.subr.mxu0 0.0
    %5325 = vmatpush1.msra.mxu0 0.0
    %5326 = vmatprep.subr.mxu0 0.0
    %5327 = vmatpush1.msra.mxu0 0.0
    %5328 = vmatprep.subr.mxu0 0.0
    %5329 = vmatpush1.msra.mxu0 0.0
    %5330 = vmatprep.subr.mxu0 0.0
    %5331 = vmatpush1.msra.mxu0 0.0
    %5332 = vmatprep.subr.mxu0 0.0
    %5333 = vmatpush1.msra.mxu0 0.0
    %5334 = vmatprep.subr.mxu0 0.0
    %5335 = vmatpush1.msra.mxu0 0.0
    %5336 = vmatprep.subr.mxu0 0.0
    %5337 = vmatpush1.msra.mxu0 0.0
    %5338 = vmatprep.subr.mxu0 0.0
    %5339 = vmatpush1.msra.mxu0 0.0
    %5340 = vmatprep.subr.mxu0 0.0
    %5341 = vmatpush1.msra.mxu0 0.0
    %5342 = vmatprep.subr.mxu0 0.0
    %5343 = vmatpush1.msra.mxu0 0.0
    %5344 = vmatprep.subr.mxu0 0.0
    %5345 = vmatpush1.msra.mxu0 0.0
    %5346 = vmatprep.subr.mxu0 0.0
    %5347 = vmatpush1.msra.mxu0 0.0
    %5348 = vmatprep.subr.mxu0 0.0
    %5349 = vmatpush1.msra.mxu0 0.0
    %5350 = vmatprep.subr.mxu0 0.0
    %5351 = vmatpush1.msra.mxu0 0.0
    %5352 = vmatprep.subr.mxu0 0.0
    %5353 = vmatpush1.msra.mxu0 0.0
    %5354 = vmatprep.subr.mxu0 0.0
    %5355 = vmatpush1.msra.mxu0 0.0
    %5356 = vmatprep.subr.mxu0 0.0
    %5357 = vmatpush1.msra.mxu0 0.0
    %5358 = vmatprep.mubr.f32.mxu0 0.0
    %5359 = vmatmul.mubr.f32.gmra.mrb[0].mxu0 %v5292
    %v5360 = vpop.f32.mrb[0].mxu0
    %v5361 = vadd.f32 0.0, %v5360
    %v5362 = vpop.f32.mrb[0].mxu0
    %5363 = vdwg.mxu0
    %v5364 = vadd.f32 %v5161, %v5361
    %s5365 = scalar_lea.vmem [#allocation11], 192
    %v5366 = vld [vmem:[%s5365] sm:$0xff]
    %v5367 = vld [vmem:[%s5365 + $0x8] sm:$0xff]
    %v5368 = vld [vmem:[%s5365 + $0x10] sm:$0xff]
    %v5369 = vld [vmem:[%s5365 + $0x18] sm:$0xff]
    %v5370 = vld [vmem:[%s5365 + $0x20] sm:$0xff]
    %v5371 = vld [vmem:[%s5365 + $0x28] sm:$0xff]
    %v5372 = vld [vmem:[%s5365 + $0x30] sm:$0xff]
    %v5373 = vld [vmem:[%s5365 + $0x38] sm:$0xff]
    %v5374 = vlaneseq
    %v5375 = vshrl.u32 %v5374, 7
    %v5376 = vsub.s32 2, %v5375
    %v5377 = vrot.slane %v5228, %v5376
    %v5378 = vlaneseq
    %v5379 = vshrl.u32 %v5378, 7
    %v5380 = vsub.s32 2, %v5379
    %v5381 = vrot.slane %v5229, %v5380
    %v5382 = vlaneseq
    %v5383 = vshrl.u32 %v5382, 7
    %v5384 = vsub.s32 2, %v5383
    %v5385 = vrot.slane %v5230, %v5384
    %v5386 = vlaneseq
    %v5387 = vshrl.u32 %v5386, 7
    %v5388 = vsub.s32 2, %v5387
    %v5389 = vrot.slane %v5231, %v5388
    %v5390 = vlaneseq
    %v5391 = vshrl.u32 %v5390, 7
    %v5392 = vsub.s32 2, %v5391
    %v5393 = vrot.slane %v5232, %v5392
    %v5394 = vlaneseq
    %v5395 = vshrl.u32 %v5394, 7
    %v5396 = vsub.s32 2, %v5395
    %v5397 = vrot.slane %v5233, %v5396
    %v5398 = vlaneseq
    %v5399 = vshrl.u32 %v5398, 7
    %v5400 = vsub.s32 2, %v5399
    %v5401 = vrot.slane %v5234, %v5400
    %v5402 = vlaneseq
    %v5403 = vshrl.u32 %v5402, 7
    %v5404 = vsub.s32 2, %v5403
    %v5405 = vrot.slane %v5235, %v5404
    %v5406 = vsel %vm4969, %v5381, %v5377
    %v5407 = vsel %vm1466, %v5385, %v5406
    %v5408 = vsel %vm4972, %v5389, %v5407
    %v5409 = vsel %vm1468, %v5393, %v5408
    %v5410 = vsel %vm4975, %v5397, %v5409
    %v5411 = vsel %vm1470, %v5401, %v5410
    %v5412 = vsel %vm4978, %v5405, %v5411
    %v5413 = vsel %vm4980, %v5412, 0
    %5415 = vmatprep.subr.mxu0 0.0
    %5416 = vmatpush1.msra.mxu0 %v5366
    %5417 = vmatprep.subr.mxu0 0.0
    %5418 = vmatpush1.msra.mxu0 %v5367
    %5419 = vmatprep.subr.mxu0 0.0
    %5420 = vmatpush1.msra.mxu0 %v5368
    %5421 = vmatprep.subr.mxu0 0.0
    %5422 = vmatpush1.msra.mxu0 %v5369
    %5423 = vmatprep.subr.mxu0 0.0
    %5424 = vmatpush1.msra.mxu0 %v5370
    %5425 = vmatprep.subr.mxu0 0.0
    %5426 = vmatpush1.msra.mxu0 %v5371
    %5427 = vmatprep.subr.mxu0 0.0
    %5428 = vmatpush1.msra.mxu0 %v5372
    %5429 = vmatprep.subr.mxu0 0.0
    %5430 = vmatpush1.msra.mxu0 %v5373
    %5431 = vmatprep.subr.mxu0 0.0
    %5432 = vmatpush1.msra.mxu0 0.0
    %5433 = vmatprep.subr.mxu0 0.0
    %5434 = vmatpush1.msra.mxu0 0.0
    %5435 = vmatprep.subr.mxu0 0.0
    %5436 = vmatpush1.msra.mxu0 0.0
    %5437 = vmatprep.subr.mxu0 0.0
    %5438 = vmatpush1.msra.mxu0 0.0
    %5439 = vmatprep.subr.mxu0 0.0
    %5440 = vmatpush1.msra.mxu0 0.0
    %5441 = vmatprep.subr.mxu0 0.0
    %5442 = vmatpush1.msra.mxu0 0.0
    %5443 = vmatprep.subr.mxu0 0.0
    %5444 = vmatpush1.msra.mxu0 0.0
    %5445 = vmatprep.subr.mxu0 0.0
    %5446 = vmatpush1.msra.mxu0 0.0
    %5447 = vmatprep.subr.mxu0 0.0
    %5448 = vmatpush1.msra.mxu0 0.0
    %5449 = vmatprep.subr.mxu0 0.0
    %5450 = vmatpush1.msra.mxu0 0.0
    %5451 = vmatprep.subr.mxu0 0.0
    %5452 = vmatpush1.msra.mxu0 0.0
    %5453 = vmatprep.subr.mxu0 0.0
    %5454 = vmatpush1.msra.mxu0 0.0
    %5455 = vmatprep.subr.mxu0 0.0
    %5456 = vmatpush1.msra.mxu0 0.0
    %5457 = vmatprep.subr.mxu0 0.0
    %5458 = vmatpush1.msra.mxu0 0.0
    %5459 = vmatprep.subr.mxu0 0.0
    %5460 = vmatpush1.msra.mxu0 0.0
    %5461 = vmatprep.subr.mxu0 0.0
    %5462 = vmatpush1.msra.mxu0 0.0
    %5463 = vmatprep.subr.mxu0 0.0
    %5464 = vmatpush1.msra.mxu0 0.0
    %5465 = vmatprep.subr.mxu0 0.0
    %5466 = vmatpush1.msra.mxu0 0.0
    %5467 = vmatprep.subr.mxu0 0.0
    %5468 = vmatpush1.msra.mxu0 0.0
    %5469 = vmatprep.subr.mxu0 0.0
    %5470 = vmatpush1.msra.mxu0 0.0
    %5471 = vmatprep.subr.mxu0 0.0
    %5472 = vmatpush1.msra.mxu0 0.0
    %5473 = vmatprep.subr.mxu0 0.0
    %5474 = vmatpush1.msra.mxu0 0.0
    %5475 = vmatprep.subr.mxu0 0.0
    %5476 = vmatpush1.msra.mxu0 0.0
    %5477 = vmatprep.subr.mxu0 0.0
    %5478 = vmatpush1.msra.mxu0 0.0
    %5479 = vmatprep.mubr.f32.mxu0 0.0
    %5480 = vmatmul.mubr.f32.gmra.mrb[0].mxu0 %v5413
    %v5481 = vpop.f32.mrb[0].mxu0
    %v5482 = vadd.f32 0.0, %v5481
    %v5483 = vpop.f32.mrb[0].mxu0
    %5484 = vdwg.mxu0
    %v5485 = vadd.f32 %v5364, %v5482
    %v5486 = vld [vmem:[#allocation13] sm:$0x1]
    %v5488 = vlaneseq
    %v5489 = vshrl.u32 %v5488, 7
    %v5490 = vsub.s32 0, %v5489
    %v5491 = vrot.slane %v5486, %v5490
    %v5493 = vadd.f32 %v5485, %v5491
    %v5494 = vmax.f32 %v5493, 0.0
    %v5495 = vld [vmem:[#allocation14] sm:$0xff]
    %v5496 = vld [vmem:[#allocation14 + $0x8] sm:$0xff]
    %v5497 = vld [vmem:[#allocation14 + $0x10] sm:$0xff]
    %v5498 = vld [vmem:[#allocation14 + $0x18] sm:$0xff]
    %v5499 = vld [vmem:[#allocation14 + $0x20] sm:$0xff]
    %v5500 = vld [vmem:[#allocation14 + $0x28] sm:$0xff]
    %v5501 = vld [vmem:[#allocation14 + $0x30] sm:$0xff]
    %v5502 = vld [vmem:[#allocation14 + $0x38] sm:$0xff]
    %v5503 = vld [vmem:[#allocation16] sm:$0x1]
    %v5505 = vlaneseq
    %v5506 = vshrl.u32 %v5505, 7
    %v5507 = vsub.s32 0, %v5506
    %v5508 = vrot.slane %v5503, %v5507
    %v5511 = vsel %vm4980, %v5494, 0
    %5513 = vmatprep.subr.mxu0 0.0
    %5514 = vmatpush1.msra.mxu0 %v5495
    %5515 = vmatprep.subr.mxu0 0.0
    %5516 = vmatpush1.msra.mxu0 %v5496
    %5517 = vmatprep.subr.mxu0 0.0
    %5518 = vmatpush1.msra.mxu0 %v5497
    %5519 = vmatprep.subr.mxu0 0.0
    %5520 = vmatpush1.msra.mxu0 %v5498
    %5521 = vmatprep.subr.mxu0 0.0
    %5522 = vmatpush1.msra.mxu0 %v5499
    %5523 = vmatprep.subr.mxu0 0.0
    %5524 = vmatpush1.msra.mxu0 %v5500
    %5525 = vmatprep.subr.mxu0 0.0
    %5526 = vmatpush1.msra.mxu0 %v5501
    %5527 = vmatprep.subr.mxu0 0.0
    %5528 = vmatpush1.msra.mxu0 %v5502
    %5529 = vmatprep.subr.mxu0 0.0
    %5530 = vmatpush1.msra.mxu0 0.0
    %5531 = vmatprep.subr.mxu0 0.0
    %5532 = vmatpush1.msra.mxu0 0.0
    %5533 = vmatprep.subr.mxu0 0.0
    %5534 = vmatpush1.msra.mxu0 0.0
    %5535 = vmatprep.subr.mxu0 0.0
    %5536 = vmatpush1.msra.mxu0 0.0
    %5537 = vmatprep.subr.mxu0 0.0
    %5538 = vmatpush1.msra.mxu0 0.0
    %5539 = vmatprep.subr.mxu0 0.0
    %5540 = vmatpush1.msra.mxu0 0.0
    %5541 = vmatprep.subr.mxu0 0.0
    %5542 = vmatpush1.msra.mxu0 0.0
    %5543 = vmatprep.subr.mxu0 0.0
    %5544 = vmatpush1.msra.mxu0 0.0
    %5545 = vmatprep.subr.mxu0 0.0
    %5546 = vmatpush1.msra.mxu0 0.0
    %5547 = vmatprep.subr.mxu0 0.0
    %5548 = vmatpush1.msra.mxu0 0.0
    %5549 = vmatprep.subr.mxu0 0.0
    %5550 = vmatpush1.msra.mxu0 0.0
    %5551 = vmatprep.subr.mxu0 0.0
    %5552 = vmatpush1.msra.mxu0 0.0
    %5553 = vmatprep.subr.mxu0 0.0
    %5554 = vmatpush1.msra.mxu0 0.0
    %5555 = vmatprep.subr.mxu0 0.0
    %5556 = vmatpush1.msra.mxu0 0.0
    %5557 = vmatprep.subr.mxu0 0.0
    %5558 = vmatpush1.msra.mxu0 0.0
    %5559 = vmatprep.subr.mxu0 0.0
    %5560 = vmatpush1.msra.mxu0 0.0
    %5561 = vmatprep.subr.mxu0 0.0
    %5562 = vmatpush1.msra.mxu0 0.0
    %5563 = vmatprep.subr.mxu0 0.0
    %5564 = vmatpush1.msra.mxu0 0.0
    %5565 = vmatprep.subr.mxu0 0.0
    %5566 = vmatpush1.msra.mxu0 0.0
    %5567 = vmatprep.subr.mxu0 0.0
    %5568 = vmatpush1.msra.mxu0 0.0
    %5569 = vmatprep.subr.mxu0 0.0
    %5570 = vmatpush1.msra.mxu0 0.0
    %5571 = vmatprep.subr.mxu0 0.0
    %5572 = vmatpush1.msra.mxu0 0.0
    %5573 = vmatprep.subr.mxu0 0.0
    %5574 = vmatpush1.msra.mxu0 0.0
    %5575 = vmatprep.subr.mxu0 0.0
    %5576 = vmatpush1.msra.mxu0 0.0
    %5577 = vmatprep.mubr.f32.mxu0 0.0
    %5578 = vmatmul.mubr.f32.gmra.mrb[0].mxu0 %v5511
    %v5579 = vpop.f32.mrb[0].mxu0
    %v5580 = vadd.f32 %v5508, %v5579
    %v5581 = vpop.f32.mrb[0].mxu0
    %5582 = vdwg.mxu0
    %5583 = vmax.xlane.f32.xlu0 %v5580
    %v5584 = vpop.xlane.xlu0 %5583
    %v5585 = vsub.f32 %v5580, %v5584
    %v5586 = vmul.f32 %v5585, 1.442695
    %v5587 = vpow.pop %v5586
    %5588 = vadd.xlane.f32.xlu0 %v5587
    %v5589 = vpop.xlane.xlu0 %5588
    %v5590 = vrcp.pop %v5589
    %v5591 = vmul.f32 %v5587, %v5590
    %5592 = vst [vmem:[#allocation17] sm:$0xff] %v5591
    // Predicated region
    $region74: #{netqc_forward.1} parent=1 // pred_check
      _
    $region75: #{netqc_forward.1} parent=1 // pred_check_branch
      %5594 = sbr.rel (0) target = $region77
    $region76: #{netqc_forward.1} parent=1 // pred_region
      %s5596 = ssub.s32 128, 128
      %5597 = vsyncadd [#allocation4], %s5596
      %s5599 = sshll.u32 [#allocation17], 4
      %s5600 = int_to_ptr.vmem [resolvable:$true] %s5599
      %5602 = dma.vmem_to_hbm [thread:$0]  %s5600, 128, %s9, [#allocation4]
    $region77: #{netqc_forward.1} parent=1 // pred_fallthru
      _
    // Predicated region
    $region78: #{netqc_forward.1} parent=1 // pred_check
      _
    $region79: #{netqc_forward.1} parent=1 // pred_check_branch
      %5604 = sbr.rel (0) target = $region81
    $region80: #{netqc_forward.1} parent=1 // pred_region
      %5605 = dma.done [#allocation4], 128
    $region81: #{netqc_forward.1} parent=1 // pred_fallthru
      _
    %5606 = vsyncpa [#allocation3], 1
    %5607 = vsyncpa [#allocation6], 1
    %5608 = vsyncpa [#allocation9], 1
    %5609 = vsyncpa [#allocation12], 1
    %5610 = vsyncpa [#allocation15], 1
    %5611 = vsyncpa [#allocation4], 1

</llo_original>
